<compile_context>
chip_gen: v7x
topology: tpu7x:2x2x1
jax: 0.10.0
libtpu: 0.0.40
codegen_flags: <defaults>
</compile_context>

<pallas_src>
import numpy as np
import jax
import jax.numpy as jnp
from jax.experimental import pallas as pl
from jax.experimental.pallas import tpu as pltpu


def _stft_kernel(x_ref, wc_ref, ws_ref, o_ref):
    """One tile of frames.

    x_ref : [2, TT, F]   (row 0 = I frames, row 1 = Q frames)
    wc_ref: [F, F]       window*cos / win_length
    ws_ref: [F, F]       window*sin / win_length
    o_ref : [2, F, TT]   (o[0] = real, o[1] = imag) -- already in output layout
    """
    i = x_ref[0]
    q = x_ref[1]
    wc = wc_ref[...]
    ws = ws_ref[...]
    real = (jnp.dot(i, wc, preferred_element_type=jnp.float32)
            + jnp.dot(q, ws, preferred_element_type=jnp.float32))
    imag = (jnp.dot(q, wc, preferred_element_type=jnp.float32)
            - jnp.dot(i, ws, preferred_element_type=jnp.float32))
    # [TT, F] -> [F, TT]: rides the XLU slot, which is idle (MXU/DMA-bound).
    o_ref[0, :, :] = real.T.astype(o_ref.dtype)
    o_ref[1, :, :] = imag.T.astype(o_ref.dtype)


def _num_tensorcores_per_device():
    """2 for chips whose grid 'parallel' axes shard across TensorCores."""
    try:
        kind = jax.devices()[0].device_kind.lower()
    except Exception:
        return 1
    return 2 if ("v7" in kind or "v4" in kind or "v5p" in kind) else 1


def _pick_frame_tile(n_frames, n_cores):
    """Generation-aware frame tile.

    * Must be a multiple of 128 (lane-dense output last dim) unless it covers
      the full frame axis.
    * Single-TC chips (v5e/v6e): biggest tile up to 1024 (grid is a serial
      loop, so extra steps are pure overhead).
    * Dual-TC chips (v7x): keep >= 2 balanced steps so both cores get work;
      cap at 512 to stay comfortably inside the 32 MiB scoped VMEM default.
    """
    if n_frames <= 128:
        return n_frames                      # single full-extent block
    cap = 512 if n_cores >= 2 else 1024
    tile = min(cap, (n_frames // n_cores) // 128 * 128)
    return max(tile, 128)


def _dft_matrices(n_fft, win_length, dtype):
    """[F, F] wc/ws with periodic Hann window and 1/win_length folded in."""
    n = np.arange(n_fft, dtype=np.float64)
    ang = (2.0 * np.pi / n_fft) * np.outer(n, n)                 # ang[n, k]
    w = 0.5 * (1.0 - np.cos(2.0 * np.pi * n / win_length))       # periodic hann
    scale = 1.0 / float(win_length)
    wc = (w[:, None] * np.cos(ang)) * scale                      # [F, F]
    ws = (w[:, None] * np.sin(ang)) * scale                      # [F, F]
    return jnp.asarray(wc, dtype=dtype), jnp.asarray(ws, dtype=dtype)


def transform_spectrogram(iq_signal, n_fft=256, win_length=None, hop_length=None):
    """JAX/Pallas equivalent of the PyTorch module's forward.

    iq_signal: float array of shape [2, N]  (row 0 = I, row 1 = Q)
    returns:   float32 array of shape [2, n_fft, n_frames]
               ([real, imag] components of the STFT, divided by win_length)
    """
    win_length = n_fft if win_length is None else win_length
    hop_length = n_fft if hop_length is None else hop_length
    # Module defaults: n_fft == win_length == hop_length -> non-overlapping frames.
    assert win_length == n_fft and hop_length == n_fft, (
        "only the module's default (non-overlapping) config is supported")
    # TODO(synk): overlapping frames (hop < win) and center=True would need a
    # strided / padded framing step before the kernel.

    N = iq_signal.shape[1]
    n_frames = 1 + (N - n_fft) // hop_length          # center=False framing
    assert n_frames >= 1

    # Free framing: hop == n_fft -> a contiguous reshape (bitcast), no concat,
    # no extra HBM pass.  (Trailing samples beyond n_frames*n_fft are dropped.)
    x = iq_signal[:, : n_frames * n_fft].reshape(2, n_frames, n_fft)
    dtype = x.dtype if jnp.issubdtype(x.dtype, jnp.floating) else jnp.float32
    x = x.astype(dtype)

    wc, ws = _dft_matrices(n_fft, win_length, dtype)  # [F, F] each, host constants

    frame_tile = _pick_frame_tile(n_frames, _num_tensorcores_per_device())
    n_tiles = pl.cdiv(n_frames, frame_tile)           # no jnp.pad: partial last
                                                      # block writes are masked

    itemsize = jnp.dtype(dtype).itemsize
    cost = pl.CostEstimate(
        flops=8 * n_frames * n_fft * n_fft,           # 4 matmuls of [T,F]@[F,F]
        transcendentals=0,
        bytes_accessed=(itemsize * (2 * n_frames * n_fft + 2 * n_fft * n_fft)
                        + 4 * 2 * n_fft * n_frames),
    )

    out = pl.pallas_call(
        _stft_kernel,
        out_shape=jax.ShapeDtypeStruct((2, n_fft, n_frames), jnp.float32),
        grid=(n_tiles,),
        in_specs=[
            pl.BlockSpec((2, frame_tile, n_fft), lambda t: (0, t, 0)),  # I/Q frames
            pl.BlockSpec((n_fft, n_fft), lambda t: (0, 0)),             # wc (resident)
            pl.BlockSpec((n_fft, n_fft), lambda t: (0, 0)),             # ws (resident)
        ],
        out_specs=pl.BlockSpec((2, n_fft, frame_tile), lambda t: (0, 0, t)),
        compiler_params=pltpu.CompilerParams(dimension_semantics=("parallel",)),
        cost_estimate=cost,
    )(x, wc, ws)
    return out                                         # already [2, n_fft, n_frames]


def _reference(iq_signal, n_fft):
    """Pure-JAX reference (FFT-based) for correctness checking."""
    N = iq_signal.shape[1]
    n_frames = 1 + (N - n_fft) // n_fft
    x = iq_signal[0, : n_frames * n_fft] + 1j * iq_signal[1, : n_frames * n_fft]
    frames = x.reshape(n_frames, n_fft)
    n = jnp.arange(n_fft, dtype=jnp.float32)
    window = 0.5 * (1.0 - jnp.cos(2.0 * jnp.pi * n / n_fft))
    spec = jnp.fft.fft(frames * window, axis=-1) / n_fft          # [T, F]
    spec = spec.T                                                 # [F, T]
    return jnp.stack([jnp.real(spec), jnp.imag(spec)], axis=0).astype(jnp.float32)


if __name__ == "__main__":
    # Module-consistent shapes: n_fft = win = hop = 256, 512 frames -> N = 131072.
    N_FFT = 256
    N_FRAMES = 512
    N = N_FFT * N_FRAMES

    key = jax.random.PRNGKey(0)
    iq = jax.random.normal(key, (2, N), dtype=jnp.float32)

    out = jax.block_until_ready(transform_spectrogram(iq, n_fft=N_FFT))
    assert out.shape == (2, N_FFT, N_FRAMES), out.shape
    ref = jax.block_until_ready(_reference(iq, N_FFT))
    # DEFAULT matmul precision feeds bf16 to the MXU (f32 accumulate), so allow
    # ~1e-3 vs the FFT reference; use precision=HIGHEST in-kernel if tighter
    # accuracy is ever required.
    np.testing.assert_allclose(np.asarray(out), np.asarray(ref), atol=1e-3, rtol=1e-3)

    # Non-multiple frame count (+ trailing samples) exercises the padless path:
    # grid = cdiv(n_frames, tile) with a masked partial last block.
    N_FRAMES2 = 300
    iq2 = jax.random.normal(jax.random.PRNGKey(1),
                            (2, N_FFT * N_FRAMES2 + 17), dtype=jnp.float32)
    out2 = jax.block_until_ready(transform_spectrogram(iq2, n_fft=N_FFT))
    ref2 = jax.block_until_ready(_reference(iq2, N_FFT))
    assert out2.shape == ref2.shape == (2, N_FFT, N_FRAMES2), (out2.shape, ref2.shape)
    np.testing.assert_allclose(np.asarray(out2), np.asarray(ref2), atol=1e-3, rtol=1e-3)

    print("KERNEL_OK")
</pallas_src>

<mosaic_0001>
module attributes {stable_mosaic.version = 11 : i64} {
  func.func @_stft_kernel(%arg0: i32, %arg1: memref<2x512x256xf32, #tpu.memory_space<vmem>>, %arg2: memref<256x256xf32, #tpu.memory_space<vmem>>, %arg3: memref<256x256xf32, #tpu.memory_space<vmem>>, %arg4: memref<2x256x512xf32, #tpu.memory_space<vmem>>) attributes {dimension_semantics = [#tpu.dimension_semantics<parallel>], iteration_bounds = array<i64: 1>, scalar_prefetch = 0 : i64, scratch_operands = 0 : i64, tpu.core_type = #tpu.core_type<tc>, window_params = [{transform_indices = @transform_0, window_bounds = array<i64: 2, 512, 256>}, {pipeline_mode = #tpu.pipeline_mode<synchronous>, transform_indices = @transform_1, window_bounds = array<i64: 256, 256>}, {pipeline_mode = #tpu.pipeline_mode<synchronous>, transform_indices = @transform_2, window_bounds = array<i64: 256, 256>}, {transform_indices = @transform_3, window_bounds = array<i64: 2, 256, 512>}]} {
    %c0 = arith.constant 0 : index
    %c0_0 = arith.constant 0 : index
    %c0_1 = arith.constant 0 : index
    %0 = vector.load %arg1[%c0, %c0_0, %c0_1] : memref<2x512x256xf32, #tpu.memory_space<vmem>>, vector<1x512x256xf32>
    %1 = vector.shape_cast %0 : vector<1x512x256xf32> to vector<512x256xf32>
    %c1 = arith.constant 1 : index
    %c0_2 = arith.constant 0 : index
    %c0_3 = arith.constant 0 : index
    %2 = vector.load %arg1[%c1, %c0_2, %c0_3] : memref<2x512x256xf32, #tpu.memory_space<vmem>>, vector<1x512x256xf32>
    %3 = vector.shape_cast %2 : vector<1x512x256xf32> to vector<512x256xf32>
    %c0_4 = arith.constant 0 : index
    %c0_5 = arith.constant 0 : index
    %4 = vector.load %arg2[%c0_4, %c0_5] : memref<256x256xf32, #tpu.memory_space<vmem>>, vector<256x256xf32>
    %c0_6 = arith.constant 0 : index
    %c0_7 = arith.constant 0 : index
    %5 = vector.load %arg3[%c0_6, %c0_7] : memref<256x256xf32, #tpu.memory_space<vmem>>, vector<256x256xf32>
    %cst = arith.constant dense<0.000000e+00> : vector<512x256xf32>
    %6 = tpu.matmul %1, %4, %cst {dimension_numbers = #tpu.dot_dimension_numbers<[1], [0], [0], [1], [0, 0, 1, 1], [], []>} : vector<512x256xf32>, vector<256x256xf32>, vector<512x256xf32> -> vector<512x256xf32>
    %cst_8 = arith.constant dense<0.000000e+00> : vector<512x256xf32>
    %7 = tpu.matmul %3, %5, %cst_8 {dimension_numbers = #tpu.dot_dimension_numbers<[1], [0], [0], [1], [0, 0, 1, 1], [], []>} : vector<512x256xf32>, vector<256x256xf32>, vector<512x256xf32> -> vector<512x256xf32>
    %8 = arith.addf %6, %7 : vector<512x256xf32>
    %cst_9 = arith.constant dense<0.000000e+00> : vector<512x256xf32>
    %9 = tpu.matmul %3, %4, %cst_9 {dimension_numbers = #tpu.dot_dimension_numbers<[1], [0], [0], [1], [0, 0, 1, 1], [], []>} : vector<512x256xf32>, vector<256x256xf32>, vector<512x256xf32> -> vector<512x256xf32>
    %cst_10 = arith.constant dense<0.000000e+00> : vector<512x256xf32>
    %10 = tpu.matmul %1, %5, %cst_10 {dimension_numbers = #tpu.dot_dimension_numbers<[1], [0], [0], [1], [0, 0, 1, 1], [], []>} : vector<512x256xf32>, vector<256x256xf32>, vector<512x256xf32> -> vector<512x256xf32>
    %11 = arith.subf %9, %10 : vector<512x256xf32>
    %12 = tpu.transpose %8, [1, 0] : vector<512x256xf32> -> vector<256x512xf32>
    %c0_11 = arith.constant 0 : index
    %c0_12 = arith.constant 0 : index
    %c0_13 = arith.constant 0 : index
    %13 = vector.load %arg4[%c0_11, %c0_12, %c0_13] : memref<2x256x512xf32, #tpu.memory_space<vmem>>, vector<1x256x512xf32>
    %14 = vector.shape_cast %13 : vector<1x256x512xf32> to vector<256x512xf32>
    %15 = vector.shape_cast %12 : vector<256x512xf32> to vector<1x256x512xf32>
    tpu.vector_store %arg4[%c0_11, %c0_12, %c0_13], %15 {strides = array<i32>} : memref<2x256x512xf32, #tpu.memory_space<vmem>>, vector<1x256x512xf32>,
    %16 = tpu.transpose %11, [1, 0] : vector<512x256xf32> -> vector<256x512xf32>
    %c1_14 = arith.constant 1 : index
    %c0_15 = arith.constant 0 : index
    %c0_16 = arith.constant 0 : index
    %17 = vector.load %arg4[%c1_14, %c0_15, %c0_16] : memref<2x256x512xf32, #tpu.memory_space<vmem>>, vector<1x256x512xf32>
    %18 = vector.shape_cast %17 : vector<1x256x512xf32> to vector<256x512xf32>
    %19 = vector.shape_cast %16 : vector<256x512xf32> to vector<1x256x512xf32>
    tpu.vector_store %arg4[%c1_14, %c0_15, %c0_16], %19 {strides = array<i32>} : memref<2x256x512xf32, #tpu.memory_space<vmem>>, vector<1x256x512xf32>,
    return
  }
  func.func @transform_0(%arg0: i32) -> (i32, i32, i32) {
    %c0_i32 = arith.constant 0 : i32
    %c0_i32_0 = arith.constant 0 : i32
    %c0_i32_1 = arith.constant 0 : i32
    return %c0_i32, %arg0, %c0_i32_0 : i32, i32, i32
  }
  func.func @transform_1(%arg0: i32) -> (i32, i32) {
    %c0_i32 = arith.constant 0 : i32
    %c0_i32_0 = arith.constant 0 : i32
    %c0_i32_1 = arith.constant 0 : i32
    return %c0_i32, %c0_i32_0 : i32, i32
  }
  func.func @transform_2(%arg0: i32) -> (i32, i32) {
    %c0_i32 = arith.constant 0 : i32
    %c0_i32_0 = arith.constant 0 : i32
    %c0_i32_1 = arith.constant 0 : i32
    return %c0_i32, %c0_i32_0 : i32, i32
  }
  func.func @transform_3(%arg0: i32) -> (i32, i32, i32) {
    %c0_i32 = arith.constant 0 : i32
    %c0_i32_0 = arith.constant 0 : i32
    %c0_i32_1 = arith.constant 0 : i32
    return %c0_i32, %c0_i32_0, %arg0 : i32, i32, i32
  }
}

</mosaic_0001>

<llo_original>
// kernel: tpu_custom_call.1
$region0: #{tpu_custom_call.1}
  #allocation0 [shape = 'u32[]', space=smem, size = 0x4, offset = 0x4, fixed_abs, tag = 'smem constant byte address 0x4 - core index']
  #allocation1 [shape = 'u32[144,128]{1,0:T(1,128)}', space=vmem, size = 0x12000, scoped, tag = 'internal scratch']
  %s0 = inlined_call_operand.hbm [shape: f32[2,512,256], index: 0, kind: input, shape index: {}]
  %s1 = inlined_call_operand.hbm [shape: f32[256,256], index: 1, kind: input, shape index: {}]
  %s2 = inlined_call_operand.hbm [shape: f32[256,256], index: 2, kind: input, shape index: {}]
  %s3 = inlined_call_operand.hbm [shape: f32[2,256,512], index: 3, kind: output, shape index: {}]
  %s4 = sld [smem:[#allocation0]]
  $region34: #{tpu_custom_call.1} parent=0
    _
  %s6 = ssub.s32 1, %s4
  %s7 = scalar_select 0, %s6, %s4
  $region1: #{tpu_custom_call.1} parent=0
    #allocation2 [shape = 'u8[1048576]{0}', space=vmem, size = 0x100000, scoped, tag = 'input window, operand 0, single buffered']
    #allocation3 [shape = 's32[1]{0}', space=sflag, size = 0x4, scoped, tag = 'scoped memory for tpu_custom_call.1']
    #allocation4 [shape = 's32[1]{0}', space=sflag, size = 0x4, scoped, tag = 'scoped memory for tpu_custom_call.1']
    #allocation5 [shape = 'u8[262144]{0}', space=vmem, size = 0x40000, scoped, tag = 'input window, operand 1, single buffered']
    #allocation6 [shape = 's32[1]{0}', space=sflag, size = 0x4, scoped, tag = 'scoped memory for tpu_custom_call.1']
    #allocation7 [shape = 'u8[262144]{0}', space=vmem, size = 0x40000, scoped, tag = 'input window, operand 2, single buffered']
    #allocation8 [shape = 'u8[1048576]{0}', space=vmem, size = 0x100000, scoped, tag = 'output window, operand 0, single buffered']
    %8 = vsyncpa [#allocation3], 0
    %9 = vsyncpa [#allocation6], 0
    %10 = vsyncpa [#allocation4], 0
    // Predicated region
    $region2: #{tpu_custom_call.1} parent=1 // pred_check
      _
    $region3: #{tpu_custom_call.1} parent=1 // pred_check_branch
      %12 = sbr.rel (0) target = $region5
    $region4: #{tpu_custom_call.1} parent=1 // pred_region
      %s14 = ssub.s32 32768, 32768
      %15 = vsyncadd [#allocation3], %s14
      %s16 = sshll.u32 [#allocation2], 4
      %s17 = int_to_ptr.vmem [resolvable:$true] %s16
      %22 = dma.hbm_to_vmem [thread:$0]  %s0, 32768, %s17, [#allocation3], 256, 256, 16
    $region5: #{tpu_custom_call.1} parent=1 // pred_fallthru
      _
    // Predicated region
    $region6: #{tpu_custom_call.1} parent=1 // pred_check
      _
    $region7: #{tpu_custom_call.1} parent=1 // pred_check_branch
      %24 = sbr.rel (0) target = $region9
    $region8: #{tpu_custom_call.1} parent=1 // pred_region
      %s26 = ssub.s32 8192, 8192
      %27 = vsyncadd [#allocation6], %s26
      %s28 = sshll.u32 [#allocation5], 4
      %s29 = int_to_ptr.vmem [resolvable:$true] %s28
      %34 = dma.hbm_to_vmem [thread:$0]  %s1, 8192, %s29, [#allocation6], 256, 256, 16
    $region9: #{tpu_custom_call.1} parent=1 // pred_fallthru
      _
    // Predicated region
    $region10: #{tpu_custom_call.1} parent=1 // pred_check
      _
    $region11: #{tpu_custom_call.1} parent=1 // pred_check_branch
      %36 = sbr.rel (0) target = $region13
    $region12: #{tpu_custom_call.1} parent=1 // pred_region
      %s38 = ssub.s32 8192, 8192
      %39 = vsyncadd [#allocation6], %s38
      %s40 = sshll.u32 [#allocation7], 4
      %s41 = int_to_ptr.vmem [resolvable:$true] %s40
      %46 = dma.hbm_to_vmem [thread:$0]  %s2, 8192, %s41, [#allocation6], 256, 256, 16
    $region13: #{tpu_custom_call.1} parent=1 // pred_fallthru
      _
    // Predicated region
    $region14: #{tpu_custom_call.1} parent=1 // pred_check
      _
    $region15: #{tpu_custom_call.1} parent=1 // pred_check_branch
      %48 = sbr.rel (0) target = $region17
    $region16: #{tpu_custom_call.1} parent=1 // pred_region
      %49 = dma.done [#allocation3], 32768
    $region17: #{tpu_custom_call.1} parent=1 // pred_fallthru
      _
    // Predicated region
    $region18: #{tpu_custom_call.1} parent=1 // pred_check
      _
    $region19: #{tpu_custom_call.1} parent=1 // pred_check_branch
      %51 = sbr.rel (0) target = $region21
    $region20: #{tpu_custom_call.1} parent=1 // pred_region
      %52 = dma.done [#allocation6], 8192
    $region21: #{tpu_custom_call.1} parent=1 // pred_fallthru
      _
    // Predicated region
    $region22: #{tpu_custom_call.1} parent=1 // pred_check
      _
    $region23: #{tpu_custom_call.1} parent=1 // pred_check_branch
      %54 = sbr.rel (0) target = $region25
    $region24: #{tpu_custom_call.1} parent=1 // pred_region
      %55 = dma.done [#allocation6], 8192
    $region25: #{tpu_custom_call.1} parent=1 // pred_fallthru
      _
    %v56 = vld [vmem:[#allocation2] sm:$0xff]
    %v57 = vld [vmem:[#allocation2 + $0x8] sm:$0xff]
    %v58 = vld [vmem:[#allocation2 + $0x10] sm:$0xff]
    %v59 = vld [vmem:[#allocation2 + $0x18] sm:$0xff]
    %v60 = vld [vmem:[#allocation2 + $0x20] sm:$0xff]
    %v61 = vld [vmem:[#allocation2 + $0x28] sm:$0xff]
    %v62 = vld [vmem:[#allocation2 + $0x30] sm:$0xff]
    %v63 = vld [vmem:[#allocation2 + $0x38] sm:$0xff]
    %v64 = vld [vmem:[#allocation2 + $0x40] sm:$0xff]
    %v65 = vld [vmem:[#allocation2 + $0x48] sm:$0xff]
    %v66 = vld [vmem:[#allocation2 + $0x50] sm:$0xff]
    %v67 = vld [vmem:[#allocation2 + $0x58] sm:$0xff]
    %v68 = vld [vmem:[#allocation2 + $0x60] sm:$0xff]
    %v69 = vld [vmem:[#allocation2 + $0x68] sm:$0xff]
    %v70 = vld [vmem:[#allocation2 + $0x70] sm:$0xff]
    %v71 = vld [vmem:[#allocation2 + $0x78] sm:$0xff]
    %v72 = vld [vmem:[#allocation2 + $0x80] sm:$0xff]
    %v73 = vld [vmem:[#allocation2 + $0x88] sm:$0xff]
    %v74 = vld [vmem:[#allocation2 + $0x90] sm:$0xff]
    %v75 = vld [vmem:[#allocation2 + $0x98] sm:$0xff]
    %v76 = vld [vmem:[#allocation2 + $0xa0] sm:$0xff]
    %v77 = vld [vmem:[#allocation2 + $0xa8] sm:$0xff]
    %v78 = vld [vmem:[#allocation2 + $0xb0] sm:$0xff]
    %v79 = vld [vmem:[#allocation2 + $0xb8] sm:$0xff]
    %v80 = vld [vmem:[#allocation2 + $0xc0] sm:$0xff]
    %v81 = vld [vmem:[#allocation2 + $0xc8] sm:$0xff]
    %v82 = vld [vmem:[#allocation2 + $0xd0] sm:$0xff]
    %v83 = vld [vmem:[#allocation2 + $0xd8] sm:$0xff]
    %v84 = vld [vmem:[#allocation2 + $0xe0] sm:$0xff]
    %v85 = vld [vmem:[#allocation2 + $0xe8] sm:$0xff]
    %v86 = vld [vmem:[#allocation2 + $0xf0] sm:$0xff]
    %v87 = vld [vmem:[#allocation2 + $0xf8] sm:$0xff]
    %v88 = vld [vmem:[#allocation2 + $0x100] sm:$0xff]
    %v89 = vld [vmem:[#allocation2 + $0x108] sm:$0xff]
    %v90 = vld [vmem:[#allocation2 + $0x110] sm:$0xff]
    %v91 = vld [vmem:[#allocation2 + $0x118] sm:$0xff]
    %v92 = vld [vmem:[#allocation2 + $0x120] sm:$0xff]
    %v93 = vld [vmem:[#allocation2 + $0x128] sm:$0xff]
    %v94 = vld [vmem:[#allocation2 + $0x130] sm:$0xff]
    %v95 = vld [vmem:[#allocation2 + $0x138] sm:$0xff]
    %v96 = vld [vmem:[#allocation2 + $0x140] sm:$0xff]
    %v97 = vld [vmem:[#allocation2 + $0x148] sm:$0xff]
    %v98 = vld [vmem:[#allocation2 + $0x150] sm:$0xff]
    %v99 = vld [vmem:[#allocation2 + $0x158] sm:$0xff]
    %v100 = vld [vmem:[#allocation2 + $0x160] sm:$0xff]
    %v101 = vld [vmem:[#allocation2 + $0x168] sm:$0xff]
    %v102 = vld [vmem:[#allocation2 + $0x170] sm:$0xff]
    %v103 = vld [vmem:[#allocation2 + $0x178] sm:$0xff]
    %v104 = vld [vmem:[#allocation2 + $0x180] sm:$0xff]
    %v105 = vld [vmem:[#allocation2 + $0x188] sm:$0xff]
    %v106 = vld [vmem:[#allocation2 + $0x190] sm:$0xff]
    %v107 = vld [vmem:[#allocation2 + $0x198] sm:$0xff]
    %v108 = vld [vmem:[#allocation2 + $0x1a0] sm:$0xff]
    %v109 = vld [vmem:[#allocation2 + $0x1a8] sm:$0xff]
    %v110 = vld [vmem:[#allocation2 + $0x1b0] sm:$0xff]
    %v111 = vld [vmem:[#allocation2 + $0x1b8] sm:$0xff]
    %v112 = vld [vmem:[#allocation2 + $0x1c0] sm:$0xff]
    %v113 = vld [vmem:[#allocation2 + $0x1c8] sm:$0xff]
    %v114 = vld [vmem:[#allocation2 + $0x1d0] sm:$0xff]
    %v115 = vld [vmem:[#allocation2 + $0x1d8] sm:$0xff]
    %v116 = vld [vmem:[#allocation2 + $0x1e0] sm:$0xff]
    %v117 = vld [vmem:[#allocation2 + $0x1e8] sm:$0xff]
    %v118 = vld [vmem:[#allocation2 + $0x1f0] sm:$0xff]
    %v119 = vld [vmem:[#allocation2 + $0x1f8] sm:$0xff]
    %v120 = vld [vmem:[#allocation2 + $0x200] sm:$0xff]
    %v121 = vld [vmem:[#allocation2 + $0x208] sm:$0xff]
    %v122 = vld [vmem:[#allocation2 + $0x210] sm:$0xff]
    %v123 = vld [vmem:[#allocation2 + $0x218] sm:$0xff]
    %v124 = vld [vmem:[#allocation2 + $0x220] sm:$0xff]
    %v125 = vld [vmem:[#allocation2 + $0x228] sm:$0xff]
    %v126 = vld [vmem:[#allocation2 + $0x230] sm:$0xff]
    %v127 = vld [vmem:[#allocation2 + $0x238] sm:$0xff]
    %v128 = vld [vmem:[#allocation2 + $0x240] sm:$0xff]
    %v129 = vld [vmem:[#allocation2 + $0x248] sm:$0xff]
    %v130 = vld [vmem:[#allocation2 + $0x250] sm:$0xff]
    %v131 = vld [vmem:[#allocation2 + $0x258] sm:$0xff]
    %v132 = vld [vmem:[#allocation2 + $0x260] sm:$0xff]
    %v133 = vld [vmem:[#allocation2 + $0x268] sm:$0xff]
    %v134 = vld [vmem:[#allocation2 + $0x270] sm:$0xff]
    %v135 = vld [vmem:[#allocation2 + $0x278] sm:$0xff]
    %v136 = vld [vmem:[#allocation2 + $0x280] sm:$0xff]
    %v137 = vld [vmem:[#allocation2 + $0x288] sm:$0xff]
    %v138 = vld [vmem:[#allocation2 + $0x290] sm:$0xff]
    %v139 = vld [vmem:[#allocation2 + $0x298] sm:$0xff]
    %v140 = vld [vmem:[#allocation2 + $0x2a0] sm:$0xff]
    %v141 = vld [vmem:[#allocation2 + $0x2a8] sm:$0xff]
    %v142 = vld [vmem:[#allocation2 + $0x2b0] sm:$0xff]
    %v143 = vld [vmem:[#allocation2 + $0x2b8] sm:$0xff]
    %v144 = vld [vmem:[#allocation2 + $0x2c0] sm:$0xff]
    %v145 = vld [vmem:[#allocation2 + $0x2c8] sm:$0xff]
    %v146 = vld [vmem:[#allocation2 + $0x2d0] sm:$0xff]
    %v147 = vld [vmem:[#allocation2 + $0x2d8] sm:$0xff]
    %v148 = vld [vmem:[#allocation2 + $0x2e0] sm:$0xff]
    %v149 = vld [vmem:[#allocation2 + $0x2e8] sm:$0xff]
    %v150 = vld [vmem:[#allocation2 + $0x2f0] sm:$0xff]
    %v151 = vld [vmem:[#allocation2 + $0x2f8] sm:$0xff]
    %v152 = vld [vmem:[#allocation2 + $0x300] sm:$0xff]
    %v153 = vld [vmem:[#allocation2 + $0x308] sm:$0xff]
    %v154 = vld [vmem:[#allocation2 + $0x310] sm:$0xff]
    %v155 = vld [vmem:[#allocation2 + $0x318] sm:$0xff]
    %v156 = vld [vmem:[#allocation2 + $0x320] sm:$0xff]
    %v157 = vld [vmem:[#allocation2 + $0x328] sm:$0xff]
    %v158 = vld [vmem:[#allocation2 + $0x330] sm:$0xff]
    %v159 = vld [vmem:[#allocation2 + $0x338] sm:$0xff]
    %v160 = vld [vmem:[#allocation2 + $0x340] sm:$0xff]
    %v161 = vld [vmem:[#allocation2 + $0x348] sm:$0xff]
    %v162 = vld [vmem:[#allocation2 + $0x350] sm:$0xff]
    %v163 = vld [vmem:[#allocation2 + $0x358] sm:$0xff]
    %v164 = vld [vmem:[#allocation2 + $0x360] sm:$0xff]
    %v165 = vld [vmem:[#allocation2 + $0x368] sm:$0xff]
    %v166 = vld [vmem:[#allocation2 + $0x370] sm:$0xff]
    %v167 = vld [vmem:[#allocation2 + $0x378] sm:$0xff]
    %v168 = vld [vmem:[#allocation2 + $0x380] sm:$0xff]
    %v169 = vld [vmem:[#allocation2 + $0x388] sm:$0xff]
    %v170 = vld [vmem:[#allocation2 + $0x390] sm:$0xff]
    %v171 = vld [vmem:[#allocation2 + $0x398] sm:$0xff]
    %v172 = vld [vmem:[#allocation2 + $0x3a0] sm:$0xff]
    %v173 = vld [vmem:[#allocation2 + $0x3a8] sm:$0xff]
    %v174 = vld [vmem:[#allocation2 + $0x3b0] sm:$0xff]
    %v175 = vld [vmem:[#allocation2 + $0x3b8] sm:$0xff]
    %v176 = vld [vmem:[#allocation2 + $0x3c0] sm:$0xff]
    %v177 = vld [vmem:[#allocation2 + $0x3c8] sm:$0xff]
    %v178 = vld [vmem:[#allocation2 + $0x3d0] sm:$0xff]
    %v179 = vld [vmem:[#allocation2 + $0x3d8] sm:$0xff]
    %v180 = vld [vmem:[#allocation2 + $0x3e0] sm:$0xff]
    %v181 = vld [vmem:[#allocation2 + $0x3e8] sm:$0xff]
    %v182 = vld [vmem:[#allocation2 + $0x3f0] sm:$0xff]
    %v183 = vld [vmem:[#allocation2 + $0x3f8] sm:$0xff]
    %s184 = scalar_lea.vmem [#allocation2], 1024
    %v185 = vld [vmem:[%s184] sm:$0xff]
    %v186 = vld [vmem:[%s184 + $0x8] sm:$0xff]
    %v187 = vld [vmem:[%s184 + $0x10] sm:$0xff]
    %v188 = vld [vmem:[%s184 + $0x18] sm:$0xff]
    %v189 = vld [vmem:[%s184 + $0x20] sm:$0xff]
    %v190 = vld [vmem:[%s184 + $0x28] sm:$0xff]
    %v191 = vld [vmem:[%s184 + $0x30] sm:$0xff]
    %v192 = vld [vmem:[%s184 + $0x38] sm:$0xff]
    %v193 = vld [vmem:[%s184 + $0x40] sm:$0xff]
    %v194 = vld [vmem:[%s184 + $0x48] sm:$0xff]
    %v195 = vld [vmem:[%s184 + $0x50] sm:$0xff]
    %v196 = vld [vmem:[%s184 + $0x58] sm:$0xff]
    %v197 = vld [vmem:[%s184 + $0x60] sm:$0xff]
    %v198 = vld [vmem:[%s184 + $0x68] sm:$0xff]
    %v199 = vld [vmem:[%s184 + $0x70] sm:$0xff]
    %v200 = vld [vmem:[%s184 + $0x78] sm:$0xff]
    %v201 = vld [vmem:[%s184 + $0x80] sm:$0xff]
    %v202 = vld [vmem:[%s184 + $0x88] sm:$0xff]
    %v203 = vld [vmem:[%s184 + $0x90] sm:$0xff]
    %v204 = vld [vmem:[%s184 + $0x98] sm:$0xff]
    %v205 = vld [vmem:[%s184 + $0xa0] sm:$0xff]
    %v206 = vld [vmem:[%s184 + $0xa8] sm:$0xff]
    %v207 = vld [vmem:[%s184 + $0xb0] sm:$0xff]
    %v208 = vld [vmem:[%s184 + $0xb8] sm:$0xff]
    %v209 = vld [vmem:[%s184 + $0xc0] sm:$0xff]
    %v210 = vld [vmem:[%s184 + $0xc8] sm:$0xff]
    %v211 = vld [vmem:[%s184 + $0xd0] sm:$0xff]
    %v212 = vld [vmem:[%s184 + $0xd8] sm:$0xff]
    %v213 = vld [vmem:[%s184 + $0xe0] sm:$0xff]
    %v214 = vld [vmem:[%s184 + $0xe8] sm:$0xff]
    %v215 = vld [vmem:[%s184 + $0xf0] sm:$0xff]
    %v216 = vld [vmem:[%s184 + $0xf8] sm:$0xff]
    %v217 = vld [vmem:[%s184 + $0x100] sm:$0xff]
    %v218 = vld [vmem:[%s184 + $0x108] sm:$0xff]
    %v219 = vld [vmem:[%s184 + $0x110] sm:$0xff]
    %v220 = vld [vmem:[%s184 + $0x118] sm:$0xff]
    %v221 = vld [vmem:[%s184 + $0x120] sm:$0xff]
    %v222 = vld [vmem:[%s184 + $0x128] sm:$0xff]
    %v223 = vld [vmem:[%s184 + $0x130] sm:$0xff]
    %v224 = vld [vmem:[%s184 + $0x138] sm:$0xff]
    %v225 = vld [vmem:[%s184 + $0x140] sm:$0xff]
    %v226 = vld [vmem:[%s184 + $0x148] sm:$0xff]
    %v227 = vld [vmem:[%s184 + $0x150] sm:$0xff]
    %v228 = vld [vmem:[%s184 + $0x158] sm:$0xff]
    %v229 = vld [vmem:[%s184 + $0x160] sm:$0xff]
    %v230 = vld [vmem:[%s184 + $0x168] sm:$0xff]
    %v231 = vld [vmem:[%s184 + $0x170] sm:$0xff]
    %v232 = vld [vmem:[%s184 + $0x178] sm:$0xff]
    %v233 = vld [vmem:[%s184 + $0x180] sm:$0xff]
    %v234 = vld [vmem:[%s184 + $0x188] sm:$0xff]
    %v235 = vld [vmem:[%s184 + $0x190] sm:$0xff]
    %v236 = vld [vmem:[%s184 + $0x198] sm:$0xff]
    %v237 = vld [vmem:[%s184 + $0x1a0] sm:$0xff]
    %v238 = vld [vmem:[%s184 + $0x1a8] sm:$0xff]
    %v239 = vld [vmem:[%s184 + $0x1b0] sm:$0xff]
    %v240 = vld [vmem:[%s184 + $0x1b8] sm:$0xff]
    %v241 = vld [vmem:[%s184 + $0x1c0] sm:$0xff]
    %v242 = vld [vmem:[%s184 + $0x1c8] sm:$0xff]
    %v243 = vld [vmem:[%s184 + $0x1d0] sm:$0xff]
    %v244 = vld [vmem:[%s184 + $0x1d8] sm:$0xff]
    %v245 = vld [vmem:[%s184 + $0x1e0] sm:$0xff]
    %v246 = vld [vmem:[%s184 + $0x1e8] sm:$0xff]
    %v247 = vld [vmem:[%s184 + $0x1f0] sm:$0xff]
    %v248 = vld [vmem:[%s184 + $0x1f8] sm:$0xff]
    %v249 = vld [vmem:[%s184 + $0x200] sm:$0xff]
    %v250 = vld [vmem:[%s184 + $0x208] sm:$0xff]
    %v251 = vld [vmem:[%s184 + $0x210] sm:$0xff]
    %v252 = vld [vmem:[%s184 + $0x218] sm:$0xff]
    %v253 = vld [vmem:[%s184 + $0x220] sm:$0xff]
    %v254 = vld [vmem:[%s184 + $0x228] sm:$0xff]
    %v255 = vld [vmem:[%s184 + $0x230] sm:$0xff]
    %v256 = vld [vmem:[%s184 + $0x238] sm:$0xff]
    %v257 = vld [vmem:[%s184 + $0x240] sm:$0xff]
    %v258 = vld [vmem:[%s184 + $0x248] sm:$0xff]
    %v259 = vld [vmem:[%s184 + $0x250] sm:$0xff]
    %v260 = vld [vmem:[%s184 + $0x258] sm:$0xff]
    %v261 = vld [vmem:[%s184 + $0x260] sm:$0xff]
    %v262 = vld [vmem:[%s184 + $0x268] sm:$0xff]
    %v263 = vld [vmem:[%s184 + $0x270] sm:$0xff]
    %v264 = vld [vmem:[%s184 + $0x278] sm:$0xff]
    %v265 = vld [vmem:[%s184 + $0x280] sm:$0xff]
    %v266 = vld [vmem:[%s184 + $0x288] sm:$0xff]
    %v267 = vld [vmem:[%s184 + $0x290] sm:$0xff]
    %v268 = vld [vmem:[%s184 + $0x298] sm:$0xff]
    %v269 = vld [vmem:[%s184 + $0x2a0] sm:$0xff]
    %v270 = vld [vmem:[%s184 + $0x2a8] sm:$0xff]
    %v271 = vld [vmem:[%s184 + $0x2b0] sm:$0xff]
    %v272 = vld [vmem:[%s184 + $0x2b8] sm:$0xff]
    %v273 = vld [vmem:[%s184 + $0x2c0] sm:$0xff]
    %v274 = vld [vmem:[%s184 + $0x2c8] sm:$0xff]
    %v275 = vld [vmem:[%s184 + $0x2d0] sm:$0xff]
    %v276 = vld [vmem:[%s184 + $0x2d8] sm:$0xff]
    %v277 = vld [vmem:[%s184 + $0x2e0] sm:$0xff]
    %v278 = vld [vmem:[%s184 + $0x2e8] sm:$0xff]
    %v279 = vld [vmem:[%s184 + $0x2f0] sm:$0xff]
    %v280 = vld [vmem:[%s184 + $0x2f8] sm:$0xff]
    %v281 = vld [vmem:[%s184 + $0x300] sm:$0xff]
    %v282 = vld [vmem:[%s184 + $0x308] sm:$0xff]
    %v283 = vld [vmem:[%s184 + $0x310] sm:$0xff]
    %v284 = vld [vmem:[%s184 + $0x318] sm:$0xff]
    %v285 = vld [vmem:[%s184 + $0x320] sm:$0xff]
    %v286 = vld [vmem:[%s184 + $0x328] sm:$0xff]
    %v287 = vld [vmem:[%s184 + $0x330] sm:$0xff]
    %v288 = vld [vmem:[%s184 + $0x338] sm:$0xff]
    %v289 = vld [vmem:[%s184 + $0x340] sm:$0xff]
    %v290 = vld [vmem:[%s184 + $0x348] sm:$0xff]
    %v291 = vld [vmem:[%s184 + $0x350] sm:$0xff]
    %v292 = vld [vmem:[%s184 + $0x358] sm:$0xff]
    %v293 = vld [vmem:[%s184 + $0x360] sm:$0xff]
    %v294 = vld [vmem:[%s184 + $0x368] sm:$0xff]
    %v295 = vld [vmem:[%s184 + $0x370] sm:$0xff]
    %v296 = vld [vmem:[%s184 + $0x378] sm:$0xff]
    %v297 = vld [vmem:[%s184 + $0x380] sm:$0xff]
    %v298 = vld [vmem:[%s184 + $0x388] sm:$0xff]
    %v299 = vld [vmem:[%s184 + $0x390] sm:$0xff]
    %v300 = vld [vmem:[%s184 + $0x398] sm:$0xff]
    %v301 = vld [vmem:[%s184 + $0x3a0] sm:$0xff]
    %v302 = vld [vmem:[%s184 + $0x3a8] sm:$0xff]
    %v303 = vld [vmem:[%s184 + $0x3b0] sm:$0xff]
    %v304 = vld [vmem:[%s184 + $0x3b8] sm:$0xff]
    %v305 = vld [vmem:[%s184 + $0x3c0] sm:$0xff]
    %v306 = vld [vmem:[%s184 + $0x3c8] sm:$0xff]
    %v307 = vld [vmem:[%s184 + $0x3d0] sm:$0xff]
    %v308 = vld [vmem:[%s184 + $0x3d8] sm:$0xff]
    %v309 = vld [vmem:[%s184 + $0x3e0] sm:$0xff]
    %v310 = vld [vmem:[%s184 + $0x3e8] sm:$0xff]
    %v311 = vld [vmem:[%s184 + $0x3f0] sm:$0xff]
    %v312 = vld [vmem:[%s184 + $0x3f8] sm:$0xff]
    %v313 = vld [vmem:[#allocation5] sm:$0xff]
    %v314 = vld [vmem:[#allocation5 + $0x8] sm:$0xff]
    %v315 = vld [vmem:[#allocation5 + $0x10] sm:$0xff]
    %v316 = vld [vmem:[#allocation5 + $0x18] sm:$0xff]
    %v317 = vld [vmem:[#allocation5 + $0x20] sm:$0xff]
    %v318 = vld [vmem:[#allocation5 + $0x28] sm:$0xff]
    %v319 = vld [vmem:[#allocation5 + $0x30] sm:$0xff]
    %v320 = vld [vmem:[#allocation5 + $0x38] sm:$0xff]
    %v321 = vld [vmem:[#allocation5 + $0x40] sm:$0xff]
    %v322 = vld [vmem:[#allocation5 + $0x48] sm:$0xff]
    %v323 = vld [vmem:[#allocation5 + $0x50] sm:$0xff]
    %v324 = vld [vmem:[#allocation5 + $0x58] sm:$0xff]
    %v325 = vld [vmem:[#allocation5 + $0x60] sm:$0xff]
    %v326 = vld [vmem:[#allocation5 + $0x68] sm:$0xff]
    %v327 = vld [vmem:[#allocation5 + $0x70] sm:$0xff]
    %v328 = vld [vmem:[#allocation5 + $0x78] sm:$0xff]
    %v329 = vld [vmem:[#allocation5 + $0x80] sm:$0xff]
    %v330 = vld [vmem:[#allocation5 + $0x88] sm:$0xff]
    %v331 = vld [vmem:[#allocation5 + $0x90] sm:$0xff]
    %v332 = vld [vmem:[#allocation5 + $0x98] sm:$0xff]
    %v333 = vld [vmem:[#allocation5 + $0xa0] sm:$0xff]
    %v334 = vld [vmem:[#allocation5 + $0xa8] sm:$0xff]
    %v335 = vld [vmem:[#allocation5 + $0xb0] sm:$0xff]
    %v336 = vld [vmem:[#allocation5 + $0xb8] sm:$0xff]
    %v337 = vld [vmem:[#allocation5 + $0xc0] sm:$0xff]
    %v338 = vld [vmem:[#allocation5 + $0xc8] sm:$0xff]
    %v339 = vld [vmem:[#allocation5 + $0xd0] sm:$0xff]
    %v340 = vld [vmem:[#allocation5 + $0xd8] sm:$0xff]
    %v341 = vld [vmem:[#allocation5 + $0xe0] sm:$0xff]
    %v342 = vld [vmem:[#allocation5 + $0xe8] sm:$0xff]
    %v343 = vld [vmem:[#allocation5 + $0xf0] sm:$0xff]
    %v344 = vld [vmem:[#allocation5 + $0xf8] sm:$0xff]
    %v345 = vld [vmem:[#allocation5 + $0x100] sm:$0xff]
    %v346 = vld [vmem:[#allocation5 + $0x108] sm:$0xff]
    %v347 = vld [vmem:[#allocation5 + $0x110] sm:$0xff]
    %v348 = vld [vmem:[#allocation5 + $0x118] sm:$0xff]
    %v349 = vld [vmem:[#allocation5 + $0x120] sm:$0xff]
    %v350 = vld [vmem:[#allocation5 + $0x128] sm:$0xff]
    %v351 = vld [vmem:[#allocation5 + $0x130] sm:$0xff]
    %v352 = vld [vmem:[#allocation5 + $0x138] sm:$0xff]
    %v353 = vld [vmem:[#allocation5 + $0x140] sm:$0xff]
    %v354 = vld [vmem:[#allocation5 + $0x148] sm:$0xff]
    %v355 = vld [vmem:[#allocation5 + $0x150] sm:$0xff]
    %v356 = vld [vmem:[#allocation5 + $0x158] sm:$0xff]
    %v357 = vld [vmem:[#allocation5 + $0x160] sm:$0xff]
    %v358 = vld [vmem:[#allocation5 + $0x168] sm:$0xff]
    %v359 = vld [vmem:[#allocation5 + $0x170] sm:$0xff]
    %v360 = vld [vmem:[#allocation5 + $0x178] sm:$0xff]
    %v361 = vld [vmem:[#allocation5 + $0x180] sm:$0xff]
    %v362 = vld [vmem:[#allocation5 + $0x188] sm:$0xff]
    %v363 = vld [vmem:[#allocation5 + $0x190] sm:$0xff]
    %v364 = vld [vmem:[#allocation5 + $0x198] sm:$0xff]
    %v365 = vld [vmem:[#allocation5 + $0x1a0] sm:$0xff]
    %v366 = vld [vmem:[#allocation5 + $0x1a8] sm:$0xff]
    %v367 = vld [vmem:[#allocation5 + $0x1b0] sm:$0xff]
    %v368 = vld [vmem:[#allocation5 + $0x1b8] sm:$0xff]
    %v369 = vld [vmem:[#allocation5 + $0x1c0] sm:$0xff]
    %v370 = vld [vmem:[#allocation5 + $0x1c8] sm:$0xff]
    %v371 = vld [vmem:[#allocation5 + $0x1d0] sm:$0xff]
    %v372 = vld [vmem:[#allocation5 + $0x1d8] sm:$0xff]
    %v373 = vld [vmem:[#allocation5 + $0x1e0] sm:$0xff]
    %v374 = vld [vmem:[#allocation5 + $0x1e8] sm:$0xff]
    %v375 = vld [vmem:[#allocation5 + $0x1f0] sm:$0xff]
    %v376 = vld [vmem:[#allocation5 + $0x1f8] sm:$0xff]
    %v377 = vld [vmem:[#allocation7] sm:$0xff]
    %v378 = vld [vmem:[#allocation7 + $0x8] sm:$0xff]
    %v379 = vld [vmem:[#allocation7 + $0x10] sm:$0xff]
    %v380 = vld [vmem:[#allocation7 + $0x18] sm:$0xff]
    %v381 = vld [vmem:[#allocation7 + $0x20] sm:$0xff]
    %v382 = vld [vmem:[#allocation7 + $0x28] sm:$0xff]
    %v383 = vld [vmem:[#allocation7 + $0x30] sm:$0xff]
    %v384 = vld [vmem:[#allocation7 + $0x38] sm:$0xff]
    %v385 = vld [vmem:[#allocation7 + $0x40] sm:$0xff]
    %v386 = vld [vmem:[#allocation7 + $0x48] sm:$0xff]
    %v387 = vld [vmem:[#allocation7 + $0x50] sm:$0xff]
    %v388 = vld [vmem:[#allocation7 + $0x58] sm:$0xff]
    %v389 = vld [vmem:[#allocation7 + $0x60] sm:$0xff]
    %v390 = vld [vmem:[#allocation7 + $0x68] sm:$0xff]
    %v391 = vld [vmem:[#allocation7 + $0x70] sm:$0xff]
    %v392 = vld [vmem:[#allocation7 + $0x78] sm:$0xff]
    %v393 = vld [vmem:[#allocation7 + $0x80] sm:$0xff]
    %v394 = vld [vmem:[#allocation7 + $0x88] sm:$0xff]
    %v395 = vld [vmem:[#allocation7 + $0x90] sm:$0xff]
    %v396 = vld [vmem:[#allocation7 + $0x98] sm:$0xff]
    %v397 = vld [vmem:[#allocation7 + $0xa0] sm:$0xff]
    %v398 = vld [vmem:[#allocation7 + $0xa8] sm:$0xff]
    %v399 = vld [vmem:[#allocation7 + $0xb0] sm:$0xff]
    %v400 = vld [vmem:[#allocation7 + $0xb8] sm:$0xff]
    %v401 = vld [vmem:[#allocation7 + $0xc0] sm:$0xff]
    %v402 = vld [vmem:[#allocation7 + $0xc8] sm:$0xff]
    %v403 = vld [vmem:[#allocation7 + $0xd0] sm:$0xff]
    %v404 = vld [vmem:[#allocation7 + $0xd8] sm:$0xff]
    %v405 = vld [vmem:[#allocation7 + $0xe0] sm:$0xff]
    %v406 = vld [vmem:[#allocation7 + $0xe8] sm:$0xff]
    %v407 = vld [vmem:[#allocation7 + $0xf0] sm:$0xff]
    %v408 = vld [vmem:[#allocation7 + $0xf8] sm:$0xff]
    %v409 = vld [vmem:[#allocation7 + $0x100] sm:$0xff]
    %v410 = vld [vmem:[#allocation7 + $0x108] sm:$0xff]
    %v411 = vld [vmem:[#allocation7 + $0x110] sm:$0xff]
    %v412 = vld [vmem:[#allocation7 + $0x118] sm:$0xff]
    %v413 = vld [vmem:[#allocation7 + $0x120] sm:$0xff]
    %v414 = vld [vmem:[#allocation7 + $0x128] sm:$0xff]
    %v415 = vld [vmem:[#allocation7 + $0x130] sm:$0xff]
    %v416 = vld [vmem:[#allocation7 + $0x138] sm:$0xff]
    %v417 = vld [vmem:[#allocation7 + $0x140] sm:$0xff]
    %v418 = vld [vmem:[#allocation7 + $0x148] sm:$0xff]
    %v419 = vld [vmem:[#allocation7 + $0x150] sm:$0xff]
    %v420 = vld [vmem:[#allocation7 + $0x158] sm:$0xff]
    %v421 = vld [vmem:[#allocation7 + $0x160] sm:$0xff]
    %v422 = vld [vmem:[#allocation7 + $0x168] sm:$0xff]
    %v423 = vld [vmem:[#allocation7 + $0x170] sm:$0xff]
    %v424 = vld [vmem:[#allocation7 + $0x178] sm:$0xff]
    %v425 = vld [vmem:[#allocation7 + $0x180] sm:$0xff]
    %v426 = vld [vmem:[#allocation7 + $0x188] sm:$0xff]
    %v427 = vld [vmem:[#allocation7 + $0x190] sm:$0xff]
    %v428 = vld [vmem:[#allocation7 + $0x198] sm:$0xff]
    %v429 = vld [vmem:[#allocation7 + $0x1a0] sm:$0xff]
    %v430 = vld [vmem:[#allocation7 + $0x1a8] sm:$0xff]
    %v431 = vld [vmem:[#allocation7 + $0x1b0] sm:$0xff]
    %v432 = vld [vmem:[#allocation7 + $0x1b8] sm:$0xff]
    %v433 = vld [vmem:[#allocation7 + $0x1c0] sm:$0xff]
    %v434 = vld [vmem:[#allocation7 + $0x1c8] sm:$0xff]
    %v435 = vld [vmem:[#allocation7 + $0x1d0] sm:$0xff]
    %v436 = vld [vmem:[#allocation7 + $0x1d8] sm:$0xff]
    %v437 = vld [vmem:[#allocation7 + $0x1e0] sm:$0xff]
    %v438 = vld [vmem:[#allocation7 + $0x1e8] sm:$0xff]
    %v439 = vld [vmem:[#allocation7 + $0x1f0] sm:$0xff]
    %v440 = vld [vmem:[#allocation7 + $0x1f8] sm:$0xff]
    %441 = vmatprep.subr.mxu0 %v378
    %442 = vmatpush1.msra.mxu0 %v377
    %443 = vmatprep.subr.mxu0 %v380
    %444 = vmatpush1.msra.mxu0 %v379
    %445 = vmatprep.subr.mxu0 %v382
    %446 = vmatpush1.msra.mxu0 %v381
    %447 = vmatprep.subr.mxu0 %v384
    %448 = vmatpush1.msra.mxu0 %v383
    %449 = vmatprep.subr.mxu0 %v386
    %450 = vmatpush1.msra.mxu0 %v385
    %451 = vmatprep.subr.mxu0 %v388
    %452 = vmatpush1.msra.mxu0 %v387
    %453 = vmatprep.subr.mxu0 %v390
    %454 = vmatpush1.msra.mxu0 %v389
    %455 = vmatprep.subr.mxu0 %v392
    %456 = vmatpush1.msra.mxu0 %v391
    %457 = vmatprep.subr.mxu0 %v394
    %458 = vmatpush1.msra.mxu0 %v393
    %459 = vmatprep.subr.mxu0 %v396
    %460 = vmatpush1.msra.mxu0 %v395
    %461 = vmatprep.subr.mxu0 %v398
    %462 = vmatpush1.msra.mxu0 %v397
    %463 = vmatprep.subr.mxu0 %v400
    %464 = vmatpush1.msra.mxu0 %v399
    %465 = vmatprep.subr.mxu0 %v402
    %466 = vmatpush1.msra.mxu0 %v401
    %467 = vmatprep.subr.mxu0 %v404
    %468 = vmatpush1.msra.mxu0 %v403
    %469 = vmatprep.subr.mxu0 %v406
    %470 = vmatpush1.msra.mxu0 %v405
    %471 = vmatprep.subr.mxu0 %v408
    %472 = vmatpush1.msra.mxu0 %v407
    %473 = vmatprep.subr.mxu0 %v410
    %474 = vmatpush1.msra.mxu0 %v409
    %475 = vmatprep.subr.mxu0 %v412
    %476 = vmatpush1.msra.mxu0 %v411
    %477 = vmatprep.subr.mxu0 %v414
    %478 = vmatpush1.msra.mxu0 %v413
    %479 = vmatprep.subr.mxu0 %v416
    %480 = vmatpush1.msra.mxu0 %v415
    %481 = vmatprep.subr.mxu0 %v418
    %482 = vmatpush1.msra.mxu0 %v417
    %483 = vmatprep.subr.mxu0 %v420
    %484 = vmatpush1.msra.mxu0 %v419
    %485 = vmatprep.subr.mxu0 %v422
    %486 = vmatpush1.msra.mxu0 %v421
    %487 = vmatprep.subr.mxu0 %v424
    %488 = vmatpush1.msra.mxu0 %v423
    %489 = vmatprep.subr.mxu0 %v426
    %490 = vmatpush1.msra.mxu0 %v425
    %491 = vmatprep.subr.mxu0 %v428
    %492 = vmatpush1.msra.mxu0 %v427
    %493 = vmatprep.subr.mxu0 %v430
    %494 = vmatpush1.msra.mxu0 %v429
    %495 = vmatprep.subr.mxu0 %v432
    %496 = vmatpush1.msra.mxu0 %v431
    %497 = vmatprep.subr.mxu0 %v434
    %498 = vmatpush1.msra.mxu0 %v433
    %499 = vmatprep.subr.mxu0 %v436
    %500 = vmatpush1.msra.mxu0 %v435
    %501 = vmatprep.subr.mxu0 %v438
    %502 = vmatpush1.msra.mxu0 %v437
    %503 = vmatprep.subr.mxu0 %v440
    %504 = vmatpush1.msra.mxu0 %v439
    %505 = vmatprep.mubr.f32.mxu0 %v186
    %506 = vmatmul.mubr.f32.gmra.mrb[0].mxu0 %v185
    %v507 = vpop.f32.mrb[0].mxu0
    %v508 = vadd.f32 0.0, %v507
    %v509 = vpop.f32.mrb[0].mxu0
    %v510 = vadd.f32 0.0, %v509
    %511 = vmatprep.mubr.f32.mxu0 %v188
    %512 = vmatmul.mubr.f32.gmra.mrb[0].mxu0 %v187
    %v513 = vpop.f32.mrb[0].mxu0
    %v514 = vadd.f32 0.0, %v513
    %v515 = vpop.f32.mrb[0].mxu0
    %v516 = vadd.f32 0.0, %v515
    %517 = vmatprep.mubr.f32.mxu0 %v190
    %518 = vmatmul.mubr.f32.gmra.mrb[0].mxu0 %v189
    %v519 = vpop.f32.mrb[0].mxu0
    %v520 = vadd.f32 0.0, %v519
    %v521 = vpop.f32.mrb[0].mxu0
    %v522 = vadd.f32 0.0, %v521
    %523 = vmatprep.mubr.f32.mxu0 %v192
    %524 = vmatmul.mubr.f32.gmra.mrb[0].mxu0 %v191
    %v525 = vpop.f32.mrb[0].mxu0
    %v526 = vadd.f32 0.0, %v525
    %v527 = vpop.f32.mrb[0].mxu0
    %v528 = vadd.f32 0.0, %v527
    %529 = vmatprep.mubr.f32.mxu0 %v194
    %530 = vmatmul.mubr.f32.gmra.mrb[0].mxu0 %v193
    %v531 = vpop.f32.mrb[0].mxu0
    %v532 = vadd.f32 0.0, %v531
    %v533 = vpop.f32.mrb[0].mxu0
    %v534 = vadd.f32 0.0, %v533
    %535 = vmatprep.mubr.f32.mxu0 %v196
    %536 = vmatmul.mubr.f32.gmra.mrb[0].mxu0 %v195
    %v537 = vpop.f32.mrb[0].mxu0
    %v538 = vadd.f32 0.0, %v537
    %v539 = vpop.f32.mrb[0].mxu0
    %v540 = vadd.f32 0.0, %v539
    %541 = vmatprep.mubr.f32.mxu0 %v198
    %542 = vmatmul.mubr.f32.gmra.mrb[0].mxu0 %v197
    %v543 = vpop.f32.mrb[0].mxu0
    %v544 = vadd.f32 0.0, %v543
    %v545 = vpop.f32.mrb[0].mxu0
    %v546 = vadd.f32 0.0, %v545
    %547 = vmatprep.mubr.f32.mxu0 %v200
    %548 = vmatmul.mubr.f32.gmra.mrb[0].mxu0 %v199
    %v549 = vpop.f32.mrb[0].mxu0
    %v550 = vadd.f32 0.0, %v549
    %v551 = vpop.f32.mrb[0].mxu0
    %v552 = vadd.f32 0.0, %v551
    %553 = vmatprep.mubr.f32.mxu0 %v202
    %554 = vmatmul.mubr.f32.gmra.mrb[0].mxu0 %v201
    %v555 = vpop.f32.mrb[0].mxu0
    %v556 = vadd.f32 0.0, %v555
    %v557 = vpop.f32.mrb[0].mxu0
    %v558 = vadd.f32 0.0, %v557
    %559 = vmatprep.mubr.f32.mxu0 %v204
    %560 = vmatmul.mubr.f32.gmra.mrb[0].mxu0 %v203
    %v561 = vpop.f32.mrb[0].mxu0
    %v562 = vadd.f32 0.0, %v561
    %v563 = vpop.f32.mrb[0].mxu0
    %v564 = vadd.f32 0.0, %v563
    %565 = vmatprep.mubr.f32.mxu0 %v206
    %566 = vmatmul.mubr.f32.gmra.mrb[0].mxu0 %v205
    %v567 = vpop.f32.mrb[0].mxu0
    %v568 = vadd.f32 0.0, %v567
    %v569 = vpop.f32.mrb[0].mxu0
    %v570 = vadd.f32 0.0, %v569
    %571 = vmatprep.mubr.f32.mxu0 %v208
    %572 = vmatmul.mubr.f32.gmra.mrb[0].mxu0 %v207
    %v573 = vpop.f32.mrb[0].mxu0
    %v574 = vadd.f32 0.0, %v573
    %v575 = vpop.f32.mrb[0].mxu0
    %v576 = vadd.f32 0.0, %v575
    %577 = vmatprep.mubr.f32.mxu0 %v210
    %578 = vmatmul.mubr.f32.gmra.mrb[0].mxu0 %v209
    %v579 = vpop.f32.mrb[0].mxu0
    %v580 = vadd.f32 0.0, %v579
    %v581 = vpop.f32.mrb[0].mxu0
    %v582 = vadd.f32 0.0, %v581
    %583 = vmatprep.mubr.f32.mxu0 %v212
    %584 = vmatmul.mubr.f32.gmra.mrb[0].mxu0 %v211
    %v585 = vpop.f32.mrb[0].mxu0
    %v586 = vadd.f32 0.0, %v585
    %v587 = vpop.f32.mrb[0].mxu0
    %v588 = vadd.f32 0.0, %v587
    %589 = vmatprep.mubr.f32.mxu0 %v214
    %590 = vmatmul.mubr.f32.gmra.mrb[0].mxu0 %v213
    %v591 = vpop.f32.mrb[0].mxu0
    %v592 = vadd.f32 0.0, %v591
    %v593 = vpop.f32.mrb[0].mxu0
    %v594 = vadd.f32 0.0, %v593
    %595 = vmatprep.mubr.f32.mxu0 %v216
    %596 = vmatmul.mubr.f32.gmra.mrb[0].mxu0 %v215
    %v597 = vpop.f32.mrb[0].mxu0
    %v598 = vadd.f32 0.0, %v597
    %v599 = vpop.f32.mrb[0].mxu0
    %v600 = vadd.f32 0.0, %v599
    %601 = vmatprep.mubr.f32.mxu0 %v218
    %602 = vmatmul.mubr.f32.gmra.mrb[0].mxu0 %v217
    %v603 = vpop.f32.mrb[0].mxu0
    %v604 = vadd.f32 0.0, %v603
    %v605 = vpop.f32.mrb[0].mxu0
    %v606 = vadd.f32 0.0, %v605
    %607 = vmatprep.mubr.f32.mxu0 %v220
    %608 = vmatmul.mubr.f32.gmra.mrb[0].mxu0 %v219
    %v609 = vpop.f32.mrb[0].mxu0
    %v610 = vadd.f32 0.0, %v609
    %v611 = vpop.f32.mrb[0].mxu0
    %v612 = vadd.f32 0.0, %v611
    %613 = vmatprep.mubr.f32.mxu0 %v222
    %614 = vmatmul.mubr.f32.gmra.mrb[0].mxu0 %v221
    %v615 = vpop.f32.mrb[0].mxu0
    %v616 = vadd.f32 0.0, %v615
    %v617 = vpop.f32.mrb[0].mxu0
    %v618 = vadd.f32 0.0, %v617
    %619 = vmatprep.mubr.f32.mxu0 %v224
    %620 = vmatmul.mubr.f32.gmra.mrb[0].mxu0 %v223
    %v621 = vpop.f32.mrb[0].mxu0
    %v622 = vadd.f32 0.0, %v621
    %v623 = vpop.f32.mrb[0].mxu0
    %v624 = vadd.f32 0.0, %v623
    %625 = vmatprep.mubr.f32.mxu0 %v226
    %626 = vmatmul.mubr.f32.gmra.mrb[0].mxu0 %v225
    %v627 = vpop.f32.mrb[0].mxu0
    %v628 = vadd.f32 0.0, %v627
    %v629 = vpop.f32.mrb[0].mxu0
    %v630 = vadd.f32 0.0, %v629
    %631 = vmatprep.mubr.f32.mxu0 %v228
    %632 = vmatmul.mubr.f32.gmra.mrb[0].mxu0 %v227
    %v633 = vpop.f32.mrb[0].mxu0
    %v634 = vadd.f32 0.0, %v633
    %v635 = vpop.f32.mrb[0].mxu0
    %v636 = vadd.f32 0.0, %v635
    %637 = vmatprep.mubr.f32.mxu0 %v230
    %638 = vmatmul.mubr.f32.gmra.mrb[0].mxu0 %v229
    %v639 = vpop.f32.mrb[0].mxu0
    %v640 = vadd.f32 0.0, %v639
    %v641 = vpop.f32.mrb[0].mxu0
    %v642 = vadd.f32 0.0, %v641
    %643 = vmatprep.mubr.f32.mxu0 %v232
    %644 = vmatmul.mubr.f32.gmra.mrb[0].mxu0 %v231
    %v645 = vpop.f32.mrb[0].mxu0
    %v646 = vadd.f32 0.0, %v645
    %v647 = vpop.f32.mrb[0].mxu0
    %v648 = vadd.f32 0.0, %v647
    %649 = vmatprep.mubr.f32.mxu0 %v234
    %650 = vmatmul.mubr.f32.gmra.mrb[0].mxu0 %v233
    %v651 = vpop.f32.mrb[0].mxu0
    %v652 = vadd.f32 0.0, %v651
    %v653 = vpop.f32.mrb[0].mxu0
    %v654 = vadd.f32 0.0, %v653
    %655 = vmatprep.mubr.f32.mxu0 %v236
    %656 = vmatmul.mubr.f32.gmra.mrb[0].mxu0 %v235
    %v657 = vpop.f32.mrb[0].mxu0
    %v658 = vadd.f32 0.0, %v657
    %v659 = vpop.f32.mrb[0].mxu0
    %v660 = vadd.f32 0.0, %v659
    %661 = vmatprep.mubr.f32.mxu0 %v238
    %662 = vmatmul.mubr.f32.gmra.mrb[0].mxu0 %v237
    %v663 = vpop.f32.mrb[0].mxu0
    %v664 = vadd.f32 0.0, %v663
    %v665 = vpop.f32.mrb[0].mxu0
    %v666 = vadd.f32 0.0, %v665
    %667 = vmatprep.mubr.f32.mxu0 %v240
    %668 = vmatmul.mubr.f32.gmra.mrb[0].mxu0 %v239
    %v669 = vpop.f32.mrb[0].mxu0
    %v670 = vadd.f32 0.0, %v669
    %v671 = vpop.f32.mrb[0].mxu0
    %v672 = vadd.f32 0.0, %v671
    %673 = vmatprep.mubr.f32.mxu0 %v242
    %674 = vmatmul.mubr.f32.gmra.mrb[0].mxu0 %v241
    %v675 = vpop.f32.mrb[0].mxu0
    %v676 = vadd.f32 0.0, %v675
    %v677 = vpop.f32.mrb[0].mxu0
    %v678 = vadd.f32 0.0, %v677
    %679 = vmatprep.mubr.f32.mxu0 %v244
    %680 = vmatmul.mubr.f32.gmra.mrb[0].mxu0 %v243
    %v681 = vpop.f32.mrb[0].mxu0
    %v682 = vadd.f32 0.0, %v681
    %v683 = vpop.f32.mrb[0].mxu0
    %v684 = vadd.f32 0.0, %v683
    %685 = vmatprep.mubr.f32.mxu0 %v246
    %686 = vmatmul.mubr.f32.gmra.mrb[0].mxu0 %v245
    %v687 = vpop.f32.mrb[0].mxu0
    %v688 = vadd.f32 0.0, %v687
    %v689 = vpop.f32.mrb[0].mxu0
    %v690 = vadd.f32 0.0, %v689
    %691 = vmatprep.mubr.f32.mxu0 %v248
    %692 = vmatmul.mubr.f32.gmra.mrb[0].mxu0 %v247
    %v693 = vpop.f32.mrb[0].mxu0
    %v694 = vadd.f32 0.0, %v693
    %v695 = vpop.f32.mrb[0].mxu0
    %v696 = vadd.f32 0.0, %v695
    %697 = vmatprep.mubr.f32.mxu0 %v250
    %698 = vmatmul.mubr.f32.gmra.mrb[0].mxu0 %v249
    %v699 = vpop.f32.mrb[0].mxu0
    %v700 = vadd.f32 0.0, %v699
    %v701 = vpop.f32.mrb[0].mxu0
    %v702 = vadd.f32 0.0, %v701
    %703 = vmatprep.mubr.f32.mxu0 %v252
    %704 = vmatmul.mubr.f32.gmra.mrb[0].mxu0 %v251
    %v705 = vpop.f32.mrb[0].mxu0
    %v706 = vadd.f32 0.0, %v705
    %v707 = vpop.f32.mrb[0].mxu0
    %v708 = vadd.f32 0.0, %v707
    %709 = vmatprep.mubr.f32.mxu0 %v254
    %710 = vmatmul.mubr.f32.gmra.mrb[0].mxu0 %v253
    %v711 = vpop.f32.mrb[0].mxu0
    %v712 = vadd.f32 0.0, %v711
    %v713 = vpop.f32.mrb[0].mxu0
    %v714 = vadd.f32 0.0, %v713
    %715 = vmatprep.mubr.f32.mxu0 %v256
    %716 = vmatmul.mubr.f32.gmra.mrb[0].mxu0 %v255
    %v717 = vpop.f32.mrb[0].mxu0
    %v718 = vadd.f32 0.0, %v717
    %v719 = vpop.f32.mrb[0].mxu0
    %v720 = vadd.f32 0.0, %v719
    %721 = vmatprep.mubr.f32.mxu0 %v258
    %722 = vmatmul.mubr.f32.gmra.mrb[0].mxu0 %v257
    %v723 = vpop.f32.mrb[0].mxu0
    %v724 = vadd.f32 0.0, %v723
    %v725 = vpop.f32.mrb[0].mxu0
    %v726 = vadd.f32 0.0, %v725
    %727 = vmatprep.mubr.f32.mxu0 %v260
    %728 = vmatmul.mubr.f32.gmra.mrb[0].mxu0 %v259
    %v729 = vpop.f32.mrb[0].mxu0
    %v730 = vadd.f32 0.0, %v729
    %v731 = vpop.f32.mrb[0].mxu0
    %v732 = vadd.f32 0.0, %v731
    %733 = vmatprep.mubr.f32.mxu0 %v262
    %734 = vmatmul.mubr.f32.gmra.mrb[0].mxu0 %v261
    %v735 = vpop.f32.mrb[0].mxu0
    %v736 = vadd.f32 0.0, %v735
    %v737 = vpop.f32.mrb[0].mxu0
    %v738 = vadd.f32 0.0, %v737
    %739 = vmatprep.mubr.f32.mxu0 %v264
    %740 = vmatmul.mubr.f32.gmra.mrb[0].mxu0 %v263
    %v741 = vpop.f32.mrb[0].mxu0
    %v742 = vadd.f32 0.0, %v741
    %v743 = vpop.f32.mrb[0].mxu0
    %v744 = vadd.f32 0.0, %v743
    %745 = vmatprep.mubr.f32.mxu0 %v266
    %746 = vmatmul.mubr.f32.gmra.mrb[0].mxu0 %v265
    %v747 = vpop.f32.mrb[0].mxu0
    %v748 = vadd.f32 0.0, %v747
    %v749 = vpop.f32.mrb[0].mxu0
    %v750 = vadd.f32 0.0, %v749
    %751 = vmatprep.mubr.f32.mxu0 %v268
    %752 = vmatmul.mubr.f32.gmra.mrb[0].mxu0 %v267
    %v753 = vpop.f32.mrb[0].mxu0
    %v754 = vadd.f32 0.0, %v753
    %v755 = vpop.f32.mrb[0].mxu0
    %v756 = vadd.f32 0.0, %v755
    %757 = vmatprep.mubr.f32.mxu0 %v270
    %758 = vmatmul.mubr.f32.gmra.mrb[0].mxu0 %v269
    %v759 = vpop.f32.mrb[0].mxu0
    %v760 = vadd.f32 0.0, %v759
    %v761 = vpop.f32.mrb[0].mxu0
    %v762 = vadd.f32 0.0, %v761
    %763 = vmatprep.mubr.f32.mxu0 %v272
    %764 = vmatmul.mubr.f32.gmra.mrb[0].mxu0 %v271
    %v765 = vpop.f32.mrb[0].mxu0
    %v766 = vadd.f32 0.0, %v765
    %v767 = vpop.f32.mrb[0].mxu0
    %v768 = vadd.f32 0.0, %v767
    %769 = vmatprep.mubr.f32.mxu0 %v274
    %770 = vmatmul.mubr.f32.gmra.mrb[0].mxu0 %v273
    %v771 = vpop.f32.mrb[0].mxu0
    %v772 = vadd.f32 0.0, %v771
    %v773 = vpop.f32.mrb[0].mxu0
    %v774 = vadd.f32 0.0, %v773
    %775 = vmatprep.mubr.f32.mxu0 %v276
    %776 = vmatmul.mubr.f32.gmra.mrb[0].mxu0 %v275
    %v777 = vpop.f32.mrb[0].mxu0
    %v778 = vadd.f32 0.0, %v777
    %v779 = vpop.f32.mrb[0].mxu0
    %v780 = vadd.f32 0.0, %v779
    %781 = vmatprep.mubr.f32.mxu0 %v278
    %782 = vmatmul.mubr.f32.gmra.mrb[0].mxu0 %v277
    %v783 = vpop.f32.mrb[0].mxu0
    %v784 = vadd.f32 0.0, %v783
    %v785 = vpop.f32.mrb[0].mxu0
    %v786 = vadd.f32 0.0, %v785
    %787 = vmatprep.mubr.f32.mxu0 %v280
    %788 = vmatmul.mubr.f32.gmra.mrb[0].mxu0 %v279
    %v789 = vpop.f32.mrb[0].mxu0
    %v790 = vadd.f32 0.0, %v789
    %v791 = vpop.f32.mrb[0].mxu0
    %v792 = vadd.f32 0.0, %v791
    %793 = vmatprep.mubr.f32.mxu0 %v282
    %794 = vmatmul.mubr.f32.gmra.mrb[0].mxu0 %v281
    %v795 = vpop.f32.mrb[0].mxu0
    %v796 = vadd.f32 0.0, %v795
    %v797 = vpop.f32.mrb[0].mxu0
    %v798 = vadd.f32 0.0, %v797
    %799 = vmatprep.mubr.f32.mxu0 %v284
    %800 = vmatmul.mubr.f32.gmra.mrb[0].mxu0 %v283
    %v801 = vpop.f32.mrb[0].mxu0
    %v802 = vadd.f32 0.0, %v801
    %v803 = vpop.f32.mrb[0].mxu0
    %v804 = vadd.f32 0.0, %v803
    %805 = vmatprep.mubr.f32.mxu0 %v286
    %806 = vmatmul.mubr.f32.gmra.mrb[0].mxu0 %v285
    %v807 = vpop.f32.mrb[0].mxu0
    %v808 = vadd.f32 0.0, %v807
    %v809 = vpop.f32.mrb[0].mxu0
    %v810 = vadd.f32 0.0, %v809
    %811 = vmatprep.mubr.f32.mxu0 %v288
    %812 = vmatmul.mubr.f32.gmra.mrb[0].mxu0 %v287
    %v813 = vpop.f32.mrb[0].mxu0
    %v814 = vadd.f32 0.0, %v813
    %v815 = vpop.f32.mrb[0].mxu0
    %v816 = vadd.f32 0.0, %v815
    %817 = vmatprep.mubr.f32.mxu0 %v290
    %818 = vmatmul.mubr.f32.gmra.mrb[0].mxu0 %v289
    %v819 = vpop.f32.mrb[0].mxu0
    %v820 = vadd.f32 0.0, %v819
    %v821 = vpop.f32.mrb[0].mxu0
    %v822 = vadd.f32 0.0, %v821
    %823 = vmatprep.mubr.f32.mxu0 %v292
    %824 = vmatmul.mubr.f32.gmra.mrb[0].mxu0 %v291
    %v825 = vpop.f32.mrb[0].mxu0
    %v826 = vadd.f32 0.0, %v825
    %v827 = vpop.f32.mrb[0].mxu0
    %v828 = vadd.f32 0.0, %v827
    %829 = vmatprep.mubr.f32.mxu0 %v294
    %830 = vmatmul.mubr.f32.gmra.mrb[0].mxu0 %v293
    %v831 = vpop.f32.mrb[0].mxu0
    %v832 = vadd.f32 0.0, %v831
    %v833 = vpop.f32.mrb[0].mxu0
    %v834 = vadd.f32 0.0, %v833
    %835 = vmatprep.mubr.f32.mxu0 %v296
    %836 = vmatmul.mubr.f32.gmra.mrb[0].mxu0 %v295
    %v837 = vpop.f32.mrb[0].mxu0
    %v838 = vadd.f32 0.0, %v837
    %v839 = vpop.f32.mrb[0].mxu0
    %v840 = vadd.f32 0.0, %v839
    %841 = vmatprep.mubr.f32.mxu0 %v298
    %842 = vmatmul.mubr.f32.gmra.mrb[0].mxu0 %v297
    %v843 = vpop.f32.mrb[0].mxu0
    %v844 = vadd.f32 0.0, %v843
    %v845 = vpop.f32.mrb[0].mxu0
    %v846 = vadd.f32 0.0, %v845
    %847 = vmatprep.mubr.f32.mxu0 %v300
    %848 = vmatmul.mubr.f32.gmra.mrb[0].mxu0 %v299
    %v849 = vpop.f32.mrb[0].mxu0
    %v850 = vadd.f32 0.0, %v849
    %v851 = vpop.f32.mrb[0].mxu0
    %v852 = vadd.f32 0.0, %v851
    %853 = vmatprep.mubr.f32.mxu0 %v302
    %854 = vmatmul.mubr.f32.gmra.mrb[0].mxu0 %v301
    %v855 = vpop.f32.mrb[0].mxu0
    %v856 = vadd.f32 0.0, %v855
    %v857 = vpop.f32.mrb[0].mxu0
    %v858 = vadd.f32 0.0, %v857
    %859 = vmatprep.mubr.f32.mxu0 %v304
    %860 = vmatmul.mubr.f32.gmra.mrb[0].mxu0 %v303
    %v861 = vpop.f32.mrb[0].mxu0
    %v862 = vadd.f32 0.0, %v861
    %v863 = vpop.f32.mrb[0].mxu0
    %v864 = vadd.f32 0.0, %v863
    %865 = vmatprep.mubr.f32.mxu0 %v306
    %866 = vmatmul.mubr.f32.gmra.mrb[0].mxu0 %v305
    %v867 = vpop.f32.mrb[0].mxu0
    %v868 = vadd.f32 0.0, %v867
    %v869 = vpop.f32.mrb[0].mxu0
    %v870 = vadd.f32 0.0, %v869
    %871 = vmatprep.mubr.f32.mxu0 %v308
    %872 = vmatmul.mubr.f32.gmra.mrb[0].mxu0 %v307
    %v873 = vpop.f32.mrb[0].mxu0
    %v874 = vadd.f32 0.0, %v873
    %v875 = vpop.f32.mrb[0].mxu0
    %v876 = vadd.f32 0.0, %v875
    %877 = vmatprep.mubr.f32.mxu0 %v310
    %878 = vmatmul.mubr.f32.gmra.mrb[0].mxu0 %v309
    %v879 = vpop.f32.mrb[0].mxu0
    %v880 = vadd.f32 0.0, %v879
    %v881 = vpop.f32.mrb[0].mxu0
    %v882 = vadd.f32 0.0, %v881
    %883 = vmatprep.mubr.f32.mxu0 %v312
    %884 = vmatmul.mubr.f32.gmra.mrb[0].mxu0 %v311
    %v885 = vpop.f32.mrb[0].mxu0
    %v886 = vadd.f32 0.0, %v885
    %v887 = vpop.f32.mrb[0].mxu0
    %v888 = vadd.f32 0.0, %v887
    %889 = vdwg.mxu0
    %890 = vmatprep.subr.mxu0 %v314
    %891 = vmatpush1.msra.mxu0 %v313
    %892 = vmatprep.subr.mxu0 %v316
    %893 = vmatpush1.msra.mxu0 %v315
    %894 = vmatprep.subr.mxu0 %v318
    %895 = vmatpush1.msra.mxu0 %v317
    %896 = vmatprep.subr.mxu0 %v320
    %897 = vmatpush1.msra.mxu0 %v319
    %898 = vmatprep.subr.mxu0 %v322
    %899 = vmatpush1.msra.mxu0 %v321
    %900 = vmatprep.subr.mxu0 %v324
    %901 = vmatpush1.msra.mxu0 %v323
    %902 = vmatprep.subr.mxu0 %v326
    %903 = vmatpush1.msra.mxu0 %v325
    %904 = vmatprep.subr.mxu0 %v328
    %905 = vmatpush1.msra.mxu0 %v327
    %906 = vmatprep.subr.mxu0 %v330
    %907 = vmatpush1.msra.mxu0 %v329
    %908 = vmatprep.subr.mxu0 %v332
    %909 = vmatpush1.msra.mxu0 %v331
    %910 = vmatprep.subr.mxu0 %v334
    %911 = vmatpush1.msra.mxu0 %v333
    %912 = vmatprep.subr.mxu0 %v336
    %913 = vmatpush1.msra.mxu0 %v335
    %914 = vmatprep.subr.mxu0 %v338
    %915 = vmatpush1.msra.mxu0 %v337
    %916 = vmatprep.subr.mxu0 %v340
    %917 = vmatpush1.msra.mxu0 %v339
    %918 = vmatprep.subr.mxu0 %v342
    %919 = vmatpush1.msra.mxu0 %v341
    %920 = vmatprep.subr.mxu0 %v344
    %921 = vmatpush1.msra.mxu0 %v343
    %922 = vmatprep.subr.mxu0 %v346
    %923 = vmatpush1.msra.mxu0 %v345
    %924 = vmatprep.subr.mxu0 %v348
    %925 = vmatpush1.msra.mxu0 %v347
    %926 = vmatprep.subr.mxu0 %v350
    %927 = vmatpush1.msra.mxu0 %v349
    %928 = vmatprep.subr.mxu0 %v352
    %929 = vmatpush1.msra.mxu0 %v351
    %930 = vmatprep.subr.mxu0 %v354
    %931 = vmatpush1.msra.mxu0 %v353
    %932 = vmatprep.subr.mxu0 %v356
    %933 = vmatpush1.msra.mxu0 %v355
    %934 = vmatprep.subr.mxu0 %v358
    %935 = vmatpush1.msra.mxu0 %v357
    %936 = vmatprep.subr.mxu0 %v360
    %937 = vmatpush1.msra.mxu0 %v359
    %938 = vmatprep.subr.mxu0 %v362
    %939 = vmatpush1.msra.mxu0 %v361
    %940 = vmatprep.subr.mxu0 %v364
    %941 = vmatpush1.msra.mxu0 %v363
    %942 = vmatprep.subr.mxu0 %v366
    %943 = vmatpush1.msra.mxu0 %v365
    %944 = vmatprep.subr.mxu0 %v368
    %945 = vmatpush1.msra.mxu0 %v367
    %946 = vmatprep.subr.mxu0 %v370
    %947 = vmatpush1.msra.mxu0 %v369
    %948 = vmatprep.subr.mxu0 %v372
    %949 = vmatpush1.msra.mxu0 %v371
    %950 = vmatprep.subr.mxu0 %v374
    %951 = vmatpush1.msra.mxu0 %v373
    %952 = vmatprep.subr.mxu0 %v376
    %953 = vmatpush1.msra.mxu0 %v375
    %954 = vmatprep.mubr.f32.mxu0 %v57
    %955 = vmatmul.mubr.f32.gmra.mrb[0].mxu0 %v56
    %v956 = vpop.f32.mrb[0].mxu0
    %v957 = vadd.f32 %v508, %v956
    %v958 = vpop.f32.mrb[0].mxu0
    %v959 = vadd.f32 %v510, %v958
    %960 = vmatprep.mubr.f32.mxu0 %v59
    %961 = vmatmul.mubr.f32.gmra.mrb[0].mxu0 %v58
    %v962 = vpop.f32.mrb[0].mxu0
    %v963 = vadd.f32 %v514, %v962
    %v964 = vpop.f32.mrb[0].mxu0
    %v965 = vadd.f32 %v516, %v964
    %966 = vmatprep.mubr.f32.mxu0 %v61
    %967 = vmatmul.mubr.f32.gmra.mrb[0].mxu0 %v60
    %v968 = vpop.f32.mrb[0].mxu0
    %v969 = vadd.f32 %v520, %v968
    %v970 = vpop.f32.mrb[0].mxu0
    %v971 = vadd.f32 %v522, %v970
    %972 = vmatprep.mubr.f32.mxu0 %v63
    %973 = vmatmul.mubr.f32.gmra.mrb[0].mxu0 %v62
    %v974 = vpop.f32.mrb[0].mxu0
    %v975 = vadd.f32 %v526, %v974
    %v976 = vpop.f32.mrb[0].mxu0
    %v977 = vadd.f32 %v528, %v976
    %978 = vmatprep.mubr.f32.mxu0 %v65
    %979 = vmatmul.mubr.f32.gmra.mrb[0].mxu0 %v64
    %v980 = vpop.f32.mrb[0].mxu0
    %v981 = vadd.f32 %v532, %v980
    %v982 = vpop.f32.mrb[0].mxu0
    %v983 = vadd.f32 %v534, %v982
    %984 = vmatprep.mubr.f32.mxu0 %v67
    %985 = vmatmul.mubr.f32.gmra.mrb[0].mxu0 %v66
    %v986 = vpop.f32.mrb[0].mxu0
    %v987 = vadd.f32 %v538, %v986
    %v988 = vpop.f32.mrb[0].mxu0
    %v989 = vadd.f32 %v540, %v988
    %990 = vmatprep.mubr.f32.mxu0 %v69
    %991 = vmatmul.mubr.f32.gmra.mrb[0].mxu0 %v68
    %v992 = vpop.f32.mrb[0].mxu0
    %v993 = vadd.f32 %v544, %v992
    %v994 = vpop.f32.mrb[0].mxu0
    %v995 = vadd.f32 %v546, %v994
    %996 = vmatprep.mubr.f32.mxu0 %v71
    %997 = vmatmul.mubr.f32.gmra.mrb[0].mxu0 %v70
    %v998 = vpop.f32.mrb[0].mxu0
    %v999 = vadd.f32 %v550, %v998
    %v1000 = vpop.f32.mrb[0].mxu0
    %v1001 = vadd.f32 %v552, %v1000
    %1002 = vmatprep.mubr.f32.mxu0 %v73
    %1003 = vmatmul.mubr.f32.gmra.mrb[0].mxu0 %v72
    %v1004 = vpop.f32.mrb[0].mxu0
    %v1005 = vadd.f32 %v556, %v1004
    %v1006 = vpop.f32.mrb[0].mxu0
    %v1007 = vadd.f32 %v558, %v1006
    %1008 = vmatprep.mubr.f32.mxu0 %v75
    %1009 = vmatmul.mubr.f32.gmra.mrb[0].mxu0 %v74
    %v1010 = vpop.f32.mrb[0].mxu0
    %v1011 = vadd.f32 %v562, %v1010
    %v1012 = vpop.f32.mrb[0].mxu0
    %v1013 = vadd.f32 %v564, %v1012
    %1014 = vmatprep.mubr.f32.mxu0 %v77
    %1015 = vmatmul.mubr.f32.gmra.mrb[0].mxu0 %v76
    %v1016 = vpop.f32.mrb[0].mxu0
    %v1017 = vadd.f32 %v568, %v1016
    %v1018 = vpop.f32.mrb[0].mxu0
    %v1019 = vadd.f32 %v570, %v1018
    %1020 = vmatprep.mubr.f32.mxu0 %v79
    %1021 = vmatmul.mubr.f32.gmra.mrb[0].mxu0 %v78
    %v1022 = vpop.f32.mrb[0].mxu0
    %v1023 = vadd.f32 %v574, %v1022
    %v1024 = vpop.f32.mrb[0].mxu0
    %v1025 = vadd.f32 %v576, %v1024
    %1026 = vmatprep.mubr.f32.mxu0 %v81
    %1027 = vmatmul.mubr.f32.gmra.mrb[0].mxu0 %v80
    %v1028 = vpop.f32.mrb[0].mxu0
    %v1029 = vadd.f32 %v580, %v1028
    %v1030 = vpop.f32.mrb[0].mxu0
    %v1031 = vadd.f32 %v582, %v1030
    %1032 = vmatprep.mubr.f32.mxu0 %v83
    %1033 = vmatmul.mubr.f32.gmra.mrb[0].mxu0 %v82
    %v1034 = vpop.f32.mrb[0].mxu0
    %v1035 = vadd.f32 %v586, %v1034
    %v1036 = vpop.f32.mrb[0].mxu0
    %v1037 = vadd.f32 %v588, %v1036
    %1038 = vmatprep.mubr.f32.mxu0 %v85
    %1039 = vmatmul.mubr.f32.gmra.mrb[0].mxu0 %v84
    %v1040 = vpop.f32.mrb[0].mxu0
    %v1041 = vadd.f32 %v592, %v1040
    %v1042 = vpop.f32.mrb[0].mxu0
    %v1043 = vadd.f32 %v594, %v1042
    %1044 = vmatprep.mubr.f32.mxu0 %v87
    %1045 = vmatmul.mubr.f32.gmra.mrb[0].mxu0 %v86
    %v1046 = vpop.f32.mrb[0].mxu0
    %v1047 = vadd.f32 %v598, %v1046
    %v1048 = vpop.f32.mrb[0].mxu0
    %v1049 = vadd.f32 %v600, %v1048
    %1050 = vmatprep.mubr.f32.mxu0 %v89
    %1051 = vmatmul.mubr.f32.gmra.mrb[0].mxu0 %v88
    %v1052 = vpop.f32.mrb[0].mxu0
    %v1053 = vadd.f32 %v604, %v1052
    %v1054 = vpop.f32.mrb[0].mxu0
    %v1055 = vadd.f32 %v606, %v1054
    %1056 = vmatprep.mubr.f32.mxu0 %v91
    %1057 = vmatmul.mubr.f32.gmra.mrb[0].mxu0 %v90
    %v1058 = vpop.f32.mrb[0].mxu0
    %v1059 = vadd.f32 %v610, %v1058
    %v1060 = vpop.f32.mrb[0].mxu0
    %v1061 = vadd.f32 %v612, %v1060
    %1062 = vmatprep.mubr.f32.mxu0 %v93
    %1063 = vmatmul.mubr.f32.gmra.mrb[0].mxu0 %v92
    %v1064 = vpop.f32.mrb[0].mxu0
    %v1065 = vadd.f32 %v616, %v1064
    %v1066 = vpop.f32.mrb[0].mxu0
    %v1067 = vadd.f32 %v618, %v1066
    %1068 = vmatprep.mubr.f32.mxu0 %v95
    %1069 = vmatmul.mubr.f32.gmra.mrb[0].mxu0 %v94
    %v1070 = vpop.f32.mrb[0].mxu0
    %v1071 = vadd.f32 %v622, %v1070
    %v1072 = vpop.f32.mrb[0].mxu0
    %v1073 = vadd.f32 %v624, %v1072
    %1074 = vmatprep.mubr.f32.mxu0 %v97
    %1075 = vmatmul.mubr.f32.gmra.mrb[0].mxu0 %v96
    %v1076 = vpop.f32.mrb[0].mxu0
    %v1077 = vadd.f32 %v628, %v1076
    %v1078 = vpop.f32.mrb[0].mxu0
    %v1079 = vadd.f32 %v630, %v1078
    %1080 = vmatprep.mubr.f32.mxu0 %v99
    %1081 = vmatmul.mubr.f32.gmra.mrb[0].mxu0 %v98
    %v1082 = vpop.f32.mrb[0].mxu0
    %v1083 = vadd.f32 %v634, %v1082
    %v1084 = vpop.f32.mrb[0].mxu0
    %v1085 = vadd.f32 %v636, %v1084
    %1086 = vmatprep.mubr.f32.mxu0 %v101
    %1087 = vmatmul.mubr.f32.gmra.mrb[0].mxu0 %v100
    %v1088 = vpop.f32.mrb[0].mxu0
    %v1089 = vadd.f32 %v640, %v1088
    %v1090 = vpop.f32.mrb[0].mxu0
    %v1091 = vadd.f32 %v642, %v1090
    %1092 = vmatprep.mubr.f32.mxu0 %v103
    %1093 = vmatmul.mubr.f32.gmra.mrb[0].mxu0 %v102
    %v1094 = vpop.f32.mrb[0].mxu0
    %v1095 = vadd.f32 %v646, %v1094
    %v1096 = vpop.f32.mrb[0].mxu0
    %v1097 = vadd.f32 %v648, %v1096
    %1098 = vmatprep.mubr.f32.mxu0 %v105
    %1099 = vmatmul.mubr.f32.gmra.mrb[0].mxu0 %v104
    %v1100 = vpop.f32.mrb[0].mxu0
    %v1101 = vadd.f32 %v652, %v1100
    %v1102 = vpop.f32.mrb[0].mxu0
    %v1103 = vadd.f32 %v654, %v1102
    %1104 = vmatprep.mubr.f32.mxu0 %v107
    %1105 = vmatmul.mubr.f32.gmra.mrb[0].mxu0 %v106
    %v1106 = vpop.f32.mrb[0].mxu0
    %v1107 = vadd.f32 %v658, %v1106
    %v1108 = vpop.f32.mrb[0].mxu0
    %v1109 = vadd.f32 %v660, %v1108
    %1110 = vmatprep.mubr.f32.mxu0 %v109
    %1111 = vmatmul.mubr.f32.gmra.mrb[0].mxu0 %v108
    %v1112 = vpop.f32.mrb[0].mxu0
    %v1113 = vadd.f32 %v664, %v1112
    %v1114 = vpop.f32.mrb[0].mxu0
    %v1115 = vadd.f32 %v666, %v1114
    %1116 = vmatprep.mubr.f32.mxu0 %v111
    %1117 = vmatmul.mubr.f32.gmra.mrb[0].mxu0 %v110
    %v1118 = vpop.f32.mrb[0].mxu0
    %v1119 = vadd.f32 %v670, %v1118
    %v1120 = vpop.f32.mrb[0].mxu0
    %v1121 = vadd.f32 %v672, %v1120
    %1122 = vmatprep.mubr.f32.mxu0 %v113
    %1123 = vmatmul.mubr.f32.gmra.mrb[0].mxu0 %v112
    %v1124 = vpop.f32.mrb[0].mxu0
    %v1125 = vadd.f32 %v676, %v1124
    %v1126 = vpop.f32.mrb[0].mxu0
    %v1127 = vadd.f32 %v678, %v1126
    %1128 = vmatprep.mubr.f32.mxu0 %v115
    %1129 = vmatmul.mubr.f32.gmra.mrb[0].mxu0 %v114
    %v1130 = vpop.f32.mrb[0].mxu0
    %v1131 = vadd.f32 %v682, %v1130
    %v1132 = vpop.f32.mrb[0].mxu0
    %v1133 = vadd.f32 %v684, %v1132
    %1134 = vmatprep.mubr.f32.mxu0 %v117
    %1135 = vmatmul.mubr.f32.gmra.mrb[0].mxu0 %v116
    %v1136 = vpop.f32.mrb[0].mxu0
    %v1137 = vadd.f32 %v688, %v1136
    %v1138 = vpop.f32.mrb[0].mxu0
    %v1139 = vadd.f32 %v690, %v1138
    %1140 = vmatprep.mubr.f32.mxu0 %v119
    %1141 = vmatmul.mubr.f32.gmra.mrb[0].mxu0 %v118
    %v1142 = vpop.f32.mrb[0].mxu0
    %v1143 = vadd.f32 %v694, %v1142
    %v1144 = vpop.f32.mrb[0].mxu0
    %v1145 = vadd.f32 %v696, %v1144
    %1146 = vmatprep.mubr.f32.mxu0 %v121
    %1147 = vmatmul.mubr.f32.gmra.mrb[0].mxu0 %v120
    %v1148 = vpop.f32.mrb[0].mxu0
    %v1149 = vadd.f32 %v700, %v1148
    %v1150 = vpop.f32.mrb[0].mxu0
    %v1151 = vadd.f32 %v702, %v1150
    %1152 = vmatprep.mubr.f32.mxu0 %v123
    %1153 = vmatmul.mubr.f32.gmra.mrb[0].mxu0 %v122
    %v1154 = vpop.f32.mrb[0].mxu0
    %v1155 = vadd.f32 %v706, %v1154
    %v1156 = vpop.f32.mrb[0].mxu0
    %v1157 = vadd.f32 %v708, %v1156
    %1158 = vmatprep.mubr.f32.mxu0 %v125
    %1159 = vmatmul.mubr.f32.gmra.mrb[0].mxu0 %v124
    %v1160 = vpop.f32.mrb[0].mxu0
    %v1161 = vadd.f32 %v712, %v1160
    %v1162 = vpop.f32.mrb[0].mxu0
    %v1163 = vadd.f32 %v714, %v1162
    %1164 = vmatprep.mubr.f32.mxu0 %v127
    %1165 = vmatmul.mubr.f32.gmra.mrb[0].mxu0 %v126
    %v1166 = vpop.f32.mrb[0].mxu0
    %v1167 = vadd.f32 %v718, %v1166
    %v1168 = vpop.f32.mrb[0].mxu0
    %v1169 = vadd.f32 %v720, %v1168
    %1170 = vmatprep.mubr.f32.mxu0 %v129
    %1171 = vmatmul.mubr.f32.gmra.mrb[0].mxu0 %v128
    %v1172 = vpop.f32.mrb[0].mxu0
    %v1173 = vadd.f32 %v724, %v1172
    %v1174 = vpop.f32.mrb[0].mxu0
    %v1175 = vadd.f32 %v726, %v1174
    %1176 = vmatprep.mubr.f32.mxu0 %v131
    %1177 = vmatmul.mubr.f32.gmra.mrb[0].mxu0 %v130
    %v1178 = vpop.f32.mrb[0].mxu0
    %v1179 = vadd.f32 %v730, %v1178
    %v1180 = vpop.f32.mrb[0].mxu0
    %v1181 = vadd.f32 %v732, %v1180
    %1182 = vmatprep.mubr.f32.mxu0 %v133
    %1183 = vmatmul.mubr.f32.gmra.mrb[0].mxu0 %v132
    %v1184 = vpop.f32.mrb[0].mxu0
    %v1185 = vadd.f32 %v736, %v1184
    %v1186 = vpop.f32.mrb[0].mxu0
    %v1187 = vadd.f32 %v738, %v1186
    %1188 = vmatprep.mubr.f32.mxu0 %v135
    %1189 = vmatmul.mubr.f32.gmra.mrb[0].mxu0 %v134
    %v1190 = vpop.f32.mrb[0].mxu0
    %v1191 = vadd.f32 %v742, %v1190
    %v1192 = vpop.f32.mrb[0].mxu0
    %v1193 = vadd.f32 %v744, %v1192
    %1194 = vmatprep.mubr.f32.mxu0 %v137
    %1195 = vmatmul.mubr.f32.gmra.mrb[0].mxu0 %v136
    %v1196 = vpop.f32.mrb[0].mxu0
    %v1197 = vadd.f32 %v748, %v1196
    %v1198 = vpop.f32.mrb[0].mxu0
    %v1199 = vadd.f32 %v750, %v1198
    %1200 = vmatprep.mubr.f32.mxu0 %v139
    %1201 = vmatmul.mubr.f32.gmra.mrb[0].mxu0 %v138
    %v1202 = vpop.f32.mrb[0].mxu0
    %v1203 = vadd.f32 %v754, %v1202
    %v1204 = vpop.f32.mrb[0].mxu0
    %v1205 = vadd.f32 %v756, %v1204
    %1206 = vmatprep.mubr.f32.mxu0 %v141
    %1207 = vmatmul.mubr.f32.gmra.mrb[0].mxu0 %v140
    %v1208 = vpop.f32.mrb[0].mxu0
    %v1209 = vadd.f32 %v760, %v1208
    %v1210 = vpop.f32.mrb[0].mxu0
    %v1211 = vadd.f32 %v762, %v1210
    %1212 = vmatprep.mubr.f32.mxu0 %v143
    %1213 = vmatmul.mubr.f32.gmra.mrb[0].mxu0 %v142
    %v1214 = vpop.f32.mrb[0].mxu0
    %v1215 = vadd.f32 %v766, %v1214
    %v1216 = vpop.f32.mrb[0].mxu0
    %v1217 = vadd.f32 %v768, %v1216
    %1218 = vmatprep.mubr.f32.mxu0 %v145
    %1219 = vmatmul.mubr.f32.gmra.mrb[0].mxu0 %v144
    %v1220 = vpop.f32.mrb[0].mxu0
    %v1221 = vadd.f32 %v772, %v1220
    %v1222 = vpop.f32.mrb[0].mxu0
    %v1223 = vadd.f32 %v774, %v1222
    %1224 = vmatprep.mubr.f32.mxu0 %v147
    %1225 = vmatmul.mubr.f32.gmra.mrb[0].mxu0 %v146
    %v1226 = vpop.f32.mrb[0].mxu0
    %v1227 = vadd.f32 %v778, %v1226
    %v1228 = vpop.f32.mrb[0].mxu0
    %v1229 = vadd.f32 %v780, %v1228
    %1230 = vmatprep.mubr.f32.mxu0 %v149
    %1231 = vmatmul.mubr.f32.gmra.mrb[0].mxu0 %v148
    %v1232 = vpop.f32.mrb[0].mxu0
    %v1233 = vadd.f32 %v784, %v1232
    %v1234 = vpop.f32.mrb[0].mxu0
    %v1235 = vadd.f32 %v786, %v1234
    %1236 = vmatprep.mubr.f32.mxu0 %v151
    %1237 = vmatmul.mubr.f32.gmra.mrb[0].mxu0 %v150
    %v1238 = vpop.f32.mrb[0].mxu0
    %v1239 = vadd.f32 %v790, %v1238
    %v1240 = vpop.f32.mrb[0].mxu0
    %v1241 = vadd.f32 %v792, %v1240
    %1242 = vmatprep.mubr.f32.mxu0 %v153
    %1243 = vmatmul.mubr.f32.gmra.mrb[0].mxu0 %v152
    %v1244 = vpop.f32.mrb[0].mxu0
    %v1245 = vadd.f32 %v796, %v1244
    %v1246 = vpop.f32.mrb[0].mxu0
    %v1247 = vadd.f32 %v798, %v1246
    %1248 = vmatprep.mubr.f32.mxu0 %v155
    %1249 = vmatmul.mubr.f32.gmra.mrb[0].mxu0 %v154
    %v1250 = vpop.f32.mrb[0].mxu0
    %v1251 = vadd.f32 %v802, %v1250
    %v1252 = vpop.f32.mrb[0].mxu0
    %v1253 = vadd.f32 %v804, %v1252
    %1254 = vmatprep.mubr.f32.mxu0 %v157
    %1255 = vmatmul.mubr.f32.gmra.mrb[0].mxu0 %v156
    %v1256 = vpop.f32.mrb[0].mxu0
    %v1257 = vadd.f32 %v808, %v1256
    %v1258 = vpop.f32.mrb[0].mxu0
    %v1259 = vadd.f32 %v810, %v1258
    %1260 = vmatprep.mubr.f32.mxu0 %v159
    %1261 = vmatmul.mubr.f32.gmra.mrb[0].mxu0 %v158
    %v1262 = vpop.f32.mrb[0].mxu0
    %v1263 = vadd.f32 %v814, %v1262
    %v1264 = vpop.f32.mrb[0].mxu0
    %v1265 = vadd.f32 %v816, %v1264
    %1266 = vmatprep.mubr.f32.mxu0 %v161
    %1267 = vmatmul.mubr.f32.gmra.mrb[0].mxu0 %v160
    %v1268 = vpop.f32.mrb[0].mxu0
    %v1269 = vadd.f32 %v820, %v1268
    %v1270 = vpop.f32.mrb[0].mxu0
    %v1271 = vadd.f32 %v822, %v1270
    %1272 = vmatprep.mubr.f32.mxu0 %v163
    %1273 = vmatmul.mubr.f32.gmra.mrb[0].mxu0 %v162
    %v1274 = vpop.f32.mrb[0].mxu0
    %v1275 = vadd.f32 %v826, %v1274
    %v1276 = vpop.f32.mrb[0].mxu0
    %v1277 = vadd.f32 %v828, %v1276
    %1278 = vmatprep.mubr.f32.mxu0 %v165
    %1279 = vmatmul.mubr.f32.gmra.mrb[0].mxu0 %v164
    %v1280 = vpop.f32.mrb[0].mxu0
    %v1281 = vadd.f32 %v832, %v1280
    %v1282 = vpop.f32.mrb[0].mxu0
    %v1283 = vadd.f32 %v834, %v1282
    %1284 = vmatprep.mubr.f32.mxu0 %v167
    %1285 = vmatmul.mubr.f32.gmra.mrb[0].mxu0 %v166
    %v1286 = vpop.f32.mrb[0].mxu0
    %v1287 = vadd.f32 %v838, %v1286
    %v1288 = vpop.f32.mrb[0].mxu0
    %v1289 = vadd.f32 %v840, %v1288
    %1290 = vmatprep.mubr.f32.mxu0 %v169
    %1291 = vmatmul.mubr.f32.gmra.mrb[0].mxu0 %v168
    %v1292 = vpop.f32.mrb[0].mxu0
    %v1293 = vadd.f32 %v844, %v1292
    %v1294 = vpop.f32.mrb[0].mxu0
    %v1295 = vadd.f32 %v846, %v1294
    %1296 = vmatprep.mubr.f32.mxu0 %v171
    %1297 = vmatmul.mubr.f32.gmra.mrb[0].mxu0 %v170
    %v1298 = vpop.f32.mrb[0].mxu0
    %v1299 = vadd.f32 %v850, %v1298
    %v1300 = vpop.f32.mrb[0].mxu0
    %v1301 = vadd.f32 %v852, %v1300
    %1302 = vmatprep.mubr.f32.mxu0 %v173
    %1303 = vmatmul.mubr.f32.gmra.mrb[0].mxu0 %v172
    %v1304 = vpop.f32.mrb[0].mxu0
    %v1305 = vadd.f32 %v856, %v1304
    %v1306 = vpop.f32.mrb[0].mxu0
    %v1307 = vadd.f32 %v858, %v1306
    %1308 = vmatprep.mubr.f32.mxu0 %v175
    %1309 = vmatmul.mubr.f32.gmra.mrb[0].mxu0 %v174
    %v1310 = vpop.f32.mrb[0].mxu0
    %v1311 = vadd.f32 %v862, %v1310
    %v1312 = vpop.f32.mrb[0].mxu0
    %v1313 = vadd.f32 %v864, %v1312
    %1314 = vmatprep.mubr.f32.mxu0 %v177
    %1315 = vmatmul.mubr.f32.gmra.mrb[0].mxu0 %v176
    %v1316 = vpop.f32.mrb[0].mxu0
    %v1317 = vadd.f32 %v868, %v1316
    %v1318 = vpop.f32.mrb[0].mxu0
    %v1319 = vadd.f32 %v870, %v1318
    %1320 = vmatprep.mubr.f32.mxu0 %v179
    %1321 = vmatmul.mubr.f32.gmra.mrb[0].mxu0 %v178
    %v1322 = vpop.f32.mrb[0].mxu0
    %v1323 = vadd.f32 %v874, %v1322
    %v1324 = vpop.f32.mrb[0].mxu0
    %v1325 = vadd.f32 %v876, %v1324
    %1326 = vmatprep.mubr.f32.mxu0 %v181
    %1327 = vmatmul.mubr.f32.gmra.mrb[0].mxu0 %v180
    %v1328 = vpop.f32.mrb[0].mxu0
    %v1329 = vadd.f32 %v880, %v1328
    %v1330 = vpop.f32.mrb[0].mxu0
    %v1331 = vadd.f32 %v882, %v1330
    %1332 = vmatprep.mubr.f32.mxu0 %v183
    %1333 = vmatmul.mubr.f32.gmra.mrb[0].mxu0 %v182
    %v1334 = vpop.f32.mrb[0].mxu0
    %v1335 = vadd.f32 %v886, %v1334
    %v1336 = vpop.f32.mrb[0].mxu0
    %v1337 = vadd.f32 %v888, %v1336
    %1338 = vdwg.mxu0
    %1339 = vmatprep.subr.mxu0 %v314
    %1340 = vmatpush1.msra.mxu0 %v313
    %1341 = vmatprep.subr.mxu0 %v316
    %1342 = vmatpush1.msra.mxu0 %v315
    %1343 = vmatprep.subr.mxu0 %v318
    %1344 = vmatpush1.msra.mxu0 %v317
    %1345 = vmatprep.subr.mxu0 %v320
    %1346 = vmatpush1.msra.mxu0 %v319
    %1347 = vmatprep.subr.mxu0 %v322
    %1348 = vmatpush1.msra.mxu0 %v321
    %1349 = vmatprep.subr.mxu0 %v324
    %1350 = vmatpush1.msra.mxu0 %v323
    %1351 = vmatprep.subr.mxu0 %v326
    %1352 = vmatpush1.msra.mxu0 %v325
    %1353 = vmatprep.subr.mxu0 %v328
    %1354 = vmatpush1.msra.mxu0 %v327
    %1355 = vmatprep.subr.mxu0 %v330
    %1356 = vmatpush1.msra.mxu0 %v329
    %1357 = vmatprep.subr.mxu0 %v332
    %1358 = vmatpush1.msra.mxu0 %v331
    %1359 = vmatprep.subr.mxu0 %v334
    %1360 = vmatpush1.msra.mxu0 %v333
    %1361 = vmatprep.subr.mxu0 %v336
    %1362 = vmatpush1.msra.mxu0 %v335
    %1363 = vmatprep.subr.mxu0 %v338
    %1364 = vmatpush1.msra.mxu0 %v337
    %1365 = vmatprep.subr.mxu0 %v340
    %1366 = vmatpush1.msra.mxu0 %v339
    %1367 = vmatprep.subr.mxu0 %v342
    %1368 = vmatpush1.msra.mxu0 %v341
    %1369 = vmatprep.subr.mxu0 %v344
    %1370 = vmatpush1.msra.mxu0 %v343
    %1371 = vmatprep.subr.mxu0 %v346
    %1372 = vmatpush1.msra.mxu0 %v345
    %1373 = vmatprep.subr.mxu0 %v348
    %1374 = vmatpush1.msra.mxu0 %v347
    %1375 = vmatprep.subr.mxu0 %v350
    %1376 = vmatpush1.msra.mxu0 %v349
    %1377 = vmatprep.subr.mxu0 %v352
    %1378 = vmatpush1.msra.mxu0 %v351
    %1379 = vmatprep.subr.mxu0 %v354
    %1380 = vmatpush1.msra.mxu0 %v353
    %1381 = vmatprep.subr.mxu0 %v356
    %1382 = vmatpush1.msra.mxu0 %v355
    %1383 = vmatprep.subr.mxu0 %v358
    %1384 = vmatpush1.msra.mxu0 %v357
    %1385 = vmatprep.subr.mxu0 %v360
    %1386 = vmatpush1.msra.mxu0 %v359
    %1387 = vmatprep.subr.mxu0 %v362
    %1388 = vmatpush1.msra.mxu0 %v361
    %1389 = vmatprep.subr.mxu0 %v364
    %1390 = vmatpush1.msra.mxu0 %v363
    %1391 = vmatprep.subr.mxu0 %v366
    %1392 = vmatpush1.msra.mxu0 %v365
    %1393 = vmatprep.subr.mxu0 %v368
    %1394 = vmatpush1.msra.mxu0 %v367
    %1395 = vmatprep.subr.mxu0 %v370
    %1396 = vmatpush1.msra.mxu0 %v369
    %1397 = vmatprep.subr.mxu0 %v372
    %1398 = vmatpush1.msra.mxu0 %v371
    %1399 = vmatprep.subr.mxu0 %v374
    %1400 = vmatpush1.msra.mxu0 %v373
    %1401 = vmatprep.subr.mxu0 %v376
    %1402 = vmatpush1.msra.mxu0 %v375
    %1403 = vmatprep.mubr.f32.mxu0 %v186
    %1404 = vmatmul.mubr.f32.gmra.mrb[0].mxu0 %v185
    %v1405 = vpop.f32.mrb[0].mxu0
    %v1406 = vadd.f32 0.0, %v1405
    %v1407 = vpop.f32.mrb[0].mxu0
    %v1408 = vadd.f32 0.0, %v1407
    %1409 = vmatprep.mubr.f32.mxu0 %v188
    %1410 = vmatmul.mubr.f32.gmra.mrb[0].mxu0 %v187
    %v1411 = vpop.f32.mrb[0].mxu0
    %v1412 = vadd.f32 0.0, %v1411
    %v1413 = vpop.f32.mrb[0].mxu0
    %v1414 = vadd.f32 0.0, %v1413
    %1415 = vmatprep.mubr.f32.mxu0 %v190
    %1416 = vmatmul.mubr.f32.gmra.mrb[0].mxu0 %v189
    %v1417 = vpop.f32.mrb[0].mxu0
    %v1418 = vadd.f32 0.0, %v1417
    %v1419 = vpop.f32.mrb[0].mxu0
    %v1420 = vadd.f32 0.0, %v1419
    %1421 = vmatprep.mubr.f32.mxu0 %v192
    %1422 = vmatmul.mubr.f32.gmra.mrb[0].mxu0 %v191
    %v1423 = vpop.f32.mrb[0].mxu0
    %v1424 = vadd.f32 0.0, %v1423
    %v1425 = vpop.f32.mrb[0].mxu0
    %v1426 = vadd.f32 0.0, %v1425
    %1427 = vmatprep.mubr.f32.mxu0 %v194
    %1428 = vmatmul.mubr.f32.gmra.mrb[0].mxu0 %v193
    %v1429 = vpop.f32.mrb[0].mxu0
    %v1430 = vadd.f32 0.0, %v1429
    %v1431 = vpop.f32.mrb[0].mxu0
    %v1432 = vadd.f32 0.0, %v1431
    %1433 = vmatprep.mubr.f32.mxu0 %v196
    %1434 = vmatmul.mubr.f32.gmra.mrb[0].mxu0 %v195
    %v1435 = vpop.f32.mrb[0].mxu0
    %v1436 = vadd.f32 0.0, %v1435
    %v1437 = vpop.f32.mrb[0].mxu0
    %v1438 = vadd.f32 0.0, %v1437
    %1439 = vmatprep.mubr.f32.mxu0 %v198
    %1440 = vmatmul.mubr.f32.gmra.mrb[0].mxu0 %v197
    %v1441 = vpop.f32.mrb[0].mxu0
    %v1442 = vadd.f32 0.0, %v1441
    %v1443 = vpop.f32.mrb[0].mxu0
    %v1444 = vadd.f32 0.0, %v1443
    %1445 = vmatprep.mubr.f32.mxu0 %v200
    %1446 = vmatmul.mubr.f32.gmra.mrb[0].mxu0 %v199
    %v1447 = vpop.f32.mrb[0].mxu0
    %v1448 = vadd.f32 0.0, %v1447
    %v1449 = vpop.f32.mrb[0].mxu0
    %v1450 = vadd.f32 0.0, %v1449
    %1451 = vmatprep.mubr.f32.mxu0 %v202
    %1452 = vmatmul.mubr.f32.gmra.mrb[0].mxu0 %v201
    %v1453 = vpop.f32.mrb[0].mxu0
    %v1454 = vadd.f32 0.0, %v1453
    %v1455 = vpop.f32.mrb[0].mxu0
    %v1456 = vadd.f32 0.0, %v1455
    %1457 = vmatprep.mubr.f32.mxu0 %v204
    %1458 = vmatmul.mubr.f32.gmra.mrb[0].mxu0 %v203
    %v1459 = vpop.f32.mrb[0].mxu0
    %v1460 = vadd.f32 0.0, %v1459
    %v1461 = vpop.f32.mrb[0].mxu0
    %v1462 = vadd.f32 0.0, %v1461
    %1463 = vmatprep.mubr.f32.mxu0 %v206
    %1464 = vmatmul.mubr.f32.gmra.mrb[0].mxu0 %v205
    %v1465 = vpop.f32.mrb[0].mxu0
    %v1466 = vadd.f32 0.0, %v1465
    %v1467 = vpop.f32.mrb[0].mxu0
    %v1468 = vadd.f32 0.0, %v1467
    %1469 = vmatprep.mubr.f32.mxu0 %v208
    %1470 = vmatmul.mubr.f32.gmra.mrb[0].mxu0 %v207
    %v1471 = vpop.f32.mrb[0].mxu0
    %v1472 = vadd.f32 0.0, %v1471
    %v1473 = vpop.f32.mrb[0].mxu0
    %v1474 = vadd.f32 0.0, %v1473
    %1475 = vmatprep.mubr.f32.mxu0 %v210
    %1476 = vmatmul.mubr.f32.gmra.mrb[0].mxu0 %v209
    %v1477 = vpop.f32.mrb[0].mxu0
    %v1478 = vadd.f32 0.0, %v1477
    %v1479 = vpop.f32.mrb[0].mxu0
    %v1480 = vadd.f32 0.0, %v1479
    %1481 = vmatprep.mubr.f32.mxu0 %v212
    %1482 = vmatmul.mubr.f32.gmra.mrb[0].mxu0 %v211
    %v1483 = vpop.f32.mrb[0].mxu0
    %v1484 = vadd.f32 0.0, %v1483
    %v1485 = vpop.f32.mrb[0].mxu0
    %v1486 = vadd.f32 0.0, %v1485
    %1487 = vmatprep.mubr.f32.mxu0 %v214
    %1488 = vmatmul.mubr.f32.gmra.mrb[0].mxu0 %v213
    %v1489 = vpop.f32.mrb[0].mxu0
    %v1490 = vadd.f32 0.0, %v1489
    %v1491 = vpop.f32.mrb[0].mxu0
    %v1492 = vadd.f32 0.0, %v1491
    %1493 = vmatprep.mubr.f32.mxu0 %v216
    %1494 = vmatmul.mubr.f32.gmra.mrb[0].mxu0 %v215
    %v1495 = vpop.f32.mrb[0].mxu0
    %v1496 = vadd.f32 0.0, %v1495
    %v1497 = vpop.f32.mrb[0].mxu0
    %v1498 = vadd.f32 0.0, %v1497
    %1499 = vmatprep.mubr.f32.mxu0 %v218
    %1500 = vmatmul.mubr.f32.gmra.mrb[0].mxu0 %v217
    %v1501 = vpop.f32.mrb[0].mxu0
    %v1502 = vadd.f32 0.0, %v1501
    %v1503 = vpop.f32.mrb[0].mxu0
    %v1504 = vadd.f32 0.0, %v1503
    %1505 = vmatprep.mubr.f32.mxu0 %v220
    %1506 = vmatmul.mubr.f32.gmra.mrb[0].mxu0 %v219
    %v1507 = vpop.f32.mrb[0].mxu0
    %v1508 = vadd.f32 0.0, %v1507
    %v1509 = vpop.f32.mrb[0].mxu0
    %v1510 = vadd.f32 0.0, %v1509
    %1511 = vmatprep.mubr.f32.mxu0 %v222
    %1512 = vmatmul.mubr.f32.gmra.mrb[0].mxu0 %v221
    %v1513 = vpop.f32.mrb[0].mxu0
    %v1514 = vadd.f32 0.0, %v1513
    %v1515 = vpop.f32.mrb[0].mxu0
    %v1516 = vadd.f32 0.0, %v1515
    %1517 = vmatprep.mubr.f32.mxu0 %v224
    %1518 = vmatmul.mubr.f32.gmra.mrb[0].mxu0 %v223
    %v1519 = vpop.f32.mrb[0].mxu0
    %v1520 = vadd.f32 0.0, %v1519
    %v1521 = vpop.f32.mrb[0].mxu0
    %v1522 = vadd.f32 0.0, %v1521
    %1523 = vmatprep.mubr.f32.mxu0 %v226
    %1524 = vmatmul.mubr.f32.gmra.mrb[0].mxu0 %v225
    %v1525 = vpop.f32.mrb[0].mxu0
    %v1526 = vadd.f32 0.0, %v1525
    %v1527 = vpop.f32.mrb[0].mxu0
    %v1528 = vadd.f32 0.0, %v1527
    %1529 = vmatprep.mubr.f32.mxu0 %v228
    %1530 = vmatmul.mubr.f32.gmra.mrb[0].mxu0 %v227
    %v1531 = vpop.f32.mrb[0].mxu0
    %v1532 = vadd.f32 0.0, %v1531
    %v1533 = vpop.f32.mrb[0].mxu0
    %v1534 = vadd.f32 0.0, %v1533
    %1535 = vmatprep.mubr.f32.mxu0 %v230
    %1536 = vmatmul.mubr.f32.gmra.mrb[0].mxu0 %v229
    %v1537 = vpop.f32.mrb[0].mxu0
    %v1538 = vadd.f32 0.0, %v1537
    %v1539 = vpop.f32.mrb[0].mxu0
    %v1540 = vadd.f32 0.0, %v1539
    %1541 = vmatprep.mubr.f32.mxu0 %v232
    %1542 = vmatmul.mubr.f32.gmra.mrb[0].mxu0 %v231
    %v1543 = vpop.f32.mrb[0].mxu0
    %v1544 = vadd.f32 0.0, %v1543
    %v1545 = vpop.f32.mrb[0].mxu0
    %v1546 = vadd.f32 0.0, %v1545
    %1547 = vmatprep.mubr.f32.mxu0 %v234
    %1548 = vmatmul.mubr.f32.gmra.mrb[0].mxu0 %v233
    %v1549 = vpop.f32.mrb[0].mxu0
    %v1550 = vadd.f32 0.0, %v1549
    %v1551 = vpop.f32.mrb[0].mxu0
    %v1552 = vadd.f32 0.0, %v1551
    %1553 = vmatprep.mubr.f32.mxu0 %v236
    %1554 = vmatmul.mubr.f32.gmra.mrb[0].mxu0 %v235
    %v1555 = vpop.f32.mrb[0].mxu0
    %v1556 = vadd.f32 0.0, %v1555
    %v1557 = vpop.f32.mrb[0].mxu0
    %v1558 = vadd.f32 0.0, %v1557
    %1559 = vmatprep.mubr.f32.mxu0 %v238
    %1560 = vmatmul.mubr.f32.gmra.mrb[0].mxu0 %v237
    %v1561 = vpop.f32.mrb[0].mxu0
    %v1562 = vadd.f32 0.0, %v1561
    %v1563 = vpop.f32.mrb[0].mxu0
    %v1564 = vadd.f32 0.0, %v1563
    %1565 = vmatprep.mubr.f32.mxu0 %v240
    %1566 = vmatmul.mubr.f32.gmra.mrb[0].mxu0 %v239
    %v1567 = vpop.f32.mrb[0].mxu0
    %v1568 = vadd.f32 0.0, %v1567
    %v1569 = vpop.f32.mrb[0].mxu0
    %v1570 = vadd.f32 0.0, %v1569
    %1571 = vmatprep.mubr.f32.mxu0 %v242
    %1572 = vmatmul.mubr.f32.gmra.mrb[0].mxu0 %v241
    %v1573 = vpop.f32.mrb[0].mxu0
    %v1574 = vadd.f32 0.0, %v1573
    %v1575 = vpop.f32.mrb[0].mxu0
    %v1576 = vadd.f32 0.0, %v1575
    %1577 = vmatprep.mubr.f32.mxu0 %v244
    %1578 = vmatmul.mubr.f32.gmra.mrb[0].mxu0 %v243
    %v1579 = vpop.f32.mrb[0].mxu0
    %v1580 = vadd.f32 0.0, %v1579
    %v1581 = vpop.f32.mrb[0].mxu0
    %v1582 = vadd.f32 0.0, %v1581
    %1583 = vmatprep.mubr.f32.mxu0 %v246
    %1584 = vmatmul.mubr.f32.gmra.mrb[0].mxu0 %v245
    %v1585 = vpop.f32.mrb[0].mxu0
    %v1586 = vadd.f32 0.0, %v1585
    %v1587 = vpop.f32.mrb[0].mxu0
    %v1588 = vadd.f32 0.0, %v1587
    %1589 = vmatprep.mubr.f32.mxu0 %v248
    %1590 = vmatmul.mubr.f32.gmra.mrb[0].mxu0 %v247
    %v1591 = vpop.f32.mrb[0].mxu0
    %v1592 = vadd.f32 0.0, %v1591
    %v1593 = vpop.f32.mrb[0].mxu0
    %v1594 = vadd.f32 0.0, %v1593
    %1595 = vmatprep.mubr.f32.mxu0 %v250
    %1596 = vmatmul.mubr.f32.gmra.mrb[0].mxu0 %v249
    %v1597 = vpop.f32.mrb[0].mxu0
    %v1598 = vadd.f32 0.0, %v1597
    %v1599 = vpop.f32.mrb[0].mxu0
    %v1600 = vadd.f32 0.0, %v1599
    %1601 = vmatprep.mubr.f32.mxu0 %v252
    %1602 = vmatmul.mubr.f32.gmra.mrb[0].mxu0 %v251
    %v1603 = vpop.f32.mrb[0].mxu0
    %v1604 = vadd.f32 0.0, %v1603
    %v1605 = vpop.f32.mrb[0].mxu0
    %v1606 = vadd.f32 0.0, %v1605
    %1607 = vmatprep.mubr.f32.mxu0 %v254
    %1608 = vmatmul.mubr.f32.gmra.mrb[0].mxu0 %v253
    %v1609 = vpop.f32.mrb[0].mxu0
    %v1610 = vadd.f32 0.0, %v1609
    %v1611 = vpop.f32.mrb[0].mxu0
    %v1612 = vadd.f32 0.0, %v1611
    %1613 = vmatprep.mubr.f32.mxu0 %v256
    %1614 = vmatmul.mubr.f32.gmra.mrb[0].mxu0 %v255
    %v1615 = vpop.f32.mrb[0].mxu0
    %v1616 = vadd.f32 0.0, %v1615
    %v1617 = vpop.f32.mrb[0].mxu0
    %v1618 = vadd.f32 0.0, %v1617
    %1619 = vmatprep.mubr.f32.mxu0 %v258
    %1620 = vmatmul.mubr.f32.gmra.mrb[0].mxu0 %v257
    %v1621 = vpop.f32.mrb[0].mxu0
    %v1622 = vadd.f32 0.0, %v1621
    %v1623 = vpop.f32.mrb[0].mxu0
    %v1624 = vadd.f32 0.0, %v1623
    %1625 = vmatprep.mubr.f32.mxu0 %v260
    %1626 = vmatmul.mubr.f32.gmra.mrb[0].mxu0 %v259
    %v1627 = vpop.f32.mrb[0].mxu0
    %v1628 = vadd.f32 0.0, %v1627
    %v1629 = vpop.f32.mrb[0].mxu0
    %v1630 = vadd.f32 0.0, %v1629
    %1631 = vmatprep.mubr.f32.mxu0 %v262
    %1632 = vmatmul.mubr.f32.gmra.mrb[0].mxu0 %v261
    %v1633 = vpop.f32.mrb[0].mxu0
    %v1634 = vadd.f32 0.0, %v1633
    %v1635 = vpop.f32.mrb[0].mxu0
    %v1636 = vadd.f32 0.0, %v1635
    %1637 = vmatprep.mubr.f32.mxu0 %v264
    %1638 = vmatmul.mubr.f32.gmra.mrb[0].mxu0 %v263
    %v1639 = vpop.f32.mrb[0].mxu0
    %v1640 = vadd.f32 0.0, %v1639
    %v1641 = vpop.f32.mrb[0].mxu0
    %v1642 = vadd.f32 0.0, %v1641
    %1643 = vmatprep.mubr.f32.mxu0 %v266
    %1644 = vmatmul.mubr.f32.gmra.mrb[0].mxu0 %v265
    %v1645 = vpop.f32.mrb[0].mxu0
    %v1646 = vadd.f32 0.0, %v1645
    %v1647 = vpop.f32.mrb[0].mxu0
    %v1648 = vadd.f32 0.0, %v1647
    %1649 = vmatprep.mubr.f32.mxu0 %v268
    %1650 = vmatmul.mubr.f32.gmra.mrb[0].mxu0 %v267
    %v1651 = vpop.f32.mrb[0].mxu0
    %v1652 = vadd.f32 0.0, %v1651
    %v1653 = vpop.f32.mrb[0].mxu0
    %v1654 = vadd.f32 0.0, %v1653
    %1655 = vmatprep.mubr.f32.mxu0 %v270
    %1656 = vmatmul.mubr.f32.gmra.mrb[0].mxu0 %v269
    %v1657 = vpop.f32.mrb[0].mxu0
    %v1658 = vadd.f32 0.0, %v1657
    %v1659 = vpop.f32.mrb[0].mxu0
    %v1660 = vadd.f32 0.0, %v1659
    %1661 = vmatprep.mubr.f32.mxu0 %v272
    %1662 = vmatmul.mubr.f32.gmra.mrb[0].mxu0 %v271
    %v1663 = vpop.f32.mrb[0].mxu0
    %v1664 = vadd.f32 0.0, %v1663
    %v1665 = vpop.f32.mrb[0].mxu0
    %v1666 = vadd.f32 0.0, %v1665
    %1667 = vmatprep.mubr.f32.mxu0 %v274
    %1668 = vmatmul.mubr.f32.gmra.mrb[0].mxu0 %v273
    %v1669 = vpop.f32.mrb[0].mxu0
    %v1670 = vadd.f32 0.0, %v1669
    %v1671 = vpop.f32.mrb[0].mxu0
    %v1672 = vadd.f32 0.0, %v1671
    %1673 = vmatprep.mubr.f32.mxu0 %v276
    %1674 = vmatmul.mubr.f32.gmra.mrb[0].mxu0 %v275
    %v1675 = vpop.f32.mrb[0].mxu0
    %v1676 = vadd.f32 0.0, %v1675
    %v1677 = vpop.f32.mrb[0].mxu0
    %v1678 = vadd.f32 0.0, %v1677
    %1679 = vmatprep.mubr.f32.mxu0 %v278
    %1680 = vmatmul.mubr.f32.gmra.mrb[0].mxu0 %v277
    %v1681 = vpop.f32.mrb[0].mxu0
    %v1682 = vadd.f32 0.0, %v1681
    %v1683 = vpop.f32.mrb[0].mxu0
    %v1684 = vadd.f32 0.0, %v1683
    %1685 = vmatprep.mubr.f32.mxu0 %v280
    %1686 = vmatmul.mubr.f32.gmra.mrb[0].mxu0 %v279
    %v1687 = vpop.f32.mrb[0].mxu0
    %v1688 = vadd.f32 0.0, %v1687
    %v1689 = vpop.f32.mrb[0].mxu0
    %v1690 = vadd.f32 0.0, %v1689
    %1691 = vmatprep.mubr.f32.mxu0 %v282
    %1692 = vmatmul.mubr.f32.gmra.mrb[0].mxu0 %v281
    %v1693 = vpop.f32.mrb[0].mxu0
    %v1694 = vadd.f32 0.0, %v1693
    %v1695 = vpop.f32.mrb[0].mxu0
    %v1696 = vadd.f32 0.0, %v1695
    %1697 = vmatprep.mubr.f32.mxu0 %v284
    %1698 = vmatmul.mubr.f32.gmra.mrb[0].mxu0 %v283
    %v1699 = vpop.f32.mrb[0].mxu0
    %v1700 = vadd.f32 0.0, %v1699
    %v1701 = vpop.f32.mrb[0].mxu0
    %v1702 = vadd.f32 0.0, %v1701
    %1703 = vmatprep.mubr.f32.mxu0 %v286
    %1704 = vmatmul.mubr.f32.gmra.mrb[0].mxu0 %v285
    %v1705 = vpop.f32.mrb[0].mxu0
    %v1706 = vadd.f32 0.0, %v1705
    %v1707 = vpop.f32.mrb[0].mxu0
    %v1708 = vadd.f32 0.0, %v1707
    %1709 = vmatprep.mubr.f32.mxu0 %v288
    %1710 = vmatmul.mubr.f32.gmra.mrb[0].mxu0 %v287
    %v1711 = vpop.f32.mrb[0].mxu0
    %v1712 = vadd.f32 0.0, %v1711
    %v1713 = vpop.f32.mrb[0].mxu0
    %v1714 = vadd.f32 0.0, %v1713
    %1715 = vmatprep.mubr.f32.mxu0 %v290
    %1716 = vmatmul.mubr.f32.gmra.mrb[0].mxu0 %v289
    %v1717 = vpop.f32.mrb[0].mxu0
    %v1718 = vadd.f32 0.0, %v1717
    %v1719 = vpop.f32.mrb[0].mxu0
    %v1720 = vadd.f32 0.0, %v1719
    %1721 = vmatprep.mubr.f32.mxu0 %v292
    %1722 = vmatmul.mubr.f32.gmra.mrb[0].mxu0 %v291
    %v1723 = vpop.f32.mrb[0].mxu0
    %v1724 = vadd.f32 0.0, %v1723
    %v1725 = vpop.f32.mrb[0].mxu0
    %v1726 = vadd.f32 0.0, %v1725
    %1727 = vmatprep.mubr.f32.mxu0 %v294
    %1728 = vmatmul.mubr.f32.gmra.mrb[0].mxu0 %v293
    %v1729 = vpop.f32.mrb[0].mxu0
    %v1730 = vadd.f32 0.0, %v1729
    %v1731 = vpop.f32.mrb[0].mxu0
    %v1732 = vadd.f32 0.0, %v1731
    %1733 = vmatprep.mubr.f32.mxu0 %v296
    %1734 = vmatmul.mubr.f32.gmra.mrb[0].mxu0 %v295
    %v1735 = vpop.f32.mrb[0].mxu0
    %v1736 = vadd.f32 0.0, %v1735
    %v1737 = vpop.f32.mrb[0].mxu0
    %v1738 = vadd.f32 0.0, %v1737
    %1739 = vmatprep.mubr.f32.mxu0 %v298
    %1740 = vmatmul.mubr.f32.gmra.mrb[0].mxu0 %v297
    %v1741 = vpop.f32.mrb[0].mxu0
    %v1742 = vadd.f32 0.0, %v1741
    %v1743 = vpop.f32.mrb[0].mxu0
    %v1744 = vadd.f32 0.0, %v1743
    %1745 = vmatprep.mubr.f32.mxu0 %v300
    %1746 = vmatmul.mubr.f32.gmra.mrb[0].mxu0 %v299
    %v1747 = vpop.f32.mrb[0].mxu0
    %v1748 = vadd.f32 0.0, %v1747
    %v1749 = vpop.f32.mrb[0].mxu0
    %v1750 = vadd.f32 0.0, %v1749
    %1751 = vmatprep.mubr.f32.mxu0 %v302
    %1752 = vmatmul.mubr.f32.gmra.mrb[0].mxu0 %v301
    %v1753 = vpop.f32.mrb[0].mxu0
    %v1754 = vadd.f32 0.0, %v1753
    %v1755 = vpop.f32.mrb[0].mxu0
    %v1756 = vadd.f32 0.0, %v1755
    %1757 = vmatprep.mubr.f32.mxu0 %v304
    %1758 = vmatmul.mubr.f32.gmra.mrb[0].mxu0 %v303
    %v1759 = vpop.f32.mrb[0].mxu0
    %v1760 = vadd.f32 0.0, %v1759
    %v1761 = vpop.f32.mrb[0].mxu0
    %v1762 = vadd.f32 0.0, %v1761
    %1763 = vmatprep.mubr.f32.mxu0 %v306
    %1764 = vmatmul.mubr.f32.gmra.mrb[0].mxu0 %v305
    %v1765 = vpop.f32.mrb[0].mxu0
    %v1766 = vadd.f32 0.0, %v1765
    %v1767 = vpop.f32.mrb[0].mxu0
    %v1768 = vadd.f32 0.0, %v1767
    %1769 = vmatprep.mubr.f32.mxu0 %v308
    %1770 = vmatmul.mubr.f32.gmra.mrb[0].mxu0 %v307
    %v1771 = vpop.f32.mrb[0].mxu0
    %v1772 = vadd.f32 0.0, %v1771
    %v1773 = vpop.f32.mrb[0].mxu0
    %v1774 = vadd.f32 0.0, %v1773
    %1775 = vmatprep.mubr.f32.mxu0 %v310
    %1776 = vmatmul.mubr.f32.gmra.mrb[0].mxu0 %v309
    %v1777 = vpop.f32.mrb[0].mxu0
    %v1778 = vadd.f32 0.0, %v1777
    %v1779 = vpop.f32.mrb[0].mxu0
    %v1780 = vadd.f32 0.0, %v1779
    %1781 = vmatprep.mubr.f32.mxu0 %v312
    %1782 = vmatmul.mubr.f32.gmra.mrb[0].mxu0 %v311
    %v1783 = vpop.f32.mrb[0].mxu0
    %v1784 = vadd.f32 0.0, %v1783
    %v1785 = vpop.f32.mrb[0].mxu0
    %v1786 = vadd.f32 0.0, %v1785
    %1787 = vdwg.mxu0
    %1788 = vmatprep.subr.mxu0 %v378
    %1789 = vmatpush1.msra.mxu0 %v377
    %1790 = vmatprep.subr.mxu0 %v380
    %1791 = vmatpush1.msra.mxu0 %v379
    %1792 = vmatprep.subr.mxu0 %v382
    %1793 = vmatpush1.msra.mxu0 %v381
    %1794 = vmatprep.subr.mxu0 %v384
    %1795 = vmatpush1.msra.mxu0 %v383
    %1796 = vmatprep.subr.mxu0 %v386
    %1797 = vmatpush1.msra.mxu0 %v385
    %1798 = vmatprep.subr.mxu0 %v388
    %1799 = vmatpush1.msra.mxu0 %v387
    %1800 = vmatprep.subr.mxu0 %v390
    %1801 = vmatpush1.msra.mxu0 %v389
    %1802 = vmatprep.subr.mxu0 %v392
    %1803 = vmatpush1.msra.mxu0 %v391
    %1804 = vmatprep.subr.mxu0 %v394
    %1805 = vmatpush1.msra.mxu0 %v393
    %1806 = vmatprep.subr.mxu0 %v396
    %1807 = vmatpush1.msra.mxu0 %v395
    %1808 = vmatprep.subr.mxu0 %v398
    %1809 = vmatpush1.msra.mxu0 %v397
    %1810 = vmatprep.subr.mxu0 %v400
    %1811 = vmatpush1.msra.mxu0 %v399
    %1812 = vmatprep.subr.mxu0 %v402
    %1813 = vmatpush1.msra.mxu0 %v401
    %1814 = vmatprep.subr.mxu0 %v404
    %1815 = vmatpush1.msra.mxu0 %v403
    %1816 = vmatprep.subr.mxu0 %v406
    %1817 = vmatpush1.msra.mxu0 %v405
    %1818 = vmatprep.subr.mxu0 %v408
    %1819 = vmatpush1.msra.mxu0 %v407
    %1820 = vmatprep.subr.mxu0 %v410
    %1821 = vmatpush1.msra.mxu0 %v409
    %1822 = vmatprep.subr.mxu0 %v412
    %1823 = vmatpush1.msra.mxu0 %v411
    %1824 = vmatprep.subr.mxu0 %v414
    %1825 = vmatpush1.msra.mxu0 %v413
    %1826 = vmatprep.subr.mxu0 %v416
    %1827 = vmatpush1.msra.mxu0 %v415
    %1828 = vmatprep.subr.mxu0 %v418
    %1829 = vmatpush1.msra.mxu0 %v417
    %1830 = vmatprep.subr.mxu0 %v420
    %1831 = vmatpush1.msra.mxu0 %v419
    %1832 = vmatprep.subr.mxu0 %v422
    %1833 = vmatpush1.msra.mxu0 %v421
    %1834 = vmatprep.subr.mxu0 %v424
    %1835 = vmatpush1.msra.mxu0 %v423
    %1836 = vmatprep.subr.mxu0 %v426
    %1837 = vmatpush1.msra.mxu0 %v425
    %1838 = vmatprep.subr.mxu0 %v428
    %1839 = vmatpush1.msra.mxu0 %v427
    %1840 = vmatprep.subr.mxu0 %v430
    %1841 = vmatpush1.msra.mxu0 %v429
    %1842 = vmatprep.subr.mxu0 %v432
    %1843 = vmatpush1.msra.mxu0 %v431
    %1844 = vmatprep.subr.mxu0 %v434
    %1845 = vmatpush1.msra.mxu0 %v433
    %1846 = vmatprep.subr.mxu0 %v436
    %1847 = vmatpush1.msra.mxu0 %v435
    %1848 = vmatprep.subr.mxu0 %v438
    %1849 = vmatpush1.msra.mxu0 %v437
    %1850 = vmatprep.subr.mxu0 %v440
    %1851 = vmatpush1.msra.mxu0 %v439
    %1852 = vmatprep.mubr.f32.mxu0 %v57
    %1853 = vmatmul.mubr.f32.gmra.mrb[0].mxu0 %v56
    %v1854 = vpop.f32.mrb[0].mxu0
    %v1855 = vadd.f32 0.0, %v1854
    %v1856 = vpop.f32.mrb[0].mxu0
    %v1857 = vadd.f32 0.0, %v1856
    %1858 = vmatprep.mubr.f32.mxu0 %v59
    %1859 = vmatmul.mubr.f32.gmra.mrb[0].mxu0 %v58
    %v1860 = vpop.f32.mrb[0].mxu0
    %v1861 = vadd.f32 0.0, %v1860
    %v1862 = vpop.f32.mrb[0].mxu0
    %v1863 = vadd.f32 0.0, %v1862
    %1864 = vmatprep.mubr.f32.mxu0 %v61
    %1865 = vmatmul.mubr.f32.gmra.mrb[0].mxu0 %v60
    %v1866 = vpop.f32.mrb[0].mxu0
    %v1867 = vadd.f32 0.0, %v1866
    %v1868 = vpop.f32.mrb[0].mxu0
    %v1869 = vadd.f32 0.0, %v1868
    %1870 = vmatprep.mubr.f32.mxu0 %v63
    %1871 = vmatmul.mubr.f32.gmra.mrb[0].mxu0 %v62
    %v1872 = vpop.f32.mrb[0].mxu0
    %v1873 = vadd.f32 0.0, %v1872
    %v1874 = vpop.f32.mrb[0].mxu0
    %v1875 = vadd.f32 0.0, %v1874
    %1876 = vmatprep.mubr.f32.mxu0 %v65
    %1877 = vmatmul.mubr.f32.gmra.mrb[0].mxu0 %v64
    %v1878 = vpop.f32.mrb[0].mxu0
    %v1879 = vadd.f32 0.0, %v1878
    %v1880 = vpop.f32.mrb[0].mxu0
    %v1881 = vadd.f32 0.0, %v1880
    %1882 = vmatprep.mubr.f32.mxu0 %v67
    %1883 = vmatmul.mubr.f32.gmra.mrb[0].mxu0 %v66
    %v1884 = vpop.f32.mrb[0].mxu0
    %v1885 = vadd.f32 0.0, %v1884
    %v1886 = vpop.f32.mrb[0].mxu0
    %v1887 = vadd.f32 0.0, %v1886
    %1888 = vmatprep.mubr.f32.mxu0 %v69
    %1889 = vmatmul.mubr.f32.gmra.mrb[0].mxu0 %v68
    %v1890 = vpop.f32.mrb[0].mxu0
    %v1891 = vadd.f32 0.0, %v1890
    %v1892 = vpop.f32.mrb[0].mxu0
    %v1893 = vadd.f32 0.0, %v1892
    %1894 = vmatprep.mubr.f32.mxu0 %v71
    %1895 = vmatmul.mubr.f32.gmra.mrb[0].mxu0 %v70
    %v1896 = vpop.f32.mrb[0].mxu0
    %v1897 = vadd.f32 0.0, %v1896
    %v1898 = vpop.f32.mrb[0].mxu0
    %v1899 = vadd.f32 0.0, %v1898
    %1900 = vmatprep.mubr.f32.mxu0 %v73
    %1901 = vmatmul.mubr.f32.gmra.mrb[0].mxu0 %v72
    %v1902 = vpop.f32.mrb[0].mxu0
    %v1903 = vadd.f32 0.0, %v1902
    %v1904 = vpop.f32.mrb[0].mxu0
    %v1905 = vadd.f32 0.0, %v1904
    %1906 = vmatprep.mubr.f32.mxu0 %v75
    %1907 = vmatmul.mubr.f32.gmra.mrb[0].mxu0 %v74
    %v1908 = vpop.f32.mrb[0].mxu0
    %v1909 = vadd.f32 0.0, %v1908
    %v1910 = vpop.f32.mrb[0].mxu0
    %v1911 = vadd.f32 0.0, %v1910
    %1912 = vmatprep.mubr.f32.mxu0 %v77
    %1913 = vmatmul.mubr.f32.gmra.mrb[0].mxu0 %v76
    %v1914 = vpop.f32.mrb[0].mxu0
    %v1915 = vadd.f32 0.0, %v1914
    %v1916 = vpop.f32.mrb[0].mxu0
    %v1917 = vadd.f32 0.0, %v1916
    %1918 = vmatprep.mubr.f32.mxu0 %v79
    %1919 = vmatmul.mubr.f32.gmra.mrb[0].mxu0 %v78
    %v1920 = vpop.f32.mrb[0].mxu0
    %v1921 = vadd.f32 0.0, %v1920
    %v1922 = vpop.f32.mrb[0].mxu0
    %v1923 = vadd.f32 0.0, %v1922
    %1924 = vmatprep.mubr.f32.mxu0 %v81
    %1925 = vmatmul.mubr.f32.gmra.mrb[0].mxu0 %v80
    %v1926 = vpop.f32.mrb[0].mxu0
    %v1927 = vadd.f32 0.0, %v1926
    %v1928 = vpop.f32.mrb[0].mxu0
    %v1929 = vadd.f32 0.0, %v1928
    %1930 = vmatprep.mubr.f32.mxu0 %v83
    %1931 = vmatmul.mubr.f32.gmra.mrb[0].mxu0 %v82
    %v1932 = vpop.f32.mrb[0].mxu0
    %v1933 = vadd.f32 0.0, %v1932
    %v1934 = vpop.f32.mrb[0].mxu0
    %v1935 = vadd.f32 0.0, %v1934
    %1936 = vmatprep.mubr.f32.mxu0 %v85
    %1937 = vmatmul.mubr.f32.gmra.mrb[0].mxu0 %v84
    %v1938 = vpop.f32.mrb[0].mxu0
    %v1939 = vadd.f32 0.0, %v1938
    %v1940 = vpop.f32.mrb[0].mxu0
    %v1941 = vadd.f32 0.0, %v1940
    %1942 = vmatprep.mubr.f32.mxu0 %v87
    %1943 = vmatmul.mubr.f32.gmra.mrb[0].mxu0 %v86
    %v1944 = vpop.f32.mrb[0].mxu0
    %v1945 = vadd.f32 0.0, %v1944
    %v1946 = vpop.f32.mrb[0].mxu0
    %v1947 = vadd.f32 0.0, %v1946
    %1948 = vmatprep.mubr.f32.mxu0 %v89
    %1949 = vmatmul.mubr.f32.gmra.mrb[0].mxu0 %v88
    %v1950 = vpop.f32.mrb[0].mxu0
    %v1951 = vadd.f32 0.0, %v1950
    %v1952 = vpop.f32.mrb[0].mxu0
    %v1953 = vadd.f32 0.0, %v1952
    %1954 = vmatprep.mubr.f32.mxu0 %v91
    %1955 = vmatmul.mubr.f32.gmra.mrb[0].mxu0 %v90
    %v1956 = vpop.f32.mrb[0].mxu0
    %v1957 = vadd.f32 0.0, %v1956
    %v1958 = vpop.f32.mrb[0].mxu0
    %v1959 = vadd.f32 0.0, %v1958
    %1960 = vmatprep.mubr.f32.mxu0 %v93
    %1961 = vmatmul.mubr.f32.gmra.mrb[0].mxu0 %v92
    %v1962 = vpop.f32.mrb[0].mxu0
    %v1963 = vadd.f32 0.0, %v1962
    %v1964 = vpop.f32.mrb[0].mxu0
    %v1965 = vadd.f32 0.0, %v1964
    %1966 = vmatprep.mubr.f32.mxu0 %v95
    %1967 = vmatmul.mubr.f32.gmra.mrb[0].mxu0 %v94
    %v1968 = vpop.f32.mrb[0].mxu0
    %v1969 = vadd.f32 0.0, %v1968
    %v1970 = vpop.f32.mrb[0].mxu0
    %v1971 = vadd.f32 0.0, %v1970
    %1972 = vmatprep.mubr.f32.mxu0 %v97
    %1973 = vmatmul.mubr.f32.gmra.mrb[0].mxu0 %v96
    %v1974 = vpop.f32.mrb[0].mxu0
    %v1975 = vadd.f32 0.0, %v1974
    %v1976 = vpop.f32.mrb[0].mxu0
    %v1977 = vadd.f32 0.0, %v1976
    %1978 = vmatprep.mubr.f32.mxu0 %v99
    %1979 = vmatmul.mubr.f32.gmra.mrb[0].mxu0 %v98
    %v1980 = vpop.f32.mrb[0].mxu0
    %v1981 = vadd.f32 0.0, %v1980
    %v1982 = vpop.f32.mrb[0].mxu0
    %v1983 = vadd.f32 0.0, %v1982
    %1984 = vmatprep.mubr.f32.mxu0 %v101
    %1985 = vmatmul.mubr.f32.gmra.mrb[0].mxu0 %v100
    %v1986 = vpop.f32.mrb[0].mxu0
    %v1987 = vadd.f32 0.0, %v1986
    %v1988 = vpop.f32.mrb[0].mxu0
    %v1989 = vadd.f32 0.0, %v1988
    %1990 = vmatprep.mubr.f32.mxu0 %v103
    %1991 = vmatmul.mubr.f32.gmra.mrb[0].mxu0 %v102
    %v1992 = vpop.f32.mrb[0].mxu0
    %v1993 = vadd.f32 0.0, %v1992
    %v1994 = vpop.f32.mrb[0].mxu0
    %v1995 = vadd.f32 0.0, %v1994
    %1996 = vmatprep.mubr.f32.mxu0 %v105
    %1997 = vmatmul.mubr.f32.gmra.mrb[0].mxu0 %v104
    %v1998 = vpop.f32.mrb[0].mxu0
    %v1999 = vadd.f32 0.0, %v1998
    %v2000 = vpop.f32.mrb[0].mxu0
    %v2001 = vadd.f32 0.0, %v2000
    %2002 = vmatprep.mubr.f32.mxu0 %v107
    %2003 = vmatmul.mubr.f32.gmra.mrb[0].mxu0 %v106
    %v2004 = vpop.f32.mrb[0].mxu0
    %v2005 = vadd.f32 0.0, %v2004
    %v2006 = vpop.f32.mrb[0].mxu0
    %v2007 = vadd.f32 0.0, %v2006
    %2008 = vmatprep.mubr.f32.mxu0 %v109
    %2009 = vmatmul.mubr.f32.gmra.mrb[0].mxu0 %v108
    %v2010 = vpop.f32.mrb[0].mxu0
    %v2011 = vadd.f32 0.0, %v2010
    %v2012 = vpop.f32.mrb[0].mxu0
    %v2013 = vadd.f32 0.0, %v2012
    %2014 = vmatprep.mubr.f32.mxu0 %v111
    %2015 = vmatmul.mubr.f32.gmra.mrb[0].mxu0 %v110
    %v2016 = vpop.f32.mrb[0].mxu0
    %v2017 = vadd.f32 0.0, %v2016
    %v2018 = vpop.f32.mrb[0].mxu0
    %v2019 = vadd.f32 0.0, %v2018
    %2020 = vmatprep.mubr.f32.mxu0 %v113
    %2021 = vmatmul.mubr.f32.gmra.mrb[0].mxu0 %v112
    %v2022 = vpop.f32.mrb[0].mxu0
    %v2023 = vadd.f32 0.0, %v2022
    %v2024 = vpop.f32.mrb[0].mxu0
    %v2025 = vadd.f32 0.0, %v2024
    %2026 = vmatprep.mubr.f32.mxu0 %v115
    %2027 = vmatmul.mubr.f32.gmra.mrb[0].mxu0 %v114
    %v2028 = vpop.f32.mrb[0].mxu0
    %v2029 = vadd.f32 0.0, %v2028
    %v2030 = vpop.f32.mrb[0].mxu0
    %v2031 = vadd.f32 0.0, %v2030
    %2032 = vmatprep.mubr.f32.mxu0 %v117
    %2033 = vmatmul.mubr.f32.gmra.mrb[0].mxu0 %v116
    %v2034 = vpop.f32.mrb[0].mxu0
    %v2035 = vadd.f32 0.0, %v2034
    %v2036 = vpop.f32.mrb[0].mxu0
    %v2037 = vadd.f32 0.0, %v2036
    %2038 = vmatprep.mubr.f32.mxu0 %v119
    %2039 = vmatmul.mubr.f32.gmra.mrb[0].mxu0 %v118
    %v2040 = vpop.f32.mrb[0].mxu0
    %v2041 = vadd.f32 0.0, %v2040
    %v2042 = vpop.f32.mrb[0].mxu0
    %v2043 = vadd.f32 0.0, %v2042
    %2044 = vmatprep.mubr.f32.mxu0 %v121
    %2045 = vmatmul.mubr.f32.gmra.mrb[0].mxu0 %v120
    %v2046 = vpop.f32.mrb[0].mxu0
    %v2047 = vadd.f32 0.0, %v2046
    %v2048 = vpop.f32.mrb[0].mxu0
    %v2049 = vadd.f32 0.0, %v2048
    %2050 = vmatprep.mubr.f32.mxu0 %v123
    %2051 = vmatmul.mubr.f32.gmra.mrb[0].mxu0 %v122
    %v2052 = vpop.f32.mrb[0].mxu0
    %v2053 = vadd.f32 0.0, %v2052
    %v2054 = vpop.f32.mrb[0].mxu0
    %v2055 = vadd.f32 0.0, %v2054
    %2056 = vmatprep.mubr.f32.mxu0 %v125
    %2057 = vmatmul.mubr.f32.gmra.mrb[0].mxu0 %v124
    %v2058 = vpop.f32.mrb[0].mxu0
    %v2059 = vadd.f32 0.0, %v2058
    %v2060 = vpop.f32.mrb[0].mxu0
    %v2061 = vadd.f32 0.0, %v2060
    %2062 = vmatprep.mubr.f32.mxu0 %v127
    %2063 = vmatmul.mubr.f32.gmra.mrb[0].mxu0 %v126
    %v2064 = vpop.f32.mrb[0].mxu0
    %v2065 = vadd.f32 0.0, %v2064
    %v2066 = vpop.f32.mrb[0].mxu0
    %v2067 = vadd.f32 0.0, %v2066
    %2068 = vmatprep.mubr.f32.mxu0 %v129
    %2069 = vmatmul.mubr.f32.gmra.mrb[0].mxu0 %v128
    %v2070 = vpop.f32.mrb[0].mxu0
    %v2071 = vadd.f32 0.0, %v2070
    %v2072 = vpop.f32.mrb[0].mxu0
    %v2073 = vadd.f32 0.0, %v2072
    %2074 = vmatprep.mubr.f32.mxu0 %v131
    %2075 = vmatmul.mubr.f32.gmra.mrb[0].mxu0 %v130
    %v2076 = vpop.f32.mrb[0].mxu0
    %v2077 = vadd.f32 0.0, %v2076
    %v2078 = vpop.f32.mrb[0].mxu0
    %v2079 = vadd.f32 0.0, %v2078
    %2080 = vmatprep.mubr.f32.mxu0 %v133
    %2081 = vmatmul.mubr.f32.gmra.mrb[0].mxu0 %v132
    %v2082 = vpop.f32.mrb[0].mxu0
    %v2083 = vadd.f32 0.0, %v2082
    %v2084 = vpop.f32.mrb[0].mxu0
    %v2085 = vadd.f32 0.0, %v2084
    %2086 = vmatprep.mubr.f32.mxu0 %v135
    %2087 = vmatmul.mubr.f32.gmra.mrb[0].mxu0 %v134
    %v2088 = vpop.f32.mrb[0].mxu0
    %v2089 = vadd.f32 0.0, %v2088
    %v2090 = vpop.f32.mrb[0].mxu0
    %v2091 = vadd.f32 0.0, %v2090
    %2092 = vmatprep.mubr.f32.mxu0 %v137
    %2093 = vmatmul.mubr.f32.gmra.mrb[0].mxu0 %v136
    %v2094 = vpop.f32.mrb[0].mxu0
    %v2095 = vadd.f32 0.0, %v2094
    %v2096 = vpop.f32.mrb[0].mxu0
    %v2097 = vadd.f32 0.0, %v2096
    %2098 = vmatprep.mubr.f32.mxu0 %v139
    %2099 = vmatmul.mubr.f32.gmra.mrb[0].mxu0 %v138
    %v2100 = vpop.f32.mrb[0].mxu0
    %v2101 = vadd.f32 0.0, %v2100
    %v2102 = vpop.f32.mrb[0].mxu0
    %v2103 = vadd.f32 0.0, %v2102
    %2104 = vmatprep.mubr.f32.mxu0 %v141
    %2105 = vmatmul.mubr.f32.gmra.mrb[0].mxu0 %v140
    %v2106 = vpop.f32.mrb[0].mxu0
    %v2107 = vadd.f32 0.0, %v2106
    %v2108 = vpop.f32.mrb[0].mxu0
    %v2109 = vadd.f32 0.0, %v2108
    %2110 = vmatprep.mubr.f32.mxu0 %v143
    %2111 = vmatmul.mubr.f32.gmra.mrb[0].mxu0 %v142
    %v2112 = vpop.f32.mrb[0].mxu0
    %v2113 = vadd.f32 0.0, %v2112
    %v2114 = vpop.f32.mrb[0].mxu0
    %v2115 = vadd.f32 0.0, %v2114
    %2116 = vmatprep.mubr.f32.mxu0 %v145
    %2117 = vmatmul.mubr.f32.gmra.mrb[0].mxu0 %v144
    %v2118 = vpop.f32.mrb[0].mxu0
    %v2119 = vadd.f32 0.0, %v2118
    %v2120 = vpop.f32.mrb[0].mxu0
    %v2121 = vadd.f32 0.0, %v2120
    %2122 = vmatprep.mubr.f32.mxu0 %v147
    %2123 = vmatmul.mubr.f32.gmra.mrb[0].mxu0 %v146
    %v2124 = vpop.f32.mrb[0].mxu0
    %v2125 = vadd.f32 0.0, %v2124
    %v2126 = vpop.f32.mrb[0].mxu0
    %v2127 = vadd.f32 0.0, %v2126
    %2128 = vmatprep.mubr.f32.mxu0 %v149
    %2129 = vmatmul.mubr.f32.gmra.mrb[0].mxu0 %v148
    %v2130 = vpop.f32.mrb[0].mxu0
    %v2131 = vadd.f32 0.0, %v2130
    %v2132 = vpop.f32.mrb[0].mxu0
    %v2133 = vadd.f32 0.0, %v2132
    %2134 = vmatprep.mubr.f32.mxu0 %v151
    %2135 = vmatmul.mubr.f32.gmra.mrb[0].mxu0 %v150
    %v2136 = vpop.f32.mrb[0].mxu0
    %v2137 = vadd.f32 0.0, %v2136
    %v2138 = vpop.f32.mrb[0].mxu0
    %v2139 = vadd.f32 0.0, %v2138
    %2140 = vmatprep.mubr.f32.mxu0 %v153
    %2141 = vmatmul.mubr.f32.gmra.mrb[0].mxu0 %v152
    %v2142 = vpop.f32.mrb[0].mxu0
    %v2143 = vadd.f32 0.0, %v2142
    %v2144 = vpop.f32.mrb[0].mxu0
    %v2145 = vadd.f32 0.0, %v2144
    %2146 = vmatprep.mubr.f32.mxu0 %v155
    %2147 = vmatmul.mubr.f32.gmra.mrb[0].mxu0 %v154
    %v2148 = vpop.f32.mrb[0].mxu0
    %v2149 = vadd.f32 0.0, %v2148
    %v2150 = vpop.f32.mrb[0].mxu0
    %v2151 = vadd.f32 0.0, %v2150
    %2152 = vmatprep.mubr.f32.mxu0 %v157
    %2153 = vmatmul.mubr.f32.gmra.mrb[0].mxu0 %v156
    %v2154 = vpop.f32.mrb[0].mxu0
    %v2155 = vadd.f32 0.0, %v2154
    %v2156 = vpop.f32.mrb[0].mxu0
    %v2157 = vadd.f32 0.0, %v2156
    %2158 = vmatprep.mubr.f32.mxu0 %v159
    %2159 = vmatmul.mubr.f32.gmra.mrb[0].mxu0 %v158
    %v2160 = vpop.f32.mrb[0].mxu0
    %v2161 = vadd.f32 0.0, %v2160
    %v2162 = vpop.f32.mrb[0].mxu0
    %v2163 = vadd.f32 0.0, %v2162
    %2164 = vmatprep.mubr.f32.mxu0 %v161
    %2165 = vmatmul.mubr.f32.gmra.mrb[0].mxu0 %v160
    %v2166 = vpop.f32.mrb[0].mxu0
    %v2167 = vadd.f32 0.0, %v2166
    %v2168 = vpop.f32.mrb[0].mxu0
    %v2169 = vadd.f32 0.0, %v2168
    %2170 = vmatprep.mubr.f32.mxu0 %v163
    %2171 = vmatmul.mubr.f32.gmra.mrb[0].mxu0 %v162
    %v2172 = vpop.f32.mrb[0].mxu0
    %v2173 = vadd.f32 0.0, %v2172
    %v2174 = vpop.f32.mrb[0].mxu0
    %v2175 = vadd.f32 0.0, %v2174
    %2176 = vmatprep.mubr.f32.mxu0 %v165
    %2177 = vmatmul.mubr.f32.gmra.mrb[0].mxu0 %v164
    %v2178 = vpop.f32.mrb[0].mxu0
    %v2179 = vadd.f32 0.0, %v2178
    %v2180 = vpop.f32.mrb[0].mxu0
    %v2181 = vadd.f32 0.0, %v2180
    %2182 = vmatprep.mubr.f32.mxu0 %v167
    %2183 = vmatmul.mubr.f32.gmra.mrb[0].mxu0 %v166
    %v2184 = vpop.f32.mrb[0].mxu0
    %v2185 = vadd.f32 0.0, %v2184
    %v2186 = vpop.f32.mrb[0].mxu0
    %v2187 = vadd.f32 0.0, %v2186
    %2188 = vmatprep.mubr.f32.mxu0 %v169
    %2189 = vmatmul.mubr.f32.gmra.mrb[0].mxu0 %v168
    %v2190 = vpop.f32.mrb[0].mxu0
    %v2191 = vadd.f32 0.0, %v2190
    %v2192 = vpop.f32.mrb[0].mxu0
    %v2193 = vadd.f32 0.0, %v2192
    %2194 = vmatprep.mubr.f32.mxu0 %v171
    %2195 = vmatmul.mubr.f32.gmra.mrb[0].mxu0 %v170
    %v2196 = vpop.f32.mrb[0].mxu0
    %v2197 = vadd.f32 0.0, %v2196
    %v2198 = vpop.f32.mrb[0].mxu0
    %v2199 = vadd.f32 0.0, %v2198
    %2200 = vmatprep.mubr.f32.mxu0 %v173
    %2201 = vmatmul.mubr.f32.gmra.mrb[0].mxu0 %v172
    %v2202 = vpop.f32.mrb[0].mxu0
    %v2203 = vadd.f32 0.0, %v2202
    %v2204 = vpop.f32.mrb[0].mxu0
    %v2205 = vadd.f32 0.0, %v2204
    %2206 = vmatprep.mubr.f32.mxu0 %v175
    %2207 = vmatmul.mubr.f32.gmra.mrb[0].mxu0 %v174
    %v2208 = vpop.f32.mrb[0].mxu0
    %v2209 = vadd.f32 0.0, %v2208
    %v2210 = vpop.f32.mrb[0].mxu0
    %v2211 = vadd.f32 0.0, %v2210
    %2212 = vmatprep.mubr.f32.mxu0 %v177
    %2213 = vmatmul.mubr.f32.gmra.mrb[0].mxu0 %v176
    %v2214 = vpop.f32.mrb[0].mxu0
    %v2215 = vadd.f32 0.0, %v2214
    %v2216 = vpop.f32.mrb[0].mxu0
    %v2217 = vadd.f32 0.0, %v2216
    %2218 = vmatprep.mubr.f32.mxu0 %v179
    %2219 = vmatmul.mubr.f32.gmra.mrb[0].mxu0 %v178
    %v2220 = vpop.f32.mrb[0].mxu0
    %v2221 = vadd.f32 0.0, %v2220
    %v2222 = vpop.f32.mrb[0].mxu0
    %v2223 = vadd.f32 0.0, %v2222
    %2224 = vmatprep.mubr.f32.mxu0 %v181
    %2225 = vmatmul.mubr.f32.gmra.mrb[0].mxu0 %v180
    %v2226 = vpop.f32.mrb[0].mxu0
    %v2227 = vadd.f32 0.0, %v2226
    %v2228 = vpop.f32.mrb[0].mxu0
    %v2229 = vadd.f32 0.0, %v2228
    %2230 = vmatprep.mubr.f32.mxu0 %v183
    %2231 = vmatmul.mubr.f32.gmra.mrb[0].mxu0 %v182
    %v2232 = vpop.f32.mrb[0].mxu0
    %v2233 = vadd.f32 0.0, %v2232
    %v2234 = vpop.f32.mrb[0].mxu0
    %v2235 = vadd.f32 0.0, %v2234
    %2236 = vdwg.mxu0
    %v2237 = vsub.f32 %v1406, %v1855
    %v2238 = vsub.f32 %v1408, %v1857
    %v2239 = vsub.f32 %v1412, %v1861
    %v2240 = vsub.f32 %v1414, %v1863
    %v2241 = vsub.f32 %v1418, %v1867
    %v2242 = vsub.f32 %v1420, %v1869
    %v2243 = vsub.f32 %v1424, %v1873
    %v2244 = vsub.f32 %v1426, %v1875
    %v2245 = vsub.f32 %v1430, %v1879
    %v2246 = vsub.f32 %v1432, %v1881
    %v2247 = vsub.f32 %v1436, %v1885
    %v2248 = vsub.f32 %v1438, %v1887
    %v2249 = vsub.f32 %v1442, %v1891
    %v2250 = vsub.f32 %v1444, %v1893
    %v2251 = vsub.f32 %v1448, %v1897
    %v2252 = vsub.f32 %v1450, %v1899
    %v2253 = vsub.f32 %v1454, %v1903
    %v2254 = vsub.f32 %v1456, %v1905
    %v2255 = vsub.f32 %v1460, %v1909
    %v2256 = vsub.f32 %v1462, %v1911
    %v2257 = vsub.f32 %v1466, %v1915
    %v2258 = vsub.f32 %v1468, %v1917
    %v2259 = vsub.f32 %v1472, %v1921
    %v2260 = vsub.f32 %v1474, %v1923
    %v2261 = vsub.f32 %v1478, %v1927
    %v2262 = vsub.f32 %v1480, %v1929
    %v2263 = vsub.f32 %v1484, %v1933
    %v2264 = vsub.f32 %v1486, %v1935
    %v2265 = vsub.f32 %v1490, %v1939
    %v2266 = vsub.f32 %v1492, %v1941
    %v2267 = vsub.f32 %v1496, %v1945
    %v2268 = vsub.f32 %v1498, %v1947
    %v2269 = vsub.f32 %v1502, %v1951
    %v2270 = vsub.f32 %v1504, %v1953
    %v2271 = vsub.f32 %v1508, %v1957
    %v2272 = vsub.f32 %v1510, %v1959
    %v2273 = vsub.f32 %v1514, %v1963
    %v2274 = vsub.f32 %v1516, %v1965
    %v2275 = vsub.f32 %v1520, %v1969
    %v2276 = vsub.f32 %v1522, %v1971
    %v2277 = vsub.f32 %v1526, %v1975
    %v2278 = vsub.f32 %v1528, %v1977
    %v2279 = vsub.f32 %v1532, %v1981
    %v2280 = vsub.f32 %v1534, %v1983
    %v2281 = vsub.f32 %v1538, %v1987
    %v2282 = vsub.f32 %v1540, %v1989
    %v2283 = vsub.f32 %v1544, %v1993
    %v2284 = vsub.f32 %v1546, %v1995
    %v2285 = vsub.f32 %v1550, %v1999
    %v2286 = vsub.f32 %v1552, %v2001
    %v2287 = vsub.f32 %v1556, %v2005
    %v2288 = vsub.f32 %v1558, %v2007
    %v2289 = vsub.f32 %v1562, %v2011
    %v2290 = vsub.f32 %v1564, %v2013
    %v2291 = vsub.f32 %v1568, %v2017
    %v2292 = vsub.f32 %v1570, %v2019
    %v2293 = vsub.f32 %v1574, %v2023
    %v2294 = vsub.f32 %v1576, %v2025
    %v2295 = vsub.f32 %v1580, %v2029
    %v2296 = vsub.f32 %v1582, %v2031
    %v2297 = vsub.f32 %v1586, %v2035
    %v2298 = vsub.f32 %v1588, %v2037
    %v2299 = vsub.f32 %v1592, %v2041
    %v2300 = vsub.f32 %v1594, %v2043
    %v2301 = vsub.f32 %v1598, %v2047
    %v2302 = vsub.f32 %v1600, %v2049
    %v2303 = vsub.f32 %v1604, %v2053
    %v2304 = vsub.f32 %v1606, %v2055
    %v2305 = vsub.f32 %v1610, %v2059
    %v2306 = vsub.f32 %v1612, %v2061
    %v2307 = vsub.f32 %v1616, %v2065
    %v2308 = vsub.f32 %v1618, %v2067
    %v2309 = vsub.f32 %v1622, %v2071
    %v2310 = vsub.f32 %v1624, %v2073
    %v2311 = vsub.f32 %v1628, %v2077
    %v2312 = vsub.f32 %v1630, %v2079
    %v2313 = vsub.f32 %v1634, %v2083
    %v2314 = vsub.f32 %v1636, %v2085
    %v2315 = vsub.f32 %v1640, %v2089
    %v2316 = vsub.f32 %v1642, %v2091
    %v2317 = vsub.f32 %v1646, %v2095
    %v2318 = vsub.f32 %v1648, %v2097
    %v2319 = vsub.f32 %v1652, %v2101
    %v2320 = vsub.f32 %v1654, %v2103
    %v2321 = vsub.f32 %v1658, %v2107
    %v2322 = vsub.f32 %v1660, %v2109
    %v2323 = vsub.f32 %v1664, %v2113
    %v2324 = vsub.f32 %v1666, %v2115
    %v2325 = vsub.f32 %v1670, %v2119
    %v2326 = vsub.f32 %v1672, %v2121
    %v2327 = vsub.f32 %v1676, %v2125
    %v2328 = vsub.f32 %v1678, %v2127
    %v2329 = vsub.f32 %v1682, %v2131
    %v2330 = vsub.f32 %v1684, %v2133
    %v2331 = vsub.f32 %v1688, %v2137
    %v2332 = vsub.f32 %v1690, %v2139
    %v2333 = vsub.f32 %v1694, %v2143
    %v2334 = vsub.f32 %v1696, %v2145
    %v2335 = vsub.f32 %v1700, %v2149
    %v2336 = vsub.f32 %v1702, %v2151
    %v2337 = vsub.f32 %v1706, %v2155
    %v2338 = vsub.f32 %v1708, %v2157
    %v2339 = vsub.f32 %v1712, %v2161
    %v2340 = vsub.f32 %v1714, %v2163
    %v2341 = vsub.f32 %v1718, %v2167
    %v2342 = vsub.f32 %v1720, %v2169
    %v2343 = vsub.f32 %v1724, %v2173
    %v2344 = vsub.f32 %v1726, %v2175
    %v2345 = vsub.f32 %v1730, %v2179
    %v2346 = vsub.f32 %v1732, %v2181
    %v2347 = vsub.f32 %v1736, %v2185
    %v2348 = vsub.f32 %v1738, %v2187
    %v2349 = vsub.f32 %v1742, %v2191
    %v2350 = vsub.f32 %v1744, %v2193
    %v2351 = vsub.f32 %v1748, %v2197
    %v2352 = vsub.f32 %v1750, %v2199
    %v2353 = vsub.f32 %v1754, %v2203
    %v2354 = vsub.f32 %v1756, %v2205
    %v2355 = vsub.f32 %v1760, %v2209
    %v2356 = vsub.f32 %v1762, %v2211
    %v2357 = vsub.f32 %v1766, %v2215
    %v2358 = vsub.f32 %v1768, %v2217
    %v2359 = vsub.f32 %v1772, %v2221
    %v2360 = vsub.f32 %v1774, %v2223
    %v2361 = vsub.f32 %v1778, %v2227
    %v2362 = vsub.f32 %v1780, %v2229
    %v2363 = vsub.f32 %v1784, %v2233
    %v2364 = vsub.f32 %v1786, %v2235
    %2365 = vxpose.xlu0.b32.start [1/16] %v957, 128
    %2366 = vxpose.xlu0.b32.cont [2/16] %v963, 128
    %2367 = vxpose.xlu0.b32.cont [3/16] %v969, 128
    %2368 = vxpose.xlu0.b32.cont [4/16] %v975, 128
    %2369 = vxpose.xlu0.b32.cont [5/16] %v981, 128
    %2370 = vxpose.xlu0.b32.cont [6/16] %v987, 128
    %2371 = vxpose.xlu0.b32.cont [7/16] %v993, 128
    %2372 = vxpose.xlu0.b32.cont [8/16] %v999, 128
    %2373 = vxpose.xlu0.b32.cont [9/16] %v1005, 128
    %2374 = vxpose.xlu0.b32.cont [10/16] %v1011, 128
    %2375 = vxpose.xlu0.b32.cont [11/16] %v1017, 128
    %2376 = vxpose.xlu0.b32.cont [12/16] %v1023, 128
    %2377 = vxpose.xlu0.b32.cont [13/16] %v1029, 128
    %2378 = vxpose.xlu0.b32.cont [14/16] %v1035, 128
    %2379 = vxpose.xlu0.b32.cont [15/16] %v1041, 128
    %2380 = vxpose.xlu0.b32.end [16/16] %v1047, 128
    %v2381 = vpop.trf.xlu0
    %v2382 = vpop.trf.xlu0
    %v2383 = vpop.trf.xlu0
    %v2384 = vpop.trf.xlu0
    %v2385 = vpop.trf.xlu0
    %v2386 = vpop.trf.xlu0
    %v2387 = vpop.trf.xlu0
    %v2388 = vpop.trf.xlu0
    %v2389 = vpop.trf.xlu0
    %v2390 = vpop.trf.xlu0
    %v2391 = vpop.trf.xlu0
    %v2392 = vpop.trf.xlu0
    %v2393 = vpop.trf.xlu0
    %v2394 = vpop.trf.xlu0
    %v2395 = vpop.trf.xlu0
    %v2396 = vpop.trf.xlu0
    %2397 = vxpose.xlu0.b32.start [1/16] %v959, 128
    %2398 = vxpose.xlu0.b32.cont [2/16] %v965, 128
    %2399 = vxpose.xlu0.b32.cont [3/16] %v971, 128
    %2400 = vxpose.xlu0.b32.cont [4/16] %v977, 128
    %2401 = vxpose.xlu0.b32.cont [5/16] %v983, 128
    %2402 = vxpose.xlu0.b32.cont [6/16] %v989, 128
    %2403 = vxpose.xlu0.b32.cont [7/16] %v995, 128
    %2404 = vxpose.xlu0.b32.cont [8/16] %v1001, 128
    %2405 = vxpose.xlu0.b32.cont [9/16] %v1007, 128
    %2406 = vxpose.xlu0.b32.cont [10/16] %v1013, 128
    %2407 = vxpose.xlu0.b32.cont [11/16] %v1019, 128
    %2408 = vxpose.xlu0.b32.cont [12/16] %v1025, 128
    %2409 = vxpose.xlu0.b32.cont [13/16] %v1031, 128
    %2410 = vxpose.xlu0.b32.cont [14/16] %v1037, 128
    %2411 = vxpose.xlu0.b32.cont [15/16] %v1043, 128
    %2412 = vxpose.xlu0.b32.end [16/16] %v1049, 128
    %v2413 = vpop.trf.xlu0
    %v2414 = vpop.trf.xlu0
    %v2415 = vpop.trf.xlu0
    %v2416 = vpop.trf.xlu0
    %v2417 = vpop.trf.xlu0
    %v2418 = vpop.trf.xlu0
    %v2419 = vpop.trf.xlu0
    %v2420 = vpop.trf.xlu0
    %v2421 = vpop.trf.xlu0
    %v2422 = vpop.trf.xlu0
    %v2423 = vpop.trf.xlu0
    %v2424 = vpop.trf.xlu0
    %v2425 = vpop.trf.xlu0
    %v2426 = vpop.trf.xlu0
    %v2427 = vpop.trf.xlu0
    %v2428 = vpop.trf.xlu0
    %2429 = vxpose.xlu0.b32.start [1/16] %v1053, 128
    %2430 = vxpose.xlu0.b32.cont [2/16] %v1059, 128
    %2431 = vxpose.xlu0.b32.cont [3/16] %v1065, 128
    %2432 = vxpose.xlu0.b32.cont [4/16] %v1071, 128
    %2433 = vxpose.xlu0.b32.cont [5/16] %v1077, 128
    %2434 = vxpose.xlu0.b32.cont [6/16] %v1083, 128
    %2435 = vxpose.xlu0.b32.cont [7/16] %v1089, 128
    %2436 = vxpose.xlu0.b32.cont [8/16] %v1095, 128
    %2437 = vxpose.xlu0.b32.cont [9/16] %v1101, 128
    %2438 = vxpose.xlu0.b32.cont [10/16] %v1107, 128
    %2439 = vxpose.xlu0.b32.cont [11/16] %v1113, 128
    %2440 = vxpose.xlu0.b32.cont [12/16] %v1119, 128
    %2441 = vxpose.xlu0.b32.cont [13/16] %v1125, 128
    %2442 = vxpose.xlu0.b32.cont [14/16] %v1131, 128
    %2443 = vxpose.xlu0.b32.cont [15/16] %v1137, 128
    %2444 = vxpose.xlu0.b32.end [16/16] %v1143, 128
    %v2445 = vpop.trf.xlu0
    %v2446 = vpop.trf.xlu0
    %v2447 = vpop.trf.xlu0
    %v2448 = vpop.trf.xlu0
    %v2449 = vpop.trf.xlu0
    %v2450 = vpop.trf.xlu0
    %v2451 = vpop.trf.xlu0
    %v2452 = vpop.trf.xlu0
    %v2453 = vpop.trf.xlu0
    %v2454 = vpop.trf.xlu0
    %v2455 = vpop.trf.xlu0
    %v2456 = vpop.trf.xlu0
    %v2457 = vpop.trf.xlu0
    %v2458 = vpop.trf.xlu0
    %v2459 = vpop.trf.xlu0
    %v2460 = vpop.trf.xlu0
    %2461 = vxpose.xlu0.b32.start [1/16] %v1055, 128
    %2462 = vxpose.xlu0.b32.cont [2/16] %v1061, 128
    %2463 = vxpose.xlu0.b32.cont [3/16] %v1067, 128
    %2464 = vxpose.xlu0.b32.cont [4/16] %v1073, 128
    %2465 = vxpose.xlu0.b32.cont [5/16] %v1079, 128
    %2466 = vxpose.xlu0.b32.cont [6/16] %v1085, 128
    %2467 = vxpose.xlu0.b32.cont [7/16] %v1091, 128
    %2468 = vxpose.xlu0.b32.cont [8/16] %v1097, 128
    %2469 = vxpose.xlu0.b32.cont [9/16] %v1103, 128
    %2470 = vxpose.xlu0.b32.cont [10/16] %v1109, 128
    %2471 = vxpose.xlu0.b32.cont [11/16] %v1115, 128
    %2472 = vxpose.xlu0.b32.cont [12/16] %v1121, 128
    %2473 = vxpose.xlu0.b32.cont [13/16] %v1127, 128
    %2474 = vxpose.xlu0.b32.cont [14/16] %v1133, 128
    %2475 = vxpose.xlu0.b32.cont [15/16] %v1139, 128
    %2476 = vxpose.xlu0.b32.end [16/16] %v1145, 128
    %v2477 = vpop.trf.xlu0
    %v2478 = vpop.trf.xlu0
    %v2479 = vpop.trf.xlu0
    %v2480 = vpop.trf.xlu0
    %v2481 = vpop.trf.xlu0
    %v2482 = vpop.trf.xlu0
    %v2483 = vpop.trf.xlu0
    %v2484 = vpop.trf.xlu0
    %v2485 = vpop.trf.xlu0
    %v2486 = vpop.trf.xlu0
    %v2487 = vpop.trf.xlu0
    %v2488 = vpop.trf.xlu0
    %v2489 = vpop.trf.xlu0
    %v2490 = vpop.trf.xlu0
    %v2491 = vpop.trf.xlu0
    %v2492 = vpop.trf.xlu0
    %2493 = vxpose.xlu0.b32.start [1/16] %v1149, 128
    %2494 = vxpose.xlu0.b32.cont [2/16] %v1155, 128
    %2495 = vxpose.xlu0.b32.cont [3/16] %v1161, 128
    %2496 = vxpose.xlu0.b32.cont [4/16] %v1167, 128
    %2497 = vxpose.xlu0.b32.cont [5/16] %v1173, 128
    %2498 = vxpose.xlu0.b32.cont [6/16] %v1179, 128
    %2499 = vxpose.xlu0.b32.cont [7/16] %v1185, 128
    %2500 = vxpose.xlu0.b32.cont [8/16] %v1191, 128
    %2501 = vxpose.xlu0.b32.cont [9/16] %v1197, 128
    %2502 = vxpose.xlu0.b32.cont [10/16] %v1203, 128
    %2503 = vxpose.xlu0.b32.cont [11/16] %v1209, 128
    %2504 = vxpose.xlu0.b32.cont [12/16] %v1215, 128
    %2505 = vxpose.xlu0.b32.cont [13/16] %v1221, 128
    %2506 = vxpose.xlu0.b32.cont [14/16] %v1227, 128
    %2507 = vxpose.xlu0.b32.cont [15/16] %v1233, 128
    %2508 = vxpose.xlu0.b32.end [16/16] %v1239, 128
    %v2509 = vpop.trf.xlu0
    %v2510 = vpop.trf.xlu0
    %v2511 = vpop.trf.xlu0
    %v2512 = vpop.trf.xlu0
    %v2513 = vpop.trf.xlu0
    %v2514 = vpop.trf.xlu0
    %v2515 = vpop.trf.xlu0
    %v2516 = vpop.trf.xlu0
    %v2517 = vpop.trf.xlu0
    %v2518 = vpop.trf.xlu0
    %v2519 = vpop.trf.xlu0
    %v2520 = vpop.trf.xlu0
    %v2521 = vpop.trf.xlu0
    %v2522 = vpop.trf.xlu0
    %v2523 = vpop.trf.xlu0
    %v2524 = vpop.trf.xlu0
    %2525 = vxpose.xlu0.b32.start [1/16] %v1151, 128
    %2526 = vxpose.xlu0.b32.cont [2/16] %v1157, 128
    %2527 = vxpose.xlu0.b32.cont [3/16] %v1163, 128
    %2528 = vxpose.xlu0.b32.cont [4/16] %v1169, 128
    %2529 = vxpose.xlu0.b32.cont [5/16] %v1175, 128
    %2530 = vxpose.xlu0.b32.cont [6/16] %v1181, 128
    %2531 = vxpose.xlu0.b32.cont [7/16] %v1187, 128
    %2532 = vxpose.xlu0.b32.cont [8/16] %v1193, 128
    %2533 = vxpose.xlu0.b32.cont [9/16] %v1199, 128
    %2534 = vxpose.xlu0.b32.cont [10/16] %v1205, 128
    %2535 = vxpose.xlu0.b32.cont [11/16] %v1211, 128
    %2536 = vxpose.xlu0.b32.cont [12/16] %v1217, 128
    %2537 = vxpose.xlu0.b32.cont [13/16] %v1223, 128
    %2538 = vxpose.xlu0.b32.cont [14/16] %v1229, 128
    %2539 = vxpose.xlu0.b32.cont [15/16] %v1235, 128
    %2540 = vxpose.xlu0.b32.end [16/16] %v1241, 128
    %v2541 = vpop.trf.xlu0
    %v2542 = vpop.trf.xlu0
    %v2543 = vpop.trf.xlu0
    %v2544 = vpop.trf.xlu0
    %v2545 = vpop.trf.xlu0
    %v2546 = vpop.trf.xlu0
    %v2547 = vpop.trf.xlu0
    %v2548 = vpop.trf.xlu0
    %v2549 = vpop.trf.xlu0
    %v2550 = vpop.trf.xlu0
    %v2551 = vpop.trf.xlu0
    %v2552 = vpop.trf.xlu0
    %v2553 = vpop.trf.xlu0
    %v2554 = vpop.trf.xlu0
    %v2555 = vpop.trf.xlu0
    %v2556 = vpop.trf.xlu0
    %2557 = vxpose.xlu0.b32.start [1/16] %v1245, 128
    %2558 = vxpose.xlu0.b32.cont [2/16] %v1251, 128
    %2559 = vxpose.xlu0.b32.cont [3/16] %v1257, 128
    %2560 = vxpose.xlu0.b32.cont [4/16] %v1263, 128
    %2561 = vxpose.xlu0.b32.cont [5/16] %v1269, 128
    %2562 = vxpose.xlu0.b32.cont [6/16] %v1275, 128
    %2563 = vxpose.xlu0.b32.cont [7/16] %v1281, 128
    %2564 = vxpose.xlu0.b32.cont [8/16] %v1287, 128
    %2565 = vxpose.xlu0.b32.cont [9/16] %v1293, 128
    %2566 = vxpose.xlu0.b32.cont [10/16] %v1299, 128
    %2567 = vxpose.xlu0.b32.cont [11/16] %v1305, 128
    %2568 = vxpose.xlu0.b32.cont [12/16] %v1311, 128
    %2569 = vxpose.xlu0.b32.cont [13/16] %v1317, 128
    %2570 = vxpose.xlu0.b32.cont [14/16] %v1323, 128
    %2571 = vxpose.xlu0.b32.cont [15/16] %v1329, 128
    %2572 = vxpose.xlu0.b32.end [16/16] %v1335, 128
    %v2573 = vpop.trf.xlu0
    %v2574 = vpop.trf.xlu0
    %v2575 = vpop.trf.xlu0
    %v2576 = vpop.trf.xlu0
    %v2577 = vpop.trf.xlu0
    %v2578 = vpop.trf.xlu0
    %v2579 = vpop.trf.xlu0
    %v2580 = vpop.trf.xlu0
    %v2581 = vpop.trf.xlu0
    %v2582 = vpop.trf.xlu0
    %v2583 = vpop.trf.xlu0
    %v2584 = vpop.trf.xlu0
    %v2585 = vpop.trf.xlu0
    %v2586 = vpop.trf.xlu0
    %v2587 = vpop.trf.xlu0
    %v2588 = vpop.trf.xlu0
    %2589 = vxpose.xlu0.b32.start [1/16] %v1247, 128
    %2590 = vxpose.xlu0.b32.cont [2/16] %v1253, 128
    %2591 = vxpose.xlu0.b32.cont [3/16] %v1259, 128
    %2592 = vxpose.xlu0.b32.cont [4/16] %v1265, 128
    %2593 = vxpose.xlu0.b32.cont [5/16] %v1271, 128
    %2594 = vxpose.xlu0.b32.cont [6/16] %v1277, 128
    %2595 = vxpose.xlu0.b32.cont [7/16] %v1283, 128
    %2596 = vxpose.xlu0.b32.cont [8/16] %v1289, 128
    %2597 = vxpose.xlu0.b32.cont [9/16] %v1295, 128
    %2598 = vxpose.xlu0.b32.cont [10/16] %v1301, 128
    %2599 = vxpose.xlu0.b32.cont [11/16] %v1307, 128
    %2600 = vxpose.xlu0.b32.cont [12/16] %v1313, 128
    %2601 = vxpose.xlu0.b32.cont [13/16] %v1319, 128
    %2602 = vxpose.xlu0.b32.cont [14/16] %v1325, 128
    %2603 = vxpose.xlu0.b32.cont [15/16] %v1331, 128
    %2604 = vxpose.xlu0.b32.end [16/16] %v1337, 128
    %v2605 = vpop.trf.xlu0
    %v2606 = vpop.trf.xlu0
    %v2607 = vpop.trf.xlu0
    %v2608 = vpop.trf.xlu0
    %v2609 = vpop.trf.xlu0
    %v2610 = vpop.trf.xlu0
    %v2611 = vpop.trf.xlu0
    %v2612 = vpop.trf.xlu0
    %v2613 = vpop.trf.xlu0
    %v2614 = vpop.trf.xlu0
    %v2615 = vpop.trf.xlu0
    %v2616 = vpop.trf.xlu0
    %v2617 = vpop.trf.xlu0
    %v2618 = vpop.trf.xlu0
    %v2619 = vpop.trf.xlu0
    %v2620 = vpop.trf.xlu0
    %2621 = vst [vmem:[#allocation8] sm:$0xff] %v2381
    %2622 = vst [vmem:[#allocation8 + $0x8] sm:$0xff] %v2445
    %2623 = vst [vmem:[#allocation8 + $0x10] sm:$0xff] %v2509
    %2624 = vst [vmem:[#allocation8 + $0x18] sm:$0xff] %v2573
    %2625 = vst [vmem:[#allocation8 + $0x20] sm:$0xff] %v2382
    %2626 = vst [vmem:[#allocation8 + $0x28] sm:$0xff] %v2446
    %2627 = vst [vmem:[#allocation8 + $0x30] sm:$0xff] %v2510
    %2628 = vst [vmem:[#allocation8 + $0x38] sm:$0xff] %v2574
    %2629 = vst [vmem:[#allocation8 + $0x40] sm:$0xff] %v2383
    %2630 = vst [vmem:[#allocation8 + $0x48] sm:$0xff] %v2447
    %2631 = vst [vmem:[#allocation8 + $0x50] sm:$0xff] %v2511
    %2632 = vst [vmem:[#allocation8 + $0x58] sm:$0xff] %v2575
    %2633 = vst [vmem:[#allocation8 + $0x60] sm:$0xff] %v2384
    %2634 = vst [vmem:[#allocation8 + $0x68] sm:$0xff] %v2448
    %2635 = vst [vmem:[#allocation8 + $0x70] sm:$0xff] %v2512
    %2636 = vst [vmem:[#allocation8 + $0x78] sm:$0xff] %v2576
    %2637 = vst [vmem:[#allocation8 + $0x80] sm:$0xff] %v2385
    %2638 = vst [vmem:[#allocation8 + $0x88] sm:$0xff] %v2449
    %2639 = vst [vmem:[#allocation8 + $0x90] sm:$0xff] %v2513
    %2640 = vst [vmem:[#allocation8 + $0x98] sm:$0xff] %v2577
    %2641 = vst [vmem:[#allocation8 + $0xa0] sm:$0xff] %v2386
    %2642 = vst [vmem:[#allocation8 + $0xa8] sm:$0xff] %v2450
    %2643 = vst [vmem:[#allocation8 + $0xb0] sm:$0xff] %v2514
    %2644 = vst [vmem:[#allocation8 + $0xb8] sm:$0xff] %v2578
    %2645 = vst [vmem:[#allocation8 + $0xc0] sm:$0xff] %v2387
    %2646 = vst [vmem:[#allocation8 + $0xc8] sm:$0xff] %v2451
    %2647 = vst [vmem:[#allocation8 + $0xd0] sm:$0xff] %v2515
    %2648 = vst [vmem:[#allocation8 + $0xd8] sm:$0xff] %v2579
    %2649 = vst [vmem:[#allocation8 + $0xe0] sm:$0xff] %v2388
    %2650 = vst [vmem:[#allocation8 + $0xe8] sm:$0xff] %v2452
    %2651 = vst [vmem:[#allocation8 + $0xf0] sm:$0xff] %v2516
    %2652 = vst [vmem:[#allocation8 + $0xf8] sm:$0xff] %v2580
    %2653 = vst [vmem:[#allocation8 + $0x100] sm:$0xff] %v2389
    %2654 = vst [vmem:[#allocation8 + $0x108] sm:$0xff] %v2453
    %2655 = vst [vmem:[#allocation8 + $0x110] sm:$0xff] %v2517
    %2656 = vst [vmem:[#allocation8 + $0x118] sm:$0xff] %v2581
    %2657 = vst [vmem:[#allocation8 + $0x120] sm:$0xff] %v2390
    %2658 = vst [vmem:[#allocation8 + $0x128] sm:$0xff] %v2454
    %2659 = vst [vmem:[#allocation8 + $0x130] sm:$0xff] %v2518
    %2660 = vst [vmem:[#allocation8 + $0x138] sm:$0xff] %v2582
    %2661 = vst [vmem:[#allocation8 + $0x140] sm:$0xff] %v2391
    %2662 = vst [vmem:[#allocation8 + $0x148] sm:$0xff] %v2455
    %2663 = vst [vmem:[#allocation8 + $0x150] sm:$0xff] %v2519
    %2664 = vst [vmem:[#allocation8 + $0x158] sm:$0xff] %v2583
    %2665 = vst [vmem:[#allocation8 + $0x160] sm:$0xff] %v2392
    %2666 = vst [vmem:[#allocation8 + $0x168] sm:$0xff] %v2456
    %2667 = vst [vmem:[#allocation8 + $0x170] sm:$0xff] %v2520
    %2668 = vst [vmem:[#allocation8 + $0x178] sm:$0xff] %v2584
    %2669 = vst [vmem:[#allocation8 + $0x180] sm:$0xff] %v2393
    %2670 = vst [vmem:[#allocation8 + $0x188] sm:$0xff] %v2457
    %2671 = vst [vmem:[#allocation8 + $0x190] sm:$0xff] %v2521
    %2672 = vst [vmem:[#allocation8 + $0x198] sm:$0xff] %v2585
    %2673 = vst [vmem:[#allocation8 + $0x1a0] sm:$0xff] %v2394
    %2674 = vst [vmem:[#allocation8 + $0x1a8] sm:$0xff] %v2458
    %2675 = vst [vmem:[#allocation8 + $0x1b0] sm:$0xff] %v2522
    %2676 = vst [vmem:[#allocation8 + $0x1b8] sm:$0xff] %v2586
    %2677 = vst [vmem:[#allocation8 + $0x1c0] sm:$0xff] %v2395
    %2678 = vst [vmem:[#allocation8 + $0x1c8] sm:$0xff] %v2459
    %2679 = vst [vmem:[#allocation8 + $0x1d0] sm:$0xff] %v2523
    %2680 = vst [vmem:[#allocation8 + $0x1d8] sm:$0xff] %v2587
    %2681 = vst [vmem:[#allocation8 + $0x1e0] sm:$0xff] %v2396
    %2682 = vst [vmem:[#allocation8 + $0x1e8] sm:$0xff] %v2460
    %2683 = vst [vmem:[#allocation8 + $0x1f0] sm:$0xff] %v2524
    %2684 = vst [vmem:[#allocation8 + $0x1f8] sm:$0xff] %v2588
    %2685 = vst [vmem:[#allocation8 + $0x200] sm:$0xff] %v2413
    %2686 = vst [vmem:[#allocation8 + $0x208] sm:$0xff] %v2477
    %2687 = vst [vmem:[#allocation8 + $0x210] sm:$0xff] %v2541
    %2688 = vst [vmem:[#allocation8 + $0x218] sm:$0xff] %v2605
    %2689 = vst [vmem:[#allocation8 + $0x220] sm:$0xff] %v2414
    %2690 = vst [vmem:[#allocation8 + $0x228] sm:$0xff] %v2478
    %2691 = vst [vmem:[#allocation8 + $0x230] sm:$0xff] %v2542
    %2692 = vst [vmem:[#allocation8 + $0x238] sm:$0xff] %v2606
    %2693 = vst [vmem:[#allocation8 + $0x240] sm:$0xff] %v2415
    %2694 = vst [vmem:[#allocation8 + $0x248] sm:$0xff] %v2479
    %2695 = vst [vmem:[#allocation8 + $0x250] sm:$0xff] %v2543
    %2696 = vst [vmem:[#allocation8 + $0x258] sm:$0xff] %v2607
    %2697 = vst [vmem:[#allocation8 + $0x260] sm:$0xff] %v2416
    %2698 = vst [vmem:[#allocation8 + $0x268] sm:$0xff] %v2480
    %2699 = vst [vmem:[#allocation8 + $0x270] sm:$0xff] %v2544
    %2700 = vst [vmem:[#allocation8 + $0x278] sm:$0xff] %v2608
    %2701 = vst [vmem:[#allocation8 + $0x280] sm:$0xff] %v2417
    %2702 = vst [vmem:[#allocation8 + $0x288] sm:$0xff] %v2481
    %2703 = vst [vmem:[#allocation8 + $0x290] sm:$0xff] %v2545
    %2704 = vst [vmem:[#allocation8 + $0x298] sm:$0xff] %v2609
    %2705 = vst [vmem:[#allocation8 + $0x2a0] sm:$0xff] %v2418
    %2706 = vst [vmem:[#allocation8 + $0x2a8] sm:$0xff] %v2482
    %2707 = vst [vmem:[#allocation8 + $0x2b0] sm:$0xff] %v2546
    %2708 = vst [vmem:[#allocation8 + $0x2b8] sm:$0xff] %v2610
    %2709 = vst [vmem:[#allocation8 + $0x2c0] sm:$0xff] %v2419
    %2710 = vst [vmem:[#allocation8 + $0x2c8] sm:$0xff] %v2483
    %2711 = vst [vmem:[#allocation8 + $0x2d0] sm:$0xff] %v2547
    %2712 = vst [vmem:[#allocation8 + $0x2d8] sm:$0xff] %v2611
    %2713 = vst [vmem:[#allocation8 + $0x2e0] sm:$0xff] %v2420
    %2714 = vst [vmem:[#allocation8 + $0x2e8] sm:$0xff] %v2484
    %2715 = vst [vmem:[#allocation8 + $0x2f0] sm:$0xff] %v2548
    %2716 = vst [vmem:[#allocation8 + $0x2f8] sm:$0xff] %v2612
    %2717 = vst [vmem:[#allocation8 + $0x300] sm:$0xff] %v2421
    %2718 = vst [vmem:[#allocation8 + $0x308] sm:$0xff] %v2485
    %2719 = vst [vmem:[#allocation8 + $0x310] sm:$0xff] %v2549
    %2720 = vst [vmem:[#allocation8 + $0x318] sm:$0xff] %v2613
    %2721 = vst [vmem:[#allocation8 + $0x320] sm:$0xff] %v2422
    %2722 = vst [vmem:[#allocation8 + $0x328] sm:$0xff] %v2486
    %2723 = vst [vmem:[#allocation8 + $0x330] sm:$0xff] %v2550
    %2724 = vst [vmem:[#allocation8 + $0x338] sm:$0xff] %v2614
    %2725 = vst [vmem:[#allocation8 + $0x340] sm:$0xff] %v2423
    %2726 = vst [vmem:[#allocation8 + $0x348] sm:$0xff] %v2487
    %2727 = vst [vmem:[#allocation8 + $0x350] sm:$0xff] %v2551
    %2728 = vst [vmem:[#allocation8 + $0x358] sm:$0xff] %v2615
    %2729 = vst [vmem:[#allocation8 + $0x360] sm:$0xff] %v2424
    %2730 = vst [vmem:[#allocation8 + $0x368] sm:$0xff] %v2488
    %2731 = vst [vmem:[#allocation8 + $0x370] sm:$0xff] %v2552
    %2732 = vst [vmem:[#allocation8 + $0x378] sm:$0xff] %v2616
    %2733 = vst [vmem:[#allocation8 + $0x380] sm:$0xff] %v2425
    %2734 = vst [vmem:[#allocation8 + $0x388] sm:$0xff] %v2489
    %2735 = vst [vmem:[#allocation8 + $0x390] sm:$0xff] %v2553
    %2736 = vst [vmem:[#allocation8 + $0x398] sm:$0xff] %v2617
    %2737 = vst [vmem:[#allocation8 + $0x3a0] sm:$0xff] %v2426
    %2738 = vst [vmem:[#allocation8 + $0x3a8] sm:$0xff] %v2490
    %2739 = vst [vmem:[#allocation8 + $0x3b0] sm:$0xff] %v2554
    %2740 = vst [vmem:[#allocation8 + $0x3b8] sm:$0xff] %v2618
    %2741 = vst [vmem:[#allocation8 + $0x3c0] sm:$0xff] %v2427
    %2742 = vst [vmem:[#allocation8 + $0x3c8] sm:$0xff] %v2491
    %2743 = vst [vmem:[#allocation8 + $0x3d0] sm:$0xff] %v2555
    %2744 = vst [vmem:[#allocation8 + $0x3d8] sm:$0xff] %v2619
    %2745 = vst [vmem:[#allocation8 + $0x3e0] sm:$0xff] %v2428
    %2746 = vst [vmem:[#allocation8 + $0x3e8] sm:$0xff] %v2492
    %2747 = vst [vmem:[#allocation8 + $0x3f0] sm:$0xff] %v2556
    %2748 = vst [vmem:[#allocation8 + $0x3f8] sm:$0xff] %v2620
    %2749 = vxpose.xlu0.b32.start [1/16] %v2237, 128
    %2750 = vxpose.xlu0.b32.cont [2/16] %v2239, 128
    %2751 = vxpose.xlu0.b32.cont [3/16] %v2241, 128
    %2752 = vxpose.xlu0.b32.cont [4/16] %v2243, 128
    %2753 = vxpose.xlu0.b32.cont [5/16] %v2245, 128
    %2754 = vxpose.xlu0.b32.cont [6/16] %v2247, 128
    %2755 = vxpose.xlu0.b32.cont [7/16] %v2249, 128
    %2756 = vxpose.xlu0.b32.cont [8/16] %v2251, 128
    %2757 = vxpose.xlu0.b32.cont [9/16] %v2253, 128
    %2758 = vxpose.xlu0.b32.cont [10/16] %v2255, 128
    %2759 = vxpose.xlu0.b32.cont [11/16] %v2257, 128
    %2760 = vxpose.xlu0.b32.cont [12/16] %v2259, 128
    %2761 = vxpose.xlu0.b32.cont [13/16] %v2261, 128
    %2762 = vxpose.xlu0.b32.cont [14/16] %v2263, 128
    %2763 = vxpose.xlu0.b32.cont [15/16] %v2265, 128
    %2764 = vxpose.xlu0.b32.end [16/16] %v2267, 128
    %v2765 = vpop.trf.xlu0
    %v2766 = vpop.trf.xlu0
    %v2767 = vpop.trf.xlu0
    %v2768 = vpop.trf.xlu0
    %v2769 = vpop.trf.xlu0
    %v2770 = vpop.trf.xlu0
    %v2771 = vpop.trf.xlu0
    %v2772 = vpop.trf.xlu0
    %v2773 = vpop.trf.xlu0
    %v2774 = vpop.trf.xlu0
    %v2775 = vpop.trf.xlu0
    %v2776 = vpop.trf.xlu0
    %v2777 = vpop.trf.xlu0
    %v2778 = vpop.trf.xlu0
    %v2779 = vpop.trf.xlu0
    %v2780 = vpop.trf.xlu0
    %2781 = vxpose.xlu0.b32.start [1/16] %v2238, 128
    %2782 = vxpose.xlu0.b32.cont [2/16] %v2240, 128
    %2783 = vxpose.xlu0.b32.cont [3/16] %v2242, 128
    %2784 = vxpose.xlu0.b32.cont [4/16] %v2244, 128
    %2785 = vxpose.xlu0.b32.cont [5/16] %v2246, 128
    %2786 = vxpose.xlu0.b32.cont [6/16] %v2248, 128
    %2787 = vxpose.xlu0.b32.cont [7/16] %v2250, 128
    %2788 = vxpose.xlu0.b32.cont [8/16] %v2252, 128
    %2789 = vxpose.xlu0.b32.cont [9/16] %v2254, 128
    %2790 = vxpose.xlu0.b32.cont [10/16] %v2256, 128
    %2791 = vxpose.xlu0.b32.cont [11/16] %v2258, 128
    %2792 = vxpose.xlu0.b32.cont [12/16] %v2260, 128
    %2793 = vxpose.xlu0.b32.cont [13/16] %v2262, 128
    %2794 = vxpose.xlu0.b32.cont [14/16] %v2264, 128
    %2795 = vxpose.xlu0.b32.cont [15/16] %v2266, 128
    %2796 = vxpose.xlu0.b32.end [16/16] %v2268, 128
    %v2797 = vpop.trf.xlu0
    %v2798 = vpop.trf.xlu0
    %v2799 = vpop.trf.xlu0
    %v2800 = vpop.trf.xlu0
    %v2801 = vpop.trf.xlu0
    %v2802 = vpop.trf.xlu0
    %v2803 = vpop.trf.xlu0
    %v2804 = vpop.trf.xlu0
    %v2805 = vpop.trf.xlu0
    %v2806 = vpop.trf.xlu0
    %v2807 = vpop.trf.xlu0
    %v2808 = vpop.trf.xlu0
    %v2809 = vpop.trf.xlu0
    %v2810 = vpop.trf.xlu0
    %v2811 = vpop.trf.xlu0
    %v2812 = vpop.trf.xlu0
    %2813 = vxpose.xlu0.b32.start [1/16] %v2269, 128
    %2814 = vxpose.xlu0.b32.cont [2/16] %v2271, 128
    %2815 = vxpose.xlu0.b32.cont [3/16] %v2273, 128
    %2816 = vxpose.xlu0.b32.cont [4/16] %v2275, 128
    %2817 = vxpose.xlu0.b32.cont [5/16] %v2277, 128
    %2818 = vxpose.xlu0.b32.cont [6/16] %v2279, 128
    %2819 = vxpose.xlu0.b32.cont [7/16] %v2281, 128
    %2820 = vxpose.xlu0.b32.cont [8/16] %v2283, 128
    %2821 = vxpose.xlu0.b32.cont [9/16] %v2285, 128
    %2822 = vxpose.xlu0.b32.cont [10/16] %v2287, 128
    %2823 = vxpose.xlu0.b32.cont [11/16] %v2289, 128
    %2824 = vxpose.xlu0.b32.cont [12/16] %v2291, 128
    %2825 = vxpose.xlu0.b32.cont [13/16] %v2293, 128
    %2826 = vxpose.xlu0.b32.cont [14/16] %v2295, 128
    %2827 = vxpose.xlu0.b32.cont [15/16] %v2297, 128
    %2828 = vxpose.xlu0.b32.end [16/16] %v2299, 128
    %v2829 = vpop.trf.xlu0
    %v2830 = vpop.trf.xlu0
    %v2831 = vpop.trf.xlu0
    %v2832 = vpop.trf.xlu0
    %v2833 = vpop.trf.xlu0
    %v2834 = vpop.trf.xlu0
    %v2835 = vpop.trf.xlu0
    %v2836 = vpop.trf.xlu0
    %v2837 = vpop.trf.xlu0
    %v2838 = vpop.trf.xlu0
    %v2839 = vpop.trf.xlu0
    %v2840 = vpop.trf.xlu0
    %v2841 = vpop.trf.xlu0
    %v2842 = vpop.trf.xlu0
    %v2843 = vpop.trf.xlu0
    %v2844 = vpop.trf.xlu0
    %2845 = vxpose.xlu0.b32.start [1/16] %v2270, 128
    %2846 = vxpose.xlu0.b32.cont [2/16] %v2272, 128
    %2847 = vxpose.xlu0.b32.cont [3/16] %v2274, 128
    %2848 = vxpose.xlu0.b32.cont [4/16] %v2276, 128
    %2849 = vxpose.xlu0.b32.cont [5/16] %v2278, 128
    %2850 = vxpose.xlu0.b32.cont [6/16] %v2280, 128
    %2851 = vxpose.xlu0.b32.cont [7/16] %v2282, 128
    %2852 = vxpose.xlu0.b32.cont [8/16] %v2284, 128
    %2853 = vxpose.xlu0.b32.cont [9/16] %v2286, 128
    %2854 = vxpose.xlu0.b32.cont [10/16] %v2288, 128
    %2855 = vxpose.xlu0.b32.cont [11/16] %v2290, 128
    %2856 = vxpose.xlu0.b32.cont [12/16] %v2292, 128
    %2857 = vxpose.xlu0.b32.cont [13/16] %v2294, 128
    %2858 = vxpose.xlu0.b32.cont [14/16] %v2296, 128
    %2859 = vxpose.xlu0.b32.cont [15/16] %v2298, 128
    %2860 = vxpose.xlu0.b32.end [16/16] %v2300, 128
    %v2861 = vpop.trf.xlu0
    %v2862 = vpop.trf.xlu0
    %v2863 = vpop.trf.xlu0
    %v2864 = vpop.trf.xlu0
    %v2865 = vpop.trf.xlu0
    %v2866 = vpop.trf.xlu0
    %v2867 = vpop.trf.xlu0
    %v2868 = vpop.trf.xlu0
    %v2869 = vpop.trf.xlu0
    %v2870 = vpop.trf.xlu0
    %v2871 = vpop.trf.xlu0
    %v2872 = vpop.trf.xlu0
    %v2873 = vpop.trf.xlu0
    %v2874 = vpop.trf.xlu0
    %v2875 = vpop.trf.xlu0
    %v2876 = vpop.trf.xlu0
    %2877 = vxpose.xlu0.b32.start [1/16] %v2301, 128
    %2878 = vxpose.xlu0.b32.cont [2/16] %v2303, 128
    %2879 = vxpose.xlu0.b32.cont [3/16] %v2305, 128
    %2880 = vxpose.xlu0.b32.cont [4/16] %v2307, 128
    %2881 = vxpose.xlu0.b32.cont [5/16] %v2309, 128
    %2882 = vxpose.xlu0.b32.cont [6/16] %v2311, 128
    %2883 = vxpose.xlu0.b32.cont [7/16] %v2313, 128
    %2884 = vxpose.xlu0.b32.cont [8/16] %v2315, 128
    %2885 = vxpose.xlu0.b32.cont [9/16] %v2317, 128
    %2886 = vxpose.xlu0.b32.cont [10/16] %v2319, 128
    %2887 = vxpose.xlu0.b32.cont [11/16] %v2321, 128
    %2888 = vxpose.xlu0.b32.cont [12/16] %v2323, 128
    %2889 = vxpose.xlu0.b32.cont [13/16] %v2325, 128
    %2890 = vxpose.xlu0.b32.cont [14/16] %v2327, 128
    %2891 = vxpose.xlu0.b32.cont [15/16] %v2329, 128
    %2892 = vxpose.xlu0.b32.end [16/16] %v2331, 128
    %v2893 = vpop.trf.xlu0
    %v2894 = vpop.trf.xlu0
    %v2895 = vpop.trf.xlu0
    %v2896 = vpop.trf.xlu0
    %v2897 = vpop.trf.xlu0
    %v2898 = vpop.trf.xlu0
    %v2899 = vpop.trf.xlu0
    %v2900 = vpop.trf.xlu0
    %v2901 = vpop.trf.xlu0
    %v2902 = vpop.trf.xlu0
    %v2903 = vpop.trf.xlu0
    %v2904 = vpop.trf.xlu0
    %v2905 = vpop.trf.xlu0
    %v2906 = vpop.trf.xlu0
    %v2907 = vpop.trf.xlu0
    %v2908 = vpop.trf.xlu0
    %2909 = vxpose.xlu0.b32.start [1/16] %v2302, 128
    %2910 = vxpose.xlu0.b32.cont [2/16] %v2304, 128
    %2911 = vxpose.xlu0.b32.cont [3/16] %v2306, 128
    %2912 = vxpose.xlu0.b32.cont [4/16] %v2308, 128
    %2913 = vxpose.xlu0.b32.cont [5/16] %v2310, 128
    %2914 = vxpose.xlu0.b32.cont [6/16] %v2312, 128
    %2915 = vxpose.xlu0.b32.cont [7/16] %v2314, 128
    %2916 = vxpose.xlu0.b32.cont [8/16] %v2316, 128
    %2917 = vxpose.xlu0.b32.cont [9/16] %v2318, 128
    %2918 = vxpose.xlu0.b32.cont [10/16] %v2320, 128
    %2919 = vxpose.xlu0.b32.cont [11/16] %v2322, 128
    %2920 = vxpose.xlu0.b32.cont [12/16] %v2324, 128
    %2921 = vxpose.xlu0.b32.cont [13/16] %v2326, 128
    %2922 = vxpose.xlu0.b32.cont [14/16] %v2328, 128
    %2923 = vxpose.xlu0.b32.cont [15/16] %v2330, 128
    %2924 = vxpose.xlu0.b32.end [16/16] %v2332, 128
    %v2925 = vpop.trf.xlu0
    %v2926 = vpop.trf.xlu0
    %v2927 = vpop.trf.xlu0
    %v2928 = vpop.trf.xlu0
    %v2929 = vpop.trf.xlu0
    %v2930 = vpop.trf.xlu0
    %v2931 = vpop.trf.xlu0
    %v2932 = vpop.trf.xlu0
    %v2933 = vpop.trf.xlu0
    %v2934 = vpop.trf.xlu0
    %v2935 = vpop.trf.xlu0
    %v2936 = vpop.trf.xlu0
    %v2937 = vpop.trf.xlu0
    %v2938 = vpop.trf.xlu0
    %v2939 = vpop.trf.xlu0
    %v2940 = vpop.trf.xlu0
    %2941 = vxpose.xlu0.b32.start [1/16] %v2333, 128
    %2942 = vxpose.xlu0.b32.cont [2/16] %v2335, 128
    %2943 = vxpose.xlu0.b32.cont [3/16] %v2337, 128
    %2944 = vxpose.xlu0.b32.cont [4/16] %v2339, 128
    %2945 = vxpose.xlu0.b32.cont [5/16] %v2341, 128
    %2946 = vxpose.xlu0.b32.cont [6/16] %v2343, 128
    %2947 = vxpose.xlu0.b32.cont [7/16] %v2345, 128
    %2948 = vxpose.xlu0.b32.cont [8/16] %v2347, 128
    %2949 = vxpose.xlu0.b32.cont [9/16] %v2349, 128
    %2950 = vxpose.xlu0.b32.cont [10/16] %v2351, 128
    %2951 = vxpose.xlu0.b32.cont [11/16] %v2353, 128
    %2952 = vxpose.xlu0.b32.cont [12/16] %v2355, 128
    %2953 = vxpose.xlu0.b32.cont [13/16] %v2357, 128
    %2954 = vxpose.xlu0.b32.cont [14/16] %v2359, 128
    %2955 = vxpose.xlu0.b32.cont [15/16] %v2361, 128
    %2956 = vxpose.xlu0.b32.end [16/16] %v2363, 128
    %v2957 = vpop.trf.xlu0
    %v2958 = vpop.trf.xlu0
    %v2959 = vpop.trf.xlu0
    %v2960 = vpop.trf.xlu0
    %v2961 = vpop.trf.xlu0
    %v2962 = vpop.trf.xlu0
    %v2963 = vpop.trf.xlu0
    %v2964 = vpop.trf.xlu0
    %v2965 = vpop.trf.xlu0
    %v2966 = vpop.trf.xlu0
    %v2967 = vpop.trf.xlu0
    %v2968 = vpop.trf.xlu0
    %v2969 = vpop.trf.xlu0
    %v2970 = vpop.trf.xlu0
    %v2971 = vpop.trf.xlu0
    %v2972 = vpop.trf.xlu0
    %2973 = vxpose.xlu0.b32.start [1/16] %v2334, 128
    %2974 = vxpose.xlu0.b32.cont [2/16] %v2336, 128
    %2975 = vxpose.xlu0.b32.cont [3/16] %v2338, 128
    %2976 = vxpose.xlu0.b32.cont [4/16] %v2340, 128
    %2977 = vxpose.xlu0.b32.cont [5/16] %v2342, 128
    %2978 = vxpose.xlu0.b32.cont [6/16] %v2344, 128
    %2979 = vxpose.xlu0.b32.cont [7/16] %v2346, 128
    %2980 = vxpose.xlu0.b32.cont [8/16] %v2348, 128
    %2981 = vxpose.xlu0.b32.cont [9/16] %v2350, 128
    %2982 = vxpose.xlu0.b32.cont [10/16] %v2352, 128
    %2983 = vxpose.xlu0.b32.cont [11/16] %v2354, 128
    %2984 = vxpose.xlu0.b32.cont [12/16] %v2356, 128
    %2985 = vxpose.xlu0.b32.cont [13/16] %v2358, 128
    %2986 = vxpose.xlu0.b32.cont [14/16] %v2360, 128
    %2987 = vxpose.xlu0.b32.cont [15/16] %v2362, 128
    %2988 = vxpose.xlu0.b32.end [16/16] %v2364, 128
    %v2989 = vpop.trf.xlu0
    %v2990 = vpop.trf.xlu0
    %v2991 = vpop.trf.xlu0
    %v2992 = vpop.trf.xlu0
    %v2993 = vpop.trf.xlu0
    %v2994 = vpop.trf.xlu0
    %v2995 = vpop.trf.xlu0
    %v2996 = vpop.trf.xlu0
    %v2997 = vpop.trf.xlu0
    %v2998 = vpop.trf.xlu0
    %v2999 = vpop.trf.xlu0
    %v3000 = vpop.trf.xlu0
    %v3001 = vpop.trf.xlu0
    %v3002 = vpop.trf.xlu0
    %v3003 = vpop.trf.xlu0
    %v3004 = vpop.trf.xlu0
    %s3005 = scalar_lea.vmem [#allocation8], 1024
    %3006 = vst [vmem:[%s3005] sm:$0xff] %v2765
    %3007 = vst [vmem:[%s3005 + $0x8] sm:$0xff] %v2829
    %3008 = vst [vmem:[%s3005 + $0x10] sm:$0xff] %v2893
    %3009 = vst [vmem:[%s3005 + $0x18] sm:$0xff] %v2957
    %3010 = vst [vmem:[%s3005 + $0x20] sm:$0xff] %v2766
    %3011 = vst [vmem:[%s3005 + $0x28] sm:$0xff] %v2830
    %3012 = vst [vmem:[%s3005 + $0x30] sm:$0xff] %v2894
    %3013 = vst [vmem:[%s3005 + $0x38] sm:$0xff] %v2958
    %3014 = vst [vmem:[%s3005 + $0x40] sm:$0xff] %v2767
    %3015 = vst [vmem:[%s3005 + $0x48] sm:$0xff] %v2831
    %3016 = vst [vmem:[%s3005 + $0x50] sm:$0xff] %v2895
    %3017 = vst [vmem:[%s3005 + $0x58] sm:$0xff] %v2959
    %3018 = vst [vmem:[%s3005 + $0x60] sm:$0xff] %v2768
    %3019 = vst [vmem:[%s3005 + $0x68] sm:$0xff] %v2832
    %3020 = vst [vmem:[%s3005 + $0x70] sm:$0xff] %v2896
    %3021 = vst [vmem:[%s3005 + $0x78] sm:$0xff] %v2960
    %3022 = vst [vmem:[%s3005 + $0x80] sm:$0xff] %v2769
    %3023 = vst [vmem:[%s3005 + $0x88] sm:$0xff] %v2833
    %3024 = vst [vmem:[%s3005 + $0x90] sm:$0xff] %v2897
    %3025 = vst [vmem:[%s3005 + $0x98] sm:$0xff] %v2961
    %3026 = vst [vmem:[%s3005 + $0xa0] sm:$0xff] %v2770
    %3027 = vst [vmem:[%s3005 + $0xa8] sm:$0xff] %v2834
    %3028 = vst [vmem:[%s3005 + $0xb0] sm:$0xff] %v2898
    %3029 = vst [vmem:[%s3005 + $0xb8] sm:$0xff] %v2962
    %3030 = vst [vmem:[%s3005 + $0xc0] sm:$0xff] %v2771
    %3031 = vst [vmem:[%s3005 + $0xc8] sm:$0xff] %v2835
    %3032 = vst [vmem:[%s3005 + $0xd0] sm:$0xff] %v2899
    %3033 = vst [vmem:[%s3005 + $0xd8] sm:$0xff] %v2963
    %3034 = vst [vmem:[%s3005 + $0xe0] sm:$0xff] %v2772
    %3035 = vst [vmem:[%s3005 + $0xe8] sm:$0xff] %v2836
    %3036 = vst [vmem:[%s3005 + $0xf0] sm:$0xff] %v2900
    %3037 = vst [vmem:[%s3005 + $0xf8] sm:$0xff] %v2964
    %3038 = vst [vmem:[%s3005 + $0x100] sm:$0xff] %v2773
    %3039 = vst [vmem:[%s3005 + $0x108] sm:$0xff] %v2837
    %3040 = vst [vmem:[%s3005 + $0x110] sm:$0xff] %v2901
    %3041 = vst [vmem:[%s3005 + $0x118] sm:$0xff] %v2965
    %3042 = vst [vmem:[%s3005 + $0x120] sm:$0xff] %v2774
    %3043 = vst [vmem:[%s3005 + $0x128] sm:$0xff] %v2838
    %3044 = vst [vmem:[%s3005 + $0x130] sm:$0xff] %v2902
    %3045 = vst [vmem:[%s3005 + $0x138] sm:$0xff] %v2966
    %3046 = vst [vmem:[%s3005 + $0x140] sm:$0xff] %v2775
    %3047 = vst [vmem:[%s3005 + $0x148] sm:$0xff] %v2839
    %3048 = vst [vmem:[%s3005 + $0x150] sm:$0xff] %v2903
    %3049 = vst [vmem:[%s3005 + $0x158] sm:$0xff] %v2967
    %3050 = vst [vmem:[%s3005 + $0x160] sm:$0xff] %v2776
    %3051 = vst [vmem:[%s3005 + $0x168] sm:$0xff] %v2840
    %3052 = vst [vmem:[%s3005 + $0x170] sm:$0xff] %v2904
    %3053 = vst [vmem:[%s3005 + $0x178] sm:$0xff] %v2968
    %3054 = vst [vmem:[%s3005 + $0x180] sm:$0xff] %v2777
    %3055 = vst [vmem:[%s3005 + $0x188] sm:$0xff] %v2841
    %3056 = vst [vmem:[%s3005 + $0x190] sm:$0xff] %v2905
    %3057 = vst [vmem:[%s3005 + $0x198] sm:$0xff] %v2969
    %3058 = vst [vmem:[%s3005 + $0x1a0] sm:$0xff] %v2778
    %3059 = vst [vmem:[%s3005 + $0x1a8] sm:$0xff] %v2842
    %3060 = vst [vmem:[%s3005 + $0x1b0] sm:$0xff] %v2906
    %3061 = vst [vmem:[%s3005 + $0x1b8] sm:$0xff] %v2970
    %3062 = vst [vmem:[%s3005 + $0x1c0] sm:$0xff] %v2779
    %3063 = vst [vmem:[%s3005 + $0x1c8] sm:$0xff] %v2843
    %3064 = vst [vmem:[%s3005 + $0x1d0] sm:$0xff] %v2907
    %3065 = vst [vmem:[%s3005 + $0x1d8] sm:$0xff] %v2971
    %3066 = vst [vmem:[%s3005 + $0x1e0] sm:$0xff] %v2780
    %3067 = vst [vmem:[%s3005 + $0x1e8] sm:$0xff] %v2844
    %3068 = vst [vmem:[%s3005 + $0x1f0] sm:$0xff] %v2908
    %3069 = vst [vmem:[%s3005 + $0x1f8] sm:$0xff] %v2972
    %3070 = vst [vmem:[%s3005 + $0x200] sm:$0xff] %v2797
    %3071 = vst [vmem:[%s3005 + $0x208] sm:$0xff] %v2861
    %3072 = vst [vmem:[%s3005 + $0x210] sm:$0xff] %v2925
    %3073 = vst [vmem:[%s3005 + $0x218] sm:$0xff] %v2989
    %3074 = vst [vmem:[%s3005 + $0x220] sm:$0xff] %v2798
    %3075 = vst [vmem:[%s3005 + $0x228] sm:$0xff] %v2862
    %3076 = vst [vmem:[%s3005 + $0x230] sm:$0xff] %v2926
    %3077 = vst [vmem:[%s3005 + $0x238] sm:$0xff] %v2990
    %3078 = vst [vmem:[%s3005 + $0x240] sm:$0xff] %v2799
    %3079 = vst [vmem:[%s3005 + $0x248] sm:$0xff] %v2863
    %3080 = vst [vmem:[%s3005 + $0x250] sm:$0xff] %v2927
    %3081 = vst [vmem:[%s3005 + $0x258] sm:$0xff] %v2991
    %3082 = vst [vmem:[%s3005 + $0x260] sm:$0xff] %v2800
    %3083 = vst [vmem:[%s3005 + $0x268] sm:$0xff] %v2864
    %3084 = vst [vmem:[%s3005 + $0x270] sm:$0xff] %v2928
    %3085 = vst [vmem:[%s3005 + $0x278] sm:$0xff] %v2992
    %3086 = vst [vmem:[%s3005 + $0x280] sm:$0xff] %v2801
    %3087 = vst [vmem:[%s3005 + $0x288] sm:$0xff] %v2865
    %3088 = vst [vmem:[%s3005 + $0x290] sm:$0xff] %v2929
    %3089 = vst [vmem:[%s3005 + $0x298] sm:$0xff] %v2993
    %3090 = vst [vmem:[%s3005 + $0x2a0] sm:$0xff] %v2802
    %3091 = vst [vmem:[%s3005 + $0x2a8] sm:$0xff] %v2866
    %3092 = vst [vmem:[%s3005 + $0x2b0] sm:$0xff] %v2930
    %3093 = vst [vmem:[%s3005 + $0x2b8] sm:$0xff] %v2994
    %3094 = vst [vmem:[%s3005 + $0x2c0] sm:$0xff] %v2803
    %3095 = vst [vmem:[%s3005 + $0x2c8] sm:$0xff] %v2867
    %3096 = vst [vmem:[%s3005 + $0x2d0] sm:$0xff] %v2931
    %3097 = vst [vmem:[%s3005 + $0x2d8] sm:$0xff] %v2995
    %3098 = vst [vmem:[%s3005 + $0x2e0] sm:$0xff] %v2804
    %3099 = vst [vmem:[%s3005 + $0x2e8] sm:$0xff] %v2868
    %3100 = vst [vmem:[%s3005 + $0x2f0] sm:$0xff] %v2932
    %3101 = vst [vmem:[%s3005 + $0x2f8] sm:$0xff] %v2996
    %3102 = vst [vmem:[%s3005 + $0x300] sm:$0xff] %v2805
    %3103 = vst [vmem:[%s3005 + $0x308] sm:$0xff] %v2869
    %3104 = vst [vmem:[%s3005 + $0x310] sm:$0xff] %v2933
    %3105 = vst [vmem:[%s3005 + $0x318] sm:$0xff] %v2997
    %3106 = vst [vmem:[%s3005 + $0x320] sm:$0xff] %v2806
    %3107 = vst [vmem:[%s3005 + $0x328] sm:$0xff] %v2870
    %3108 = vst [vmem:[%s3005 + $0x330] sm:$0xff] %v2934
    %3109 = vst [vmem:[%s3005 + $0x338] sm:$0xff] %v2998
    %3110 = vst [vmem:[%s3005 + $0x340] sm:$0xff] %v2807
    %3111 = vst [vmem:[%s3005 + $0x348] sm:$0xff] %v2871
    %3112 = vst [vmem:[%s3005 + $0x350] sm:$0xff] %v2935
    %3113 = vst [vmem:[%s3005 + $0x358] sm:$0xff] %v2999
    %3114 = vst [vmem:[%s3005 + $0x360] sm:$0xff] %v2808
    %3115 = vst [vmem:[%s3005 + $0x368] sm:$0xff] %v2872
    %3116 = vst [vmem:[%s3005 + $0x370] sm:$0xff] %v2936
    %3117 = vst [vmem:[%s3005 + $0x378] sm:$0xff] %v3000
    %3118 = vst [vmem:[%s3005 + $0x380] sm:$0xff] %v2809
    %3119 = vst [vmem:[%s3005 + $0x388] sm:$0xff] %v2873
    %3120 = vst [vmem:[%s3005 + $0x390] sm:$0xff] %v2937
    %3121 = vst [vmem:[%s3005 + $0x398] sm:$0xff] %v3001
    %3122 = vst [vmem:[%s3005 + $0x3a0] sm:$0xff] %v2810
    %3123 = vst [vmem:[%s3005 + $0x3a8] sm:$0xff] %v2874
    %3124 = vst [vmem:[%s3005 + $0x3b0] sm:$0xff] %v2938
    %3125 = vst [vmem:[%s3005 + $0x3b8] sm:$0xff] %v3002
    %3126 = vst [vmem:[%s3005 + $0x3c0] sm:$0xff] %v2811
    %3127 = vst [vmem:[%s3005 + $0x3c8] sm:$0xff] %v2875
    %3128 = vst [vmem:[%s3005 + $0x3d0] sm:$0xff] %v2939
    %3129 = vst [vmem:[%s3005 + $0x3d8] sm:$0xff] %v3003
    %3130 = vst [vmem:[%s3005 + $0x3e0] sm:$0xff] %v2812
    %3131 = vst [vmem:[%s3005 + $0x3e8] sm:$0xff] %v2876
    %3132 = vst [vmem:[%s3005 + $0x3f0] sm:$0xff] %v2940
    %3133 = vst [vmem:[%s3005 + $0x3f8] sm:$0xff] %v3004
    // Predicated region
    $region26: #{tpu_custom_call.1} parent=1 // pred_check
      _
    $region27: #{tpu_custom_call.1} parent=1 // pred_check_branch
      %3135 = sbr.rel (0) target = $region29
    $region28: #{tpu_custom_call.1} parent=1 // pred_region
      %s3137 = ssub.s32 32768, 32768
      %3138 = vsyncadd [#allocation4], %s3137
      %s3139 = sshll.u32 [#allocation8], 4
      %s3140 = int_to_ptr.vmem [resolvable:$true] %s3139
      %3145 = dma.vmem_to_hbm [thread:$0]  %s3140, 32768, %s3, [#allocation4], 512, 512, 32
    $region29: #{tpu_custom_call.1} parent=1 // pred_fallthru
      _
    // Predicated region
    $region30: #{tpu_custom_call.1} parent=1 // pred_check
      _
    $region31: #{tpu_custom_call.1} parent=1 // pred_check_branch
      %3147 = sbr.rel (0) target = $region33
    $region32: #{tpu_custom_call.1} parent=1 // pred_region
      %3148 = dma.done [#allocation4], 32768
    $region33: #{tpu_custom_call.1} parent=1 // pred_fallthru
      _
    %3149 = vsyncpa [#allocation3], 1
    %3150 = vsyncpa [#allocation6], 1
    %3151 = vsyncpa [#allocation4], 1

</llo_original>
